<compile_context>
chip_gen: v7x
topology: tpu7x:2x2x1
jax: 0.10.0
libtpu: 0.0.40
codegen_flags: <defaults>
</compile_context>

<pallas_src>
import functools
import numpy as np
import jax
import jax.numpy as jnp
from jax import lax
from jax.experimental import pallas as pl
from jax.experimental.pallas import tpu as pltpu

VMEM = pltpu.MemorySpace.VMEM
LSTM1_HIDDEN = 32
LSTM2_HIDDEN = 128
NEG_MASK = -1e30


# ------------------------------------------------------------------ fused kernel

def _st_gat_kernel(x_ref, *refs, layout, heads, n_hist, batch, n_nodes):
    out_ref = refs[-1]
    bufs = refs[:-1]

    def param(name):
        bi, start, rows = layout[name]
        return bufs[bi][start:start + rows, :]

    N = batch * n_nodes
    f_out = n_hist
    H1, H2 = LSTM1_HIDDEN, LSTM2_HIDDEN
    T = n_hist

    x = x_ref[...]                                                     # [N, n_hist]
    head_bcast = param("head_bcast")                                   # [heads, heads*N]

    # ---------------- GATConv (concat=False -> mean over heads) ----------------
    # Lane-dense attention layout: column (h, src j) -> h*N + j.
    xw = jnp.dot(x, param("gat_w"), preferred_element_type=jnp.float32)          # [N, heads*f_out]
    a_dst = jnp.dot(xw, param("att_dst_blockdiag"),
                    preferred_element_type=jnp.float32)                          # [N, heads]
    # a_src directly in transposed orientation via an rhs-transposed matmul.
    a_src_t = lax.dot_general(param("att_src_rows"), xw, (((1,), (1,)), ((), ())),
                              preferred_element_type=jnp.float32)                # [heads, N]

    e = jnp.dot(a_dst, head_bcast, preferred_element_type=jnp.float32)           # [N, heads*N]
    src_row = jnp.concatenate([a_src_t[h:h + 1, :] for h in range(heads)],
                              axis=1)                                            # [1, heads*N]
    e = e + src_row                                                              # dst + src scores
    e = jnp.where(e > 0, e, 0.2 * e)                                             # LeakyReLU(0.2)
    e = e + param("adj_mask")                                                    # additive -1e30 mask

    # A per-row max over ALL heads is constant within every head group, so each
    # per-head softmax is unchanged; one lane reduction keeps exp() stable.
    e = e - jnp.max(e, axis=1, keepdims=True)
    p = jnp.exp(e)                                                               # [N, heads*N]
    denom = jnp.dot(p, param("head_indicator"),
                    preferred_element_type=jnp.float32)                          # [N, heads]
    inv = 1.0 / denom                                                            # exact reciprocal
    alpha = p * jnp.dot(inv, head_bcast, preferred_element_type=jnp.float32)     # [N, heads*N]

    # Per-head x @ W_h stacked along sublane-aligned row blocks -> one aggregation matmul.
    wph = param("gat_w_perhead")                                                 # [heads*n_hist, f_out]
    xh_stack = jnp.concatenate(
        [jnp.dot(x, wph[h * n_hist:(h + 1) * n_hist, :],
                 preferred_element_type=jnp.float32) for h in range(heads)],
        axis=0)                                                                  # [heads*N, f_out]
    gat_out = (jnp.dot(alpha, xh_stack, preferred_element_type=jnp.float32)
               * (1.0 / heads) + param("gat_bias"))                              # [N, f_out]
    # TODO(synk): dropout with p>0 not implemented (module is built with dropout=0 -> identity).

    # ---------------- LSTM1 input projection per graph (transposed-LHS matmul) ----------------
    # LSTM1 input at (t, b) is gat_out[b*n_nodes:(b+1)*n_nodes, t]; contracting dim 0 of
    # the per-graph block with dim 0 of W_ih yields all T pre-activations at once with
    # no transpose / row-gather relayout.
    l1_wih = param("lstm1_wih")                                                  # [n_nodes, 4*H1]
    l1_b = param("lstm1_b")                                                      # [1, 4*H1]
    gates1 = [
        lax.dot_general(gat_out[b * n_nodes:(b + 1) * n_nodes, :], l1_wih,
                        (((0,), (0,)), ((), ())),
                        preferred_element_type=jnp.float32) + l1_b
        for b in range(batch)]                                                   # batch x [T, 4*H1]

    l1_whh = param("lstm1_whh")                                                  # [H1, 4*H1]
    l2_wih = param("lstm2_wih")                                                  # [H1, 4*H2]
    l2_whh = param("lstm2_whh")                                                  # [H2, 4*H2]
    l2_b = param("lstm2_b")                                                      # [1, 4*H2]

    def cell(gates, c, hidden):
        # Gate column order (i, f, o, g): sigmoid / tanh each hit one contiguous slab
        # (2 EUP calls per step).  H2=128 slices are 128-lane aligned; the H1=32 slices
        # need at most the minimal 3 alignment shifts Mosaic emits anyway.
        h3 = 3 * hidden
        sig = jax.nn.sigmoid(gates[:, :h3])
        g = jnp.tanh(gates[:, h3:])
        c_new = sig[:, hidden:2 * hidden] * c + sig[:, :hidden] * g
        h_new = sig[:, 2 * hidden:h3] * jnp.tanh(c_new)
        return h_new, c_new

    # ---------------- Wavefront-interleaved LSTM1 / LSTM2 recurrences ----------------
    # Wave t: layer-1 step t (t < T) and layer-2 step t-1 (t >= 1).  Both bodies depend
    # only on wave t-1 results, so the scheduler can overlap their MXU/EUP chains.
    h1 = jnp.zeros((batch, H1), jnp.float32)
    c1 = jnp.zeros((batch, H1), jnp.float32)
    h2 = jnp.zeros((batch, H2), jnp.float32)
    c2 = jnp.zeros((batch, H2), jnp.float32)
    for t in range(T + 1):                      # T static & small -> fully unrolled
        h1_new = c1_new = None
        if t < T:
            g1_t = jnp.concatenate([g[t:t + 1, :] for g in gates1], axis=0)      # [B, 4*H1]
            g1_t = g1_t + jnp.dot(h1, l1_whh, preferred_element_type=jnp.float32)
            h1_new, c1_new = cell(g1_t, c1, H1)
        if t >= 1:
            # Layer-2 step t-1 consumes h1_{t-1} (current value of h1, pre-update).
            g2_t = (jnp.dot(h1, l2_wih, preferred_element_type=jnp.float32)
                    + jnp.dot(h2, l2_whh, preferred_element_type=jnp.float32) + l2_b)
            h2, c2 = cell(g2_t, c2, H2)
        if t < T:
            h1, c1 = h1_new, c1_new

    # ---------------- Linear head (torch.squeeze(x[-1]) is a no-op for batch > 1) ----------------
    out_ref[...] = (jnp.dot(h2, param("lin_w"), preferred_element_type=jnp.float32)
                    + param("lin_b"))                                            # [B, n_nodes*n_pred]


def st_gat_forward(x, packed, layout, *, batch, n_nodes, n_hist, n_pred, heads):
    kernel = functools.partial(_st_gat_kernel, layout=layout, heads=heads,
                               n_hist=n_hist, batch=batch, n_nodes=n_nodes)
    # Single program / empty grid: the serial LSTM chain dominates and is not divisible
    # at batch=2; whole working set << 1 MiB so no grid tiling is needed (v5e/v6e/v7x).
    out = pl.pallas_call(
        kernel,
        out_shape=jax.ShapeDtypeStruct((batch, n_nodes * n_pred), jnp.float32),
        in_specs=[pl.BlockSpec(memory_space=VMEM)] * (1 + len(packed)),
        out_specs=pl.BlockSpec(memory_space=VMEM),
    )(x, *packed)
    return out.reshape(batch * n_nodes, n_pred)


# ------------------------------------------------------------------ parameters & packing

def xavier_uniform(key, shape, fan_in, fan_out):
    bound = float(np.sqrt(6.0 / (fan_in + fan_out)))
    return jax.random.uniform(key, shape, jnp.float32, -bound, bound)


def reorder_lstm_gates(w):
    """PyTorch LSTM gate order (i, f, g, o) -> kernel order (i, f, o, g) on the last axis."""
    i, f, g, o = jnp.split(w, 4, axis=-1)
    return jnp.concatenate([i, f, o, g], axis=-1)


def init_params(key, *, n_hist, n_pred, n_nodes, heads):
    h1, h2 = LSTM1_HIDDEN, LSTM2_HIDDEN
    ks = jax.random.split(key, 12)
    p = {}
    # GATConv(in=n_hist, out=n_hist, heads, concat=False): lin weight, att_src/dst, bias(=0).
    p["gat_w"] = xavier_uniform(ks[0], (n_hist, heads * n_hist), n_hist, heads * n_hist)
    p["att_src"] = xavier_uniform(ks[1], (heads, n_hist), n_hist, heads * n_hist)
    p["att_dst"] = xavier_uniform(ks[2], (heads, n_hist), n_hist, heads * n_hist)
    p["gat_bias"] = jnp.zeros((1, n_hist), jnp.float32)
    # LSTMs: xavier weights, zero biases (per module __init__); stored pre-transposed
    # [In, 4H] with gate columns repacked (i, f, o, g); bias = b_ih + b_hh.
    p["lstm1_wih"] = reorder_lstm_gates(xavier_uniform(ks[3], (n_nodes, 4 * h1), n_nodes, 4 * h1))
    p["lstm1_whh"] = reorder_lstm_gates(xavier_uniform(ks[4], (h1, 4 * h1), h1, 4 * h1))
    p["lstm1_b"] = jnp.zeros((1, 4 * h1), jnp.float32)
    p["lstm2_wih"] = reorder_lstm_gates(xavier_uniform(ks[5], (h1, 4 * h2), h1, 4 * h2))
    p["lstm2_whh"] = reorder_lstm_gates(xavier_uniform(ks[6], (h2, 4 * h2), h2, 4 * h2))
    p["lstm2_b"] = jnp.zeros((1, 4 * h2), jnp.float32)
    # Linear(128 -> n_nodes*n_pred): xavier weight, torch-default uniform bias.
    p["lin_w"] = xavier_uniform(ks[7], (h2, n_nodes * n_pred), h2, n_nodes * n_pred)
    bb = 1.0 / float(np.sqrt(h2))
    p["lin_b"] = jax.random.uniform(ks[8], (1, n_nodes * n_pred), jnp.float32, -bb, bb)
    return p


def att_block_diag(att, heads, f_out):
    """[heads, f_out] -> block-diagonal [heads*f_out, heads]: (xW) @ mat gives the
    per-head dst/src attention scores for all heads in one matmul."""
    eye = np.eye(heads, dtype=np.float32)
    return (np.asarray(att, np.float32)[:, :, None] * eye[:, None, :]).reshape(heads * f_out, heads)


def pack_constants(arrays):
    """Group 2-D f32 constants by column width into a few packed buffers so the kernel
    needs ~5 one-shot parameter DMAs instead of ~17.  layout[name] = (buf_idx, row_start,
    n_rows); every segment starts on a sublane-aligned row (multiple of 8)."""
    by_width = {}
    for name, a in arrays.items():
        by_width.setdefault(int(np.asarray(a).shape[1]), []).append(name)
    buffers, layout = [], {}
    for bi, width in enumerate(sorted(by_width)):
        rows = 0
        for name in by_width[width]:
            start = ((rows + 7) // 8) * 8
            n = int(np.asarray(arrays[name]).shape[0])
            layout[name] = (bi, start, n)
            rows = start + n
        buf = np.zeros((rows, width), np.float32)
        for name in by_width[width]:
            _, start, n = layout[name]
            buf[start:start + n, :] = np.asarray(arrays[name], np.float32)
        buffers.append(jnp.asarray(buf))
    return buffers, layout


def build_kernel_constants(params, adj, *, batch, n_nodes, n_hist, heads):
    """Host-side precompute of every layout-massaged constant the kernel consumes."""
    N = batch * n_nodes
    f_out = n_hist
    eye = np.eye(heads, dtype=np.float32)
    head_bcast = np.repeat(eye, N, axis=1)                                  # [heads, heads*N]
    mask = np.where(np.asarray(adj) > 0, 0.0, NEG_MASK).astype(np.float32)  # [N, N]
    gat_w = np.asarray(params["gat_w"], np.float32)
    gat_w_perhead = (gat_w.reshape(n_hist, heads, f_out)
                     .transpose(1, 0, 2).reshape(heads * n_hist, f_out))
    consts = {
        "gat_w": gat_w,
        "att_dst_blockdiag": att_block_diag(params["att_dst"], heads, f_out),
        "att_src_rows": att_block_diag(params["att_src"], heads, f_out).T,
        "head_bcast": head_bcast,
        "head_indicator": head_bcast.T,
        "adj_mask": np.tile(mask, (1, heads)),                              # [N, heads*N]
        "gat_w_perhead": gat_w_perhead,
        "gat_bias": params["gat_bias"],
        "lstm1_wih": params["lstm1_wih"], "lstm1_whh": params["lstm1_whh"],
        "lstm1_b": params["lstm1_b"],
        "lstm2_wih": params["lstm2_wih"], "lstm2_whh": params["lstm2_whh"],
        "lstm2_b": params["lstm2_b"],
        "lin_w": params["lin_w"], "lin_b": params["lin_b"],
    }
    return pack_constants(consts)


# ------------------------------------------------------------------ pure-JAX reference

def reference_forward(x, adj, p, *, batch, n_nodes, n_hist, n_pred, heads):
    N = batch * n_nodes
    f_out = n_hist
    xw = x @ p["gat_w"]                                    # [N, heads*f_out]
    xh = xw.reshape(N, heads, f_out)
    a_src = jnp.einsum("jhf,hf->jh", xh, p["att_src"])
    a_dst = jnp.einsum("ihf,hf->ih", xh, p["att_dst"])
    e = a_dst[:, None, :] + a_src[None, :, :]              # [dst i, src j, heads]
    e = jnp.where(e > 0, e, 0.2 * e)
    e = jnp.where(adj[:, :, None] > 0, e, NEG_MASK)
    e = e - jnp.max(e, axis=1, keepdims=True)
    pe = jnp.exp(e)
    alpha = pe / jnp.sum(pe, axis=1, keepdims=True)
    gat = jnp.einsum("ijh,jhf->if", alpha, xh) / heads + p["gat_bias"]
    seq = jnp.moveaxis(gat.reshape(batch, n_nodes, n_hist), 2, 0)   # [T, B, n_nodes]

    def lstm(seq_in, wih, whh, b, hidden):
        def step(carry, xt):
            h, c = carry
            gates = xt @ wih + h @ whh + b
            h3 = 3 * hidden
            sig = jax.nn.sigmoid(gates[:, :h3])
            g = jnp.tanh(gates[:, h3:])
            c = sig[:, hidden:2 * hidden] * c + sig[:, :hidden] * g
            h = sig[:, 2 * hidden:h3] * jnp.tanh(c)
            return (h, c), h
        z = jnp.zeros((seq_in.shape[1], hidden), jnp.float32)
        _, hs = jax.lax.scan(step, (z, z), seq_in)
        return hs

    h1 = lstm(seq, p["lstm1_wih"], p["lstm1_whh"], p["lstm1_b"], LSTM1_HIDDEN)
    h2 = lstm(h1, p["lstm2_wih"], p["lstm2_whh"], p["lstm2_b"], LSTM2_HIDDEN)
    out = h2[-1] @ p["lin_w"] + p["lin_b"]
    return out.reshape(batch * n_nodes, n_pred)


# ------------------------------------------------------------------ main

if __name__ == "__main__":
    batch, n_nodes = 2, 16
    n_hist, n_pred, heads = 8, 4, 8
    N = batch * n_nodes

    # Synthetic batched graph: bidirectional ring per graph (PyG-style node offsets),
    # plus self-loops (GATConv add_self_loops=True).  adj[i, j] = 1 iff edge j -> i.
    adj_np = np.zeros((N, N), np.float32)
    for b in range(batch):
        off = b * n_nodes
        for i in range(n_nodes):
            j = (i + 1) % n_nodes
            adj_np[off + j, off + i] = 1.0
            adj_np[off + i, off + j] = 1.0
    adj_np[np.arange(N), np.arange(N)] = 1.0
    adj = jnp.asarray(adj_np)

    key = jax.random.PRNGKey(0)
    kx, kp = jax.random.split(key)
    x = jax.random.normal(kx, (N, n_hist), jnp.float32)     # data.x: [num_nodes, num_features]
    params = init_params(kp, n_hist=n_hist, n_pred=n_pred, n_nodes=n_nodes, heads=heads)
    packed, layout = build_kernel_constants(params, adj_np, batch=batch, n_nodes=n_nodes,
                                            n_hist=n_hist, heads=heads)

    out = st_gat_forward(x, packed, layout, batch=batch, n_nodes=n_nodes,
                         n_hist=n_hist, n_pred=n_pred, heads=heads)
    out = jax.block_until_ready(out)
    assert out.shape == (batch * n_nodes, n_pred), out.shape
    assert bool(jnp.all(jnp.isfinite(out)))

    ref = reference_forward(x, adj, params, batch=batch, n_nodes=n_nodes,
                            n_hist=n_hist, n_pred=n_pred, heads=heads)
    ref = jax.block_until_ready(ref)
    # Tolerance covers MXU default-precision f32 matmuls through softmax + 16 LSTM steps.
    max_err = float(jnp.max(jnp.abs(out - ref)))
    assert max_err < 5e-2, f"mismatch vs reference: max_err={max_err}"

    print("KERNEL_OK")
</pallas_src>

<mosaic_0001>
module attributes {stable_mosaic.version = 11 : i64} {
  func.func @_st_gat_kernel(%arg0: memref<32x8xf32, #tpu.memory_space<vmem>>, %arg1: memref<385x8xf32, #tpu.memory_space<vmem>>, %arg2: memref<145x64xf32, #tpu.memory_space<vmem>>, %arg3: memref<49x128xf32, #tpu.memory_space<vmem>>, %arg4: memref<40x256xf32, #tpu.memory_space<vmem>>, %arg5: memref<161x512xf32, #tpu.memory_space<vmem>>, %arg6: memref<2x64xf32, #tpu.memory_space<vmem>>) attributes {dimension_semantics = [], scalar_prefetch = 0 : i64, scratch_operands = 0 : i64, tpu.core_type = #tpu.core_type<tc>} {
    %c0 = arith.constant 0 : index
    %c0_0 = arith.constant 0 : index
    %0 = vector.load %arg0[%c0, %c0_0] : memref<32x8xf32, #tpu.memory_space<vmem>>, vector<32x8xf32>
    %c0_1 = arith.constant 0 : index
    %c0_2 = arith.constant 0 : index
    %1 = vector.load %arg4[%c0_1, %c0_2] : memref<40x256xf32, #tpu.memory_space<vmem>>, vector<8x256xf32>
    %c0_3 = arith.constant 0 : index
    %c0_4 = arith.constant 0 : index
    %2 = vector.load %arg2[%c0_3, %c0_4] : memref<145x64xf32, #tpu.memory_space<vmem>>, vector<8x64xf32>
    %cst = arith.constant dense<0.000000e+00> : vector<32x64xf32>
    %3 = tpu.matmul %0, %2, %cst {dimension_numbers = #tpu.dot_dimension_numbers<[1], [0], [0], [1], [0, 0, 1, 1], [], []>} : vector<32x8xf32>, vector<8x64xf32>, vector<32x64xf32> -> vector<32x64xf32>
    %c0_5 = arith.constant 0 : index
    %c0_6 = arith.constant 0 : index
    %4 = vector.load %arg1[%c0_5, %c0_6] : memref<385x8xf32, #tpu.memory_space<vmem>>, vector<64x8xf32>
    %cst_7 = arith.constant dense<0.000000e+00> : vector<32x8xf32>
    %5 = tpu.matmul %3, %4, %cst_7 {dimension_numbers = #tpu.dot_dimension_numbers<[1], [0], [0], [1], [0, 0, 1, 1], [], []>} : vector<32x64xf32>, vector<64x8xf32>, vector<32x8xf32> -> vector<32x8xf32>
    %c8 = arith.constant 8 : index
    %c0_8 = arith.constant 0 : index
    %6 = vector.load %arg2[%c8, %c0_8] : memref<145x64xf32, #tpu.memory_space<vmem>>, vector<8x64xf32>
    %cst_9 = arith.constant dense<0.000000e+00> : vector<8x32xf32>
    %7 = tpu.matmul %6, %3, %cst_9 {dimension_numbers = #tpu.dot_dimension_numbers<[1], [1], [0], [0], [0, 0, 1, 0], [], []>} : vector<8x64xf32>, vector<32x64xf32>, vector<8x32xf32> -> vector<8x32xf32>
    %cst_10 = arith.constant dense<0.000000e+00> : vector<32x256xf32>
    %8 = tpu.matmul %5, %1, %cst_10 {dimension_numbers = #tpu.dot_dimension_numbers<[1], [0], [0], [1], [0, 0, 1, 1], [], []>} : vector<32x8xf32>, vector<8x256xf32>, vector<32x256xf32> -> vector<32x256xf32>
    %9 = vector.extract_strided_slice %7 {offsets = [0, 0], sizes = [1, 32], strides = [1, 1]} : vector<8x32xf32> to vector<1x32xf32>
    %10 = vector.extract_strided_slice %7 {offsets = [1, 0], sizes = [1, 32], strides = [1, 1]} : vector<8x32xf32> to vector<1x32xf32>
    %11 = vector.extract_strided_slice %7 {offsets = [2, 0], sizes = [1, 32], strides = [1, 1]} : vector<8x32xf32> to vector<1x32xf32>
    %12 = vector.extract_strided_slice %7 {offsets = [3, 0], sizes = [1, 32], strides = [1, 1]} : vector<8x32xf32> to vector<1x32xf32>
    %13 = vector.extract_strided_slice %7 {offsets = [4, 0], sizes = [1, 32], strides = [1, 1]} : vector<8x32xf32> to vector<1x32xf32>
    %14 = vector.extract_strided_slice %7 {offsets = [5, 0], sizes = [1, 32], strides = [1, 1]} : vector<8x32xf32> to vector<1x32xf32>
    %15 = vector.extract_strided_slice %7 {offsets = [6, 0], sizes = [1, 32], strides = [1, 1]} : vector<8x32xf32> to vector<1x32xf32>
    %16 = vector.extract_strided_slice %7 {offsets = [7, 0], sizes = [1, 32], strides = [1, 1]} : vector<8x32xf32> to vector<1x32xf32>
    %17 = tpu.concatenate %9, %10, %11, %12, %13, %14, %15, %16 in 1 : vector<1x32xf32>, vector<1x32xf32>, vector<1x32xf32>, vector<1x32xf32>, vector<1x32xf32>, vector<1x32xf32>, vector<1x32xf32>, vector<1x32xf32> -> vector<1x256xf32>
    %18 = vector.broadcast %17 : vector<1x256xf32> to vector<32x256xf32>
    %19 = arith.addf %8, %18 : vector<32x256xf32>
    %cst_11 = arith.constant 0.000000e+00 : f32
    %20 = vector.broadcast %cst_11 : f32 to vector<32x256xf32>
    %21 = arith.cmpf ogt, %19, %20 : vector<32x256xf32>
    %cst_12 = arith.constant 2.000000e-01 : f32
    %22 = vector.broadcast %cst_12 : f32 to vector<32x256xf32>
    %23 = arith.mulf %22, %19 : vector<32x256xf32>
    %24 = arith.select %21, %19, %23 : vector<32x256xi1>, vector<32x256xf32>
    %c8_13 = arith.constant 8 : index
    %c0_14 = arith.constant 0 : index
    %25 = vector.load %arg4[%c8_13, %c0_14] : memref<40x256xf32, #tpu.memory_space<vmem>>, vector<32x256xf32>
    %26 = arith.addf %24, %25 : vector<32x256xf32>
    %cst_15 = arith.constant dense<0xFF800000> : vector<32xf32>
    %27 = vector.multi_reduction <maximumf>, %26, %cst_15 [1] : vector<32x256xf32> to vector<32xf32>
    %28 = vector.shape_cast %27 : vector<32xf32> to vector<32x1xf32>
    %29 = vector.broadcast %28 : vector<32x1xf32> to vector<32x256xf32>
    %30 = arith.subf %26, %29 : vector<32x256xf32>
    %31 = math.exp %30 : vector<32x256xf32>
    %c64 = arith.constant 64 : index
    %c0_16 = arith.constant 0 : index
    %32 = vector.load %arg1[%c64, %c0_16] : memref<385x8xf32, #tpu.memory_space<vmem>>, vector<256x8xf32>
    %cst_17 = arith.constant dense<0.000000e+00> : vector<32x8xf32>
    %33 = tpu.matmul %31, %32, %cst_17 {dimension_numbers = #tpu.dot_dimension_numbers<[1], [0], [0], [1], [0, 0, 1, 1], [], []>} : vector<32x256xf32>, vector<256x8xf32>, vector<32x8xf32> -> vector<32x8xf32>
    %cst_18 = arith.constant 1.000000e+00 : f32
    %34 = vector.broadcast %cst_18 : f32 to vector<32x8xf32>
    %35 = arith.divf %34, %33 : vector<32x8xf32>
    %cst_19 = arith.constant dense<0.000000e+00> : vector<32x256xf32>
    %36 = tpu.matmul %35, %1, %cst_19 {dimension_numbers = #tpu.dot_dimension_numbers<[1], [0], [0], [1], [0, 0, 1, 1], [], []>} : vector<32x8xf32>, vector<8x256xf32>, vector<32x256xf32> -> vector<32x256xf32>
    %37 = arith.mulf %31, %36 : vector<32x256xf32>
    %c320 = arith.constant 320 : index
    %c0_20 = arith.constant 0 : index
    %38 = vector.load %arg1[%c320, %c0_20] : memref<385x8xf32, #tpu.memory_space<vmem>>, vector<64x8xf32>
    %39 = vector.extract_strided_slice %38 {offsets = [0, 0], sizes = [8, 8], strides = [1, 1]} : vector<64x8xf32> to vector<8x8xf32>
    %cst_21 = arith.constant dense<0.000000e+00> : vector<32x8xf32>
    %40 = tpu.matmul %0, %39, %cst_21 {dimension_numbers = #tpu.dot_dimension_numbers<[1], [0], [0], [1], [0, 0, 1, 1], [], []>} : vector<32x8xf32>, vector<8x8xf32>, vector<32x8xf32> -> vector<32x8xf32>
    %41 = vector.extract_strided_slice %38 {offsets = [8, 0], sizes = [8, 8], strides = [1, 1]} : vector<64x8xf32> to vector<8x8xf32>
    %cst_22 = arith.constant dense<0.000000e+00> : vector<32x8xf32>
    %42 = tpu.matmul %0, %41, %cst_22 {dimension_numbers = #tpu.dot_dimension_numbers<[1], [0], [0], [1], [0, 0, 1, 1], [], []>} : vector<32x8xf32>, vector<8x8xf32>, vector<32x8xf32> -> vector<32x8xf32>
    %43 = vector.extract_strided_slice %38 {offsets = [16, 0], sizes = [8, 8], strides = [1, 1]} : vector<64x8xf32> to vector<8x8xf32>
    %cst_23 = arith.constant dense<0.000000e+00> : vector<32x8xf32>
    %44 = tpu.matmul %0, %43, %cst_23 {dimension_numbers = #tpu.dot_dimension_numbers<[1], [0], [0], [1], [0, 0, 1, 1], [], []>} : vector<32x8xf32>, vector<8x8xf32>, vector<32x8xf32> -> vector<32x8xf32>
    %45 = vector.extract_strided_slice %38 {offsets = [24, 0], sizes = [8, 8], strides = [1, 1]} : vector<64x8xf32> to vector<8x8xf32>
    %cst_24 = arith.constant dense<0.000000e+00> : vector<32x8xf32>
    %46 = tpu.matmul %0, %45, %cst_24 {dimension_numbers = #tpu.dot_dimension_numbers<[1], [0], [0], [1], [0, 0, 1, 1], [], []>} : vector<32x8xf32>, vector<8x8xf32>, vector<32x8xf32> -> vector<32x8xf32>
    %47 = vector.extract_strided_slice %38 {offsets = [32, 0], sizes = [8, 8], strides = [1, 1]} : vector<64x8xf32> to vector<8x8xf32>
    %cst_25 = arith.constant dense<0.000000e+00> : vector<32x8xf32>
    %48 = tpu.matmul %0, %47, %cst_25 {dimension_numbers = #tpu.dot_dimension_numbers<[1], [0], [0], [1], [0, 0, 1, 1], [], []>} : vector<32x8xf32>, vector<8x8xf32>, vector<32x8xf32> -> vector<32x8xf32>
    %49 = vector.extract_strided_slice %38 {offsets = [40, 0], sizes = [8, 8], strides = [1, 1]} : vector<64x8xf32> to vector<8x8xf32>
    %cst_26 = arith.constant dense<0.000000e+00> : vector<32x8xf32>
    %50 = tpu.matmul %0, %49, %cst_26 {dimension_numbers = #tpu.dot_dimension_numbers<[1], [0], [0], [1], [0, 0, 1, 1], [], []>} : vector<32x8xf32>, vector<8x8xf32>, vector<32x8xf32> -> vector<32x8xf32>
    %51 = vector.extract_strided_slice %38 {offsets = [48, 0], sizes = [8, 8], strides = [1, 1]} : vector<64x8xf32> to vector<8x8xf32>
    %cst_27 = arith.constant dense<0.000000e+00> : vector<32x8xf32>
    %52 = tpu.matmul %0, %51, %cst_27 {dimension_numbers = #tpu.dot_dimension_numbers<[1], [0], [0], [1], [0, 0, 1, 1], [], []>} : vector<32x8xf32>, vector<8x8xf32>, vector<32x8xf32> -> vector<32x8xf32>
    %53 = vector.extract_strided_slice %38 {offsets = [56, 0], sizes = [8, 8], strides = [1, 1]} : vector<64x8xf32> to vector<8x8xf32>
    %cst_28 = arith.constant dense<0.000000e+00> : vector<32x8xf32>
    %54 = tpu.matmul %0, %53, %cst_28 {dimension_numbers = #tpu.dot_dimension_numbers<[1], [0], [0], [1], [0, 0, 1, 1], [], []>} : vector<32x8xf32>, vector<8x8xf32>, vector<32x8xf32> -> vector<32x8xf32>
    %55 = tpu.concatenate %40, %42, %44, %46, %48, %50, %52, %54 in 0 : vector<32x8xf32>, vector<32x8xf32>, vector<32x8xf32>, vector<32x8xf32>, vector<32x8xf32>, vector<32x8xf32>, vector<32x8xf32>, vector<32x8xf32> -> vector<256x8xf32>
    %cst_29 = arith.constant dense<0.000000e+00> : vector<32x8xf32>
    %56 = tpu.matmul %37, %55, %cst_29 {dimension_numbers = #tpu.dot_dimension_numbers<[1], [0], [0], [1], [0, 0, 1, 1], [], []>} : vector<32x256xf32>, vector<256x8xf32>, vector<32x8xf32> -> vector<32x8xf32>
    %cst_30 = arith.constant 1.250000e-01 : f32
    %57 = vector.broadcast %cst_30 : f32 to vector<32x8xf32>
    %58 = arith.mulf %56, %57 : vector<32x8xf32>
    %c384 = arith.constant 384 : index
    %c0_31 = arith.constant 0 : index
    %59 = vector.load %arg1[%c384, %c0_31] : memref<385x8xf32, #tpu.memory_space<vmem>>, vector<1x8xf32>
    %60 = vector.broadcast %59 : vector<1x8xf32> to vector<32x8xf32>
    %61 = arith.addf %58, %60 : vector<32x8xf32>
    %c0_32 = arith.constant 0 : index
    %c0_33 = arith.constant 0 : index
    %62 = vector.load %arg3[%c0_32, %c0_33] : memref<49x128xf32, #tpu.memory_space<vmem>>, vector<16x128xf32>
    %c48 = arith.constant 48 : index
    %c0_34 = arith.constant 0 : index
    %63 = vector.load %arg3[%c48, %c0_34] : memref<49x128xf32, #tpu.memory_space<vmem>>, vector<1x128xf32>
    %64 = vector.extract_strided_slice %61 {offsets = [0, 0], sizes = [16, 8], strides = [1, 1]} : vector<32x8xf32> to vector<16x8xf32>
    %cst_35 = arith.constant dense<0.000000e+00> : vector<8x128xf32>
    %65 = tpu.matmul %64, %62, %cst_35 {dimension_numbers = #tpu.dot_dimension_numbers<[0], [0], [1], [1], [0, 1, 1, 1], [], []>} : vector<16x8xf32>, vector<16x128xf32>, vector<8x128xf32> -> vector<8x128xf32>
    %66 = vector.broadcast %63 : vector<1x128xf32> to vector<8x128xf32>
    %67 = arith.addf %65, %66 : vector<8x128xf32>
    %68 = vector.extract_strided_slice %61 {offsets = [16, 0], sizes = [16, 8], strides = [1, 1]} : vector<32x8xf32> to vector<16x8xf32>
    %cst_36 = arith.constant dense<0.000000e+00> : vector<8x128xf32>
    %69 = tpu.matmul %68, %62, %cst_36 {dimension_numbers = #tpu.dot_dimension_numbers<[0], [0], [1], [1], [0, 1, 1, 1], [], []>} : vector<16x8xf32>, vector<16x128xf32>, vector<8x128xf32> -> vector<8x128xf32>
    %70 = vector.broadcast %63 : vector<1x128xf32> to vector<8x128xf32>
    %71 = arith.addf %69, %70 : vector<8x128xf32>
    %c16 = arith.constant 16 : index
    %c0_37 = arith.constant 0 : index
    %72 = vector.load %arg3[%c16, %c0_37] : memref<49x128xf32, #tpu.memory_space<vmem>>, vector<32x128xf32>
    %c0_38 = arith.constant 0 : index
    %c0_39 = arith.constant 0 : index
    %73 = vector.load %arg5[%c0_38, %c0_39] : memref<161x512xf32, #tpu.memory_space<vmem>>, vector<32x512xf32>
    %c32 = arith.constant 32 : index
    %c0_40 = arith.constant 0 : index
    %74 = vector.load %arg5[%c32, %c0_40] : memref<161x512xf32, #tpu.memory_space<vmem>>, vector<128x512xf32>
    %c160 = arith.constant 160 : index
    %c0_41 = arith.constant 0 : index
    %75 = vector.load %arg5[%c160, %c0_41] : memref<161x512xf32, #tpu.memory_space<vmem>>, vector<1x512xf32>
    %cst_42 = arith.constant 0.000000e+00 : f32
    %76 = vector.broadcast %cst_42 : f32 to vector<2x32xf32>
    %cst_43 = arith.constant 0.000000e+00 : f32
    %77 = vector.broadcast %cst_43 : f32 to vector<2x32xf32>
    %cst_44 = arith.constant 0.000000e+00 : f32
    %78 = vector.broadcast %cst_44 : f32 to vector<2x128xf32>
    %cst_45 = arith.constant 0.000000e+00 : f32
    %79 = vector.broadcast %cst_45 : f32 to vector<2x128xf32>
    %80 = vector.extract_strided_slice %67 {offsets = [0, 0], sizes = [1, 128], strides = [1, 1]} : vector<8x128xf32> to vector<1x128xf32>
    %81 = vector.extract_strided_slice %71 {offsets = [0, 0], sizes = [1, 128], strides = [1, 1]} : vector<8x128xf32> to vector<1x128xf32>
    %82 = tpu.concatenate %80, %81 in 0 : vector<1x128xf32>, vector<1x128xf32> -> vector<2x128xf32>
    %cst_46 = arith.constant dense<0.000000e+00> : vector<2x128xf32>
    %83 = tpu.matmul %76, %72, %cst_46 {dimension_numbers = #tpu.dot_dimension_numbers<[1], [0], [0], [1], [0, 0, 1, 1], [], []>} : vector<2x32xf32>, vector<32x128xf32>, vector<2x128xf32> -> vector<2x128xf32>
    %84 = arith.addf %82, %83 : vector<2x128xf32>
    %85 = vector.extract_strided_slice %84 {offsets = [0, 0], sizes = [2, 96], strides = [1, 1]} : vector<2x128xf32> to vector<2x96xf32>
    %86 = arith.negf %85 : vector<2x96xf32>
    %87 = math.exp %86 : vector<2x96xf32>
    %cst_47 = arith.constant 1.000000e+00 : f32
    %88 = vector.broadcast %cst_47 : f32 to vector<2x96xf32>
    %89 = arith.addf %88, %87 : vector<2x96xf32>
    %90 = arith.divf %88, %89 : vector<2x96xf32>
    %91 = vector.extract_strided_slice %84 {offsets = [0, 96], sizes = [2, 32], strides = [1, 1]} : vector<2x128xf32> to vector<2x32xf32>
    %92 = math.tanh %91 : vector<2x32xf32>
    %93 = vector.extract_strided_slice %90 {offsets = [0, 32], sizes = [2, 32], strides = [1, 1]} : vector<2x96xf32> to vector<2x32xf32>
    %94 = arith.mulf %93, %77 : vector<2x32xf32>
    %95 = vector.extract_strided_slice %90 {offsets = [0, 0], sizes = [2, 32], strides = [1, 1]} : vector<2x96xf32> to vector<2x32xf32>
    %96 = arith.mulf %95, %92 : vector<2x32xf32>
    %97 = arith.addf %94, %96 : vector<2x32xf32>
    %98 = vector.extract_strided_slice %90 {offsets = [0, 64], sizes = [2, 32], strides = [1, 1]} : vector<2x96xf32> to vector<2x32xf32>
    %99 = math.tanh %97 : vector<2x32xf32>
    %100 = arith.mulf %98, %99 : vector<2x32xf32>
    %101 = vector.extract_strided_slice %67 {offsets = [1, 0], sizes = [1, 128], strides = [1, 1]} : vector<8x128xf32> to vector<1x128xf32>
    %102 = vector.extract_strided_slice %71 {offsets = [1, 0], sizes = [1, 128], strides = [1, 1]} : vector<8x128xf32> to vector<1x128xf32>
    %103 = tpu.concatenate %101, %102 in 0 : vector<1x128xf32>, vector<1x128xf32> -> vector<2x128xf32>
    %cst_48 = arith.constant dense<0.000000e+00> : vector<2x128xf32>
    %104 = tpu.matmul %100, %72, %cst_48 {dimension_numbers = #tpu.dot_dimension_numbers<[1], [0], [0], [1], [0, 0, 1, 1], [], []>} : vector<2x32xf32>, vector<32x128xf32>, vector<2x128xf32> -> vector<2x128xf32>
    %105 = arith.addf %103, %104 : vector<2x128xf32>
    %106 = vector.extract_strided_slice %105 {offsets = [0, 0], sizes = [2, 96], strides = [1, 1]} : vector<2x128xf32> to vector<2x96xf32>
    %107 = arith.negf %106 : vector<2x96xf32>
    %108 = math.exp %107 : vector<2x96xf32>
    %cst_49 = arith.constant 1.000000e+00 : f32
    %109 = vector.broadcast %cst_49 : f32 to vector<2x96xf32>
    %110 = arith.addf %109, %108 : vector<2x96xf32>
    %111 = arith.divf %109, %110 : vector<2x96xf32>
    %112 = vector.extract_strided_slice %105 {offsets = [0, 96], sizes = [2, 32], strides = [1, 1]} : vector<2x128xf32> to vector<2x32xf32>
    %113 = math.tanh %112 : vector<2x32xf32>
    %114 = vector.extract_strided_slice %111 {offsets = [0, 32], sizes = [2, 32], strides = [1, 1]} : vector<2x96xf32> to vector<2x32xf32>
    %115 = arith.mulf %114, %97 : vector<2x32xf32>
    %116 = vector.extract_strided_slice %111 {offsets = [0, 0], sizes = [2, 32], strides = [1, 1]} : vector<2x96xf32> to vector<2x32xf32>
    %117 = arith.mulf %116, %113 : vector<2x32xf32>
    %118 = arith.addf %115, %117 : vector<2x32xf32>
    %119 = vector.extract_strided_slice %111 {offsets = [0, 64], sizes = [2, 32], strides = [1, 1]} : vector<2x96xf32> to vector<2x32xf32>
    %120 = math.tanh %118 : vector<2x32xf32>
    %121 = arith.mulf %119, %120 : vector<2x32xf32>
    %cst_50 = arith.constant dense<0.000000e+00> : vector<2x512xf32>
    %122 = tpu.matmul %100, %73, %cst_50 {dimension_numbers = #tpu.dot_dimension_numbers<[1], [0], [0], [1], [0, 0, 1, 1], [], []>} : vector<2x32xf32>, vector<32x512xf32>, vector<2x512xf32> -> vector<2x512xf32>
    %cst_51 = arith.constant dense<0.000000e+00> : vector<2x512xf32>
    %123 = tpu.matmul %78, %74, %cst_51 {dimension_numbers = #tpu.dot_dimension_numbers<[1], [0], [0], [1], [0, 0, 1, 1], [], []>} : vector<2x128xf32>, vector<128x512xf32>, vector<2x512xf32> -> vector<2x512xf32>
    %124 = arith.addf %122, %123 : vector<2x512xf32>
    %125 = vector.broadcast %75 : vector<1x512xf32> to vector<2x512xf32>
    %126 = arith.addf %124, %125 : vector<2x512xf32>
    %127 = vector.extract_strided_slice %126 {offsets = [0, 0], sizes = [2, 384], strides = [1, 1]} : vector<2x512xf32> to vector<2x384xf32>
    %128 = arith.negf %127 : vector<2x384xf32>
    %129 = math.exp %128 : vector<2x384xf32>
    %cst_52 = arith.constant 1.000000e+00 : f32
    %130 = vector.broadcast %cst_52 : f32 to vector<2x384xf32>
    %131 = arith.addf %130, %129 : vector<2x384xf32>
    %132 = arith.divf %130, %131 : vector<2x384xf32>
    %133 = vector.extract_strided_slice %126 {offsets = [0, 384], sizes = [2, 128], strides = [1, 1]} : vector<2x512xf32> to vector<2x128xf32>
    %134 = math.tanh %133 : vector<2x128xf32>
    %135 = vector.extract_strided_slice %132 {offsets = [0, 128], sizes = [2, 128], strides = [1, 1]} : vector<2x384xf32> to vector<2x128xf32>
    %136 = arith.mulf %135, %79 : vector<2x128xf32>
    %137 = vector.extract_strided_slice %132 {offsets = [0, 0], sizes = [2, 128], strides = [1, 1]} : vector<2x384xf32> to vector<2x128xf32>
    %138 = arith.mulf %137, %134 : vector<2x128xf32>
    %139 = arith.addf %136, %138 : vector<2x128xf32>
    %140 = vector.extract_strided_slice %132 {offsets = [0, 256], sizes = [2, 128], strides = [1, 1]} : vector<2x384xf32> to vector<2x128xf32>
    %141 = math.tanh %139 : vector<2x128xf32>
    %142 = arith.mulf %140, %141 : vector<2x128xf32>
    %143 = vector.extract_strided_slice %67 {offsets = [2, 0], sizes = [1, 128], strides = [1, 1]} : vector<8x128xf32> to vector<1x128xf32>
    %144 = vector.extract_strided_slice %71 {offsets = [2, 0], sizes = [1, 128], strides = [1, 1]} : vector<8x128xf32> to vector<1x128xf32>
    %145 = tpu.concatenate %143, %144 in 0 : vector<1x128xf32>, vector<1x128xf32> -> vector<2x128xf32>
    %cst_53 = arith.constant dense<0.000000e+00> : vector<2x128xf32>
    %146 = tpu.matmul %121, %72, %cst_53 {dimension_numbers = #tpu.dot_dimension_numbers<[1], [0], [0], [1], [0, 0, 1, 1], [], []>} : vector<2x32xf32>, vector<32x128xf32>, vector<2x128xf32> -> vector<2x128xf32>
    %147 = arith.addf %145, %146 : vector<2x128xf32>
    %148 = vector.extract_strided_slice %147 {offsets = [0, 0], sizes = [2, 96], strides = [1, 1]} : vector<2x128xf32> to vector<2x96xf32>
    %149 = arith.negf %148 : vector<2x96xf32>
    %150 = math.exp %149 : vector<2x96xf32>
    %cst_54 = arith.constant 1.000000e+00 : f32
    %151 = vector.broadcast %cst_54 : f32 to vector<2x96xf32>
    %152 = arith.addf %151, %150 : vector<2x96xf32>
    %153 = arith.divf %151, %152 : vector<2x96xf32>
    %154 = vector.extract_strided_slice %147 {offsets = [0, 96], sizes = [2, 32], strides = [1, 1]} : vector<2x128xf32> to vector<2x32xf32>
    %155 = math.tanh %154 : vector<2x32xf32>
    %156 = vector.extract_strided_slice %153 {offsets = [0, 32], sizes = [2, 32], strides = [1, 1]} : vector<2x96xf32> to vector<2x32xf32>
    %157 = arith.mulf %156, %118 : vector<2x32xf32>
    %158 = vector.extract_strided_slice %153 {offsets = [0, 0], sizes = [2, 32], strides = [1, 1]} : vector<2x96xf32> to vector<2x32xf32>
    %159 = arith.mulf %158, %155 : vector<2x32xf32>
    %160 = arith.addf %157, %159 : vector<2x32xf32>
    %161 = vector.extract_strided_slice %153 {offsets = [0, 64], sizes = [2, 32], strides = [1, 1]} : vector<2x96xf32> to vector<2x32xf32>
    %162 = math.tanh %160 : vector<2x32xf32>
    %163 = arith.mulf %161, %162 : vector<2x32xf32>
    %cst_55 = arith.constant dense<0.000000e+00> : vector<2x512xf32>
    %164 = tpu.matmul %121, %73, %cst_55 {dimension_numbers = #tpu.dot_dimension_numbers<[1], [0], [0], [1], [0, 0, 1, 1], [], []>} : vector<2x32xf32>, vector<32x512xf32>, vector<2x512xf32> -> vector<2x512xf32>
    %cst_56 = arith.constant dense<0.000000e+00> : vector<2x512xf32>
    %165 = tpu.matmul %142, %74, %cst_56 {dimension_numbers = #tpu.dot_dimension_numbers<[1], [0], [0], [1], [0, 0, 1, 1], [], []>} : vector<2x128xf32>, vector<128x512xf32>, vector<2x512xf32> -> vector<2x512xf32>
    %166 = arith.addf %164, %165 : vector<2x512xf32>
    %167 = vector.broadcast %75 : vector<1x512xf32> to vector<2x512xf32>
    %168 = arith.addf %166, %167 : vector<2x512xf32>
    %169 = vector.extract_strided_slice %168 {offsets = [0, 0], sizes = [2, 384], strides = [1, 1]} : vector<2x512xf32> to vector<2x384xf32>
    %170 = arith.negf %169 : vector<2x384xf32>
    %171 = math.exp %170 : vector<2x384xf32>
    %cst_57 = arith.constant 1.000000e+00 : f32
    %172 = vector.broadcast %cst_57 : f32 to vector<2x384xf32>
    %173 = arith.addf %172, %171 : vector<2x384xf32>
    %174 = arith.divf %172, %173 : vector<2x384xf32>
    %175 = vector.extract_strided_slice %168 {offsets = [0, 384], sizes = [2, 128], strides = [1, 1]} : vector<2x512xf32> to vector<2x128xf32>
    %176 = math.tanh %175 : vector<2x128xf32>
    %177 = vector.extract_strided_slice %174 {offsets = [0, 128], sizes = [2, 128], strides = [1, 1]} : vector<2x384xf32> to vector<2x128xf32>
    %178 = arith.mulf %177, %139 : vector<2x128xf32>
    %179 = vector.extract_strided_slice %174 {offsets = [0, 0], sizes = [2, 128], strides = [1, 1]} : vector<2x384xf32> to vector<2x128xf32>
    %180 = arith.mulf %179, %176 : vector<2x128xf32>
    %181 = arith.addf %178, %180 : vector<2x128xf32>
    %182 = vector.extract_strided_slice %174 {offsets = [0, 256], sizes = [2, 128], strides = [1, 1]} : vector<2x384xf32> to vector<2x128xf32>
    %183 = math.tanh %181 : vector<2x128xf32>
    %184 = arith.mulf %182, %183 : vector<2x128xf32>
    %185 = vector.extract_strided_slice %67 {offsets = [3, 0], sizes = [1, 128], strides = [1, 1]} : vector<8x128xf32> to vector<1x128xf32>
    %186 = vector.extract_strided_slice %71 {offsets = [3, 0], sizes = [1, 128], strides = [1, 1]} : vector<8x128xf32> to vector<1x128xf32>
    %187 = tpu.concatenate %185, %186 in 0 : vector<1x128xf32>, vector<1x128xf32> -> vector<2x128xf32>
    %cst_58 = arith.constant dense<0.000000e+00> : vector<2x128xf32>
    %188 = tpu.matmul %163, %72, %cst_58 {dimension_numbers = #tpu.dot_dimension_numbers<[1], [0], [0], [1], [0, 0, 1, 1], [], []>} : vector<2x32xf32>, vector<32x128xf32>, vector<2x128xf32> -> vector<2x128xf32>
    %189 = arith.addf %187, %188 : vector<2x128xf32>
    %190 = vector.extract_strided_slice %189 {offsets = [0, 0], sizes = [2, 96], strides = [1, 1]} : vector<2x128xf32> to vector<2x96xf32>
    %191 = arith.negf %190 : vector<2x96xf32>
    %192 = math.exp %191 : vector<2x96xf32>
    %cst_59 = arith.constant 1.000000e+00 : f32
    %193 = vector.broadcast %cst_59 : f32 to vector<2x96xf32>
    %194 = arith.addf %193, %192 : vector<2x96xf32>
    %195 = arith.divf %193, %194 : vector<2x96xf32>
    %196 = vector.extract_strided_slice %189 {offsets = [0, 96], sizes = [2, 32], strides = [1, 1]} : vector<2x128xf32> to vector<2x32xf32>
    %197 = math.tanh %196 : vector<2x32xf32>
    %198 = vector.extract_strided_slice %195 {offsets = [0, 32], sizes = [2, 32], strides = [1, 1]} : vector<2x96xf32> to vector<2x32xf32>
    %199 = arith.mulf %198, %160 : vector<2x32xf32>
    %200 = vector.extract_strided_slice %195 {offsets = [0, 0], sizes = [2, 32], strides = [1, 1]} : vector<2x96xf32> to vector<2x32xf32>
    %201 = arith.mulf %200, %197 : vector<2x32xf32>
    %202 = arith.addf %199, %201 : vector<2x32xf32>
    %203 = vector.extract_strided_slice %195 {offsets = [0, 64], sizes = [2, 32], strides = [1, 1]} : vector<2x96xf32> to vector<2x32xf32>
    %204 = math.tanh %202 : vector<2x32xf32>
    %205 = arith.mulf %203, %204 : vector<2x32xf32>
    %cst_60 = arith.constant dense<0.000000e+00> : vector<2x512xf32>
    %206 = tpu.matmul %163, %73, %cst_60 {dimension_numbers = #tpu.dot_dimension_numbers<[1], [0], [0], [1], [0, 0, 1, 1], [], []>} : vector<2x32xf32>, vector<32x512xf32>, vector<2x512xf32> -> vector<2x512xf32>
    %cst_61 = arith.constant dense<0.000000e+00> : vector<2x512xf32>
    %207 = tpu.matmul %184, %74, %cst_61 {dimension_numbers = #tpu.dot_dimension_numbers<[1], [0], [0], [1], [0, 0, 1, 1], [], []>} : vector<2x128xf32>, vector<128x512xf32>, vector<2x512xf32> -> vector<2x512xf32>
    %208 = arith.addf %206, %207 : vector<2x512xf32>
    %209 = vector.broadcast %75 : vector<1x512xf32> to vector<2x512xf32>
    %210 = arith.addf %208, %209 : vector<2x512xf32>
    %211 = vector.extract_strided_slice %210 {offsets = [0, 0], sizes = [2, 384], strides = [1, 1]} : vector<2x512xf32> to vector<2x384xf32>
    %212 = arith.negf %211 : vector<2x384xf32>
    %213 = math.exp %212 : vector<2x384xf32>
    %cst_62 = arith.constant 1.000000e+00 : f32
    %214 = vector.broadcast %cst_62 : f32 to vector<2x384xf32>
    %215 = arith.addf %214, %213 : vector<2x384xf32>
    %216 = arith.divf %214, %215 : vector<2x384xf32>
    %217 = vector.extract_strided_slice %210 {offsets = [0, 384], sizes = [2, 128], strides = [1, 1]} : vector<2x512xf32> to vector<2x128xf32>
    %218 = math.tanh %217 : vector<2x128xf32>
    %219 = vector.extract_strided_slice %216 {offsets = [0, 128], sizes = [2, 128], strides = [1, 1]} : vector<2x384xf32> to vector<2x128xf32>
    %220 = arith.mulf %219, %181 : vector<2x128xf32>
    %221 = vector.extract_strided_slice %216 {offsets = [0, 0], sizes = [2, 128], strides = [1, 1]} : vector<2x384xf32> to vector<2x128xf32>
    %222 = arith.mulf %221, %218 : vector<2x128xf32>
    %223 = arith.addf %220, %222 : vector<2x128xf32>
    %224 = vector.extract_strided_slice %216 {offsets = [0, 256], sizes = [2, 128], strides = [1, 1]} : vector<2x384xf32> to vector<2x128xf32>
    %225 = math.tanh %223 : vector<2x128xf32>
    %226 = arith.mulf %224, %225 : vector<2x128xf32>
    %227 = vector.extract_strided_slice %67 {offsets = [4, 0], sizes = [1, 128], strides = [1, 1]} : vector<8x128xf32> to vector<1x128xf32>
    %228 = vector.extract_strided_slice %71 {offsets = [4, 0], sizes = [1, 128], strides = [1, 1]} : vector<8x128xf32> to vector<1x128xf32>
    %229 = tpu.concatenate %227, %228 in 0 : vector<1x128xf32>, vector<1x128xf32> -> vector<2x128xf32>
    %cst_63 = arith.constant dense<0.000000e+00> : vector<2x128xf32>
    %230 = tpu.matmul %205, %72, %cst_63 {dimension_numbers = #tpu.dot_dimension_numbers<[1], [0], [0], [1], [0, 0, 1, 1], [], []>} : vector<2x32xf32>, vector<32x128xf32>, vector<2x128xf32> -> vector<2x128xf32>
    %231 = arith.addf %229, %230 : vector<2x128xf32>
    %232 = vector.extract_strided_slice %231 {offsets = [0, 0], sizes = [2, 96], strides = [1, 1]} : vector<2x128xf32> to vector<2x96xf32>
    %233 = arith.negf %232 : vector<2x96xf32>
    %234 = math.exp %233 : vector<2x96xf32>
    %cst_64 = arith.constant 1.000000e+00 : f32
    %235 = vector.broadcast %cst_64 : f32 to vector<2x96xf32>
    %236 = arith.addf %235, %234 : vector<2x96xf32>
    %237 = arith.divf %235, %236 : vector<2x96xf32>
    %238 = vector.extract_strided_slice %231 {offsets = [0, 96], sizes = [2, 32], strides = [1, 1]} : vector<2x128xf32> to vector<2x32xf32>
    %239 = math.tanh %238 : vector<2x32xf32>
    %240 = vector.extract_strided_slice %237 {offsets = [0, 32], sizes = [2, 32], strides = [1, 1]} : vector<2x96xf32> to vector<2x32xf32>
    %241 = arith.mulf %240, %202 : vector<2x32xf32>
    %242 = vector.extract_strided_slice %237 {offsets = [0, 0], sizes = [2, 32], strides = [1, 1]} : vector<2x96xf32> to vector<2x32xf32>
    %243 = arith.mulf %242, %239 : vector<2x32xf32>
    %244 = arith.addf %241, %243 : vector<2x32xf32>
    %245 = vector.extract_strided_slice %237 {offsets = [0, 64], sizes = [2, 32], strides = [1, 1]} : vector<2x96xf32> to vector<2x32xf32>
    %246 = math.tanh %244 : vector<2x32xf32>
    %247 = arith.mulf %245, %246 : vector<2x32xf32>
    %cst_65 = arith.constant dense<0.000000e+00> : vector<2x512xf32>
    %248 = tpu.matmul %205, %73, %cst_65 {dimension_numbers = #tpu.dot_dimension_numbers<[1], [0], [0], [1], [0, 0, 1, 1], [], []>} : vector<2x32xf32>, vector<32x512xf32>, vector<2x512xf32> -> vector<2x512xf32>
    %cst_66 = arith.constant dense<0.000000e+00> : vector<2x512xf32>
    %249 = tpu.matmul %226, %74, %cst_66 {dimension_numbers = #tpu.dot_dimension_numbers<[1], [0], [0], [1], [0, 0, 1, 1], [], []>} : vector<2x128xf32>, vector<128x512xf32>, vector<2x512xf32> -> vector<2x512xf32>
    %250 = arith.addf %248, %249 : vector<2x512xf32>
    %251 = vector.broadcast %75 : vector<1x512xf32> to vector<2x512xf32>
    %252 = arith.addf %250, %251 : vector<2x512xf32>
    %253 = vector.extract_strided_slice %252 {offsets = [0, 0], sizes = [2, 384], strides = [1, 1]} : vector<2x512xf32> to vector<2x384xf32>
    %254 = arith.negf %253 : vector<2x384xf32>
    %255 = math.exp %254 : vector<2x384xf32>
    %cst_67 = arith.constant 1.000000e+00 : f32
    %256 = vector.broadcast %cst_67 : f32 to vector<2x384xf32>
    %257 = arith.addf %256, %255 : vector<2x384xf32>
    %258 = arith.divf %256, %257 : vector<2x384xf32>
    %259 = vector.extract_strided_slice %252 {offsets = [0, 384], sizes = [2, 128], strides = [1, 1]} : vector<2x512xf32> to vector<2x128xf32>
    %260 = math.tanh %259 : vector<2x128xf32>
    %261 = vector.extract_strided_slice %258 {offsets = [0, 128], sizes = [2, 128], strides = [1, 1]} : vector<2x384xf32> to vector<2x128xf32>
    %262 = arith.mulf %261, %223 : vector<2x128xf32>
    %263 = vector.extract_strided_slice %258 {offsets = [0, 0], sizes = [2, 128], strides = [1, 1]} : vector<2x384xf32> to vector<2x128xf32>
    %264 = arith.mulf %263, %260 : vector<2x128xf32>
    %265 = arith.addf %262, %264 : vector<2x128xf32>
    %266 = vector.extract_strided_slice %258 {offsets = [0, 256], sizes = [2, 128], strides = [1, 1]} : vector<2x384xf32> to vector<2x128xf32>
    %267 = math.tanh %265 : vector<2x128xf32>
    %268 = arith.mulf %266, %267 : vector<2x128xf32>
    %269 = vector.extract_strided_slice %67 {offsets = [5, 0], sizes = [1, 128], strides = [1, 1]} : vector<8x128xf32> to vector<1x128xf32>
    %270 = vector.extract_strided_slice %71 {offsets = [5, 0], sizes = [1, 128], strides = [1, 1]} : vector<8x128xf32> to vector<1x128xf32>
    %271 = tpu.concatenate %269, %270 in 0 : vector<1x128xf32>, vector<1x128xf32> -> vector<2x128xf32>
    %cst_68 = arith.constant dense<0.000000e+00> : vector<2x128xf32>
    %272 = tpu.matmul %247, %72, %cst_68 {dimension_numbers = #tpu.dot_dimension_numbers<[1], [0], [0], [1], [0, 0, 1, 1], [], []>} : vector<2x32xf32>, vector<32x128xf32>, vector<2x128xf32> -> vector<2x128xf32>
    %273 = arith.addf %271, %272 : vector<2x128xf32>
    %274 = vector.extract_strided_slice %273 {offsets = [0, 0], sizes = [2, 96], strides = [1, 1]} : vector<2x128xf32> to vector<2x96xf32>
    %275 = arith.negf %274 : vector<2x96xf32>
    %276 = math.exp %275 : vector<2x96xf32>
    %cst_69 = arith.constant 1.000000e+00 : f32
    %277 = vector.broadcast %cst_69 : f32 to vector<2x96xf32>
    %278 = arith.addf %277, %276 : vector<2x96xf32>
    %279 = arith.divf %277, %278 : vector<2x96xf32>
    %280 = vector.extract_strided_slice %273 {offsets = [0, 96], sizes = [2, 32], strides = [1, 1]} : vector<2x128xf32> to vector<2x32xf32>
    %281 = math.tanh %280 : vector<2x32xf32>
    %282 = vector.extract_strided_slice %279 {offsets = [0, 32], sizes = [2, 32], strides = [1, 1]} : vector<2x96xf32> to vector<2x32xf32>
    %283 = arith.mulf %282, %244 : vector<2x32xf32>
    %284 = vector.extract_strided_slice %279 {offsets = [0, 0], sizes = [2, 32], strides = [1, 1]} : vector<2x96xf32> to vector<2x32xf32>
    %285 = arith.mulf %284, %281 : vector<2x32xf32>
    %286 = arith.addf %283, %285 : vector<2x32xf32>
    %287 = vector.extract_strided_slice %279 {offsets = [0, 64], sizes = [2, 32], strides = [1, 1]} : vector<2x96xf32> to vector<2x32xf32>
    %288 = math.tanh %286 : vector<2x32xf32>
    %289 = arith.mulf %287, %288 : vector<2x32xf32>
    %cst_70 = arith.constant dense<0.000000e+00> : vector<2x512xf32>
    %290 = tpu.matmul %247, %73, %cst_70 {dimension_numbers = #tpu.dot_dimension_numbers<[1], [0], [0], [1], [0, 0, 1, 1], [], []>} : vector<2x32xf32>, vector<32x512xf32>, vector<2x512xf32> -> vector<2x512xf32>
    %cst_71 = arith.constant dense<0.000000e+00> : vector<2x512xf32>
    %291 = tpu.matmul %268, %74, %cst_71 {dimension_numbers = #tpu.dot_dimension_numbers<[1], [0], [0], [1], [0, 0, 1, 1], [], []>} : vector<2x128xf32>, vector<128x512xf32>, vector<2x512xf32> -> vector<2x512xf32>
    %292 = arith.addf %290, %291 : vector<2x512xf32>
    %293 = vector.broadcast %75 : vector<1x512xf32> to vector<2x512xf32>
    %294 = arith.addf %292, %293 : vector<2x512xf32>
    %295 = vector.extract_strided_slice %294 {offsets = [0, 0], sizes = [2, 384], strides = [1, 1]} : vector<2x512xf32> to vector<2x384xf32>
    %296 = arith.negf %295 : vector<2x384xf32>
    %297 = math.exp %296 : vector<2x384xf32>
    %cst_72 = arith.constant 1.000000e+00 : f32
    %298 = vector.broadcast %cst_72 : f32 to vector<2x384xf32>
    %299 = arith.addf %298, %297 : vector<2x384xf32>
    %300 = arith.divf %298, %299 : vector<2x384xf32>
    %301 = vector.extract_strided_slice %294 {offsets = [0, 384], sizes = [2, 128], strides = [1, 1]} : vector<2x512xf32> to vector<2x128xf32>
    %302 = math.tanh %301 : vector<2x128xf32>
    %303 = vector.extract_strided_slice %300 {offsets = [0, 128], sizes = [2, 128], strides = [1, 1]} : vector<2x384xf32> to vector<2x128xf32>
    %304 = arith.mulf %303, %265 : vector<2x128xf32>
    %305 = vector.extract_strided_slice %300 {offsets = [0, 0], sizes = [2, 128], strides = [1, 1]} : vector<2x384xf32> to vector<2x128xf32>
    %306 = arith.mulf %305, %302 : vector<2x128xf32>
    %307 = arith.addf %304, %306 : vector<2x128xf32>
    %308 = vector.extract_strided_slice %300 {offsets = [0, 256], sizes = [2, 128], strides = [1, 1]} : vector<2x384xf32> to vector<2x128xf32>
    %309 = math.tanh %307 : vector<2x128xf32>
    %310 = arith.mulf %308, %309 : vector<2x128xf32>
    %311 = vector.extract_strided_slice %67 {offsets = [6, 0], sizes = [1, 128], strides = [1, 1]} : vector<8x128xf32> to vector<1x128xf32>
    %312 = vector.extract_strided_slice %71 {offsets = [6, 0], sizes = [1, 128], strides = [1, 1]} : vector<8x128xf32> to vector<1x128xf32>
    %313 = tpu.concatenate %311, %312 in 0 : vector<1x128xf32>, vector<1x128xf32> -> vector<2x128xf32>
    %cst_73 = arith.constant dense<0.000000e+00> : vector<2x128xf32>
    %314 = tpu.matmul %289, %72, %cst_73 {dimension_numbers = #tpu.dot_dimension_numbers<[1], [0], [0], [1], [0, 0, 1, 1], [], []>} : vector<2x32xf32>, vector<32x128xf32>, vector<2x128xf32> -> vector<2x128xf32>
    %315 = arith.addf %313, %314 : vector<2x128xf32>
    %316 = vector.extract_strided_slice %315 {offsets = [0, 0], sizes = [2, 96], strides = [1, 1]} : vector<2x128xf32> to vector<2x96xf32>
    %317 = arith.negf %316 : vector<2x96xf32>
    %318 = math.exp %317 : vector<2x96xf32>
    %cst_74 = arith.constant 1.000000e+00 : f32
    %319 = vector.broadcast %cst_74 : f32 to vector<2x96xf32>
    %320 = arith.addf %319, %318 : vector<2x96xf32>
    %321 = arith.divf %319, %320 : vector<2x96xf32>
    %322 = vector.extract_strided_slice %315 {offsets = [0, 96], sizes = [2, 32], strides = [1, 1]} : vector<2x128xf32> to vector<2x32xf32>
    %323 = math.tanh %322 : vector<2x32xf32>
    %324 = vector.extract_strided_slice %321 {offsets = [0, 32], sizes = [2, 32], strides = [1, 1]} : vector<2x96xf32> to vector<2x32xf32>
    %325 = arith.mulf %324, %286 : vector<2x32xf32>
    %326 = vector.extract_strided_slice %321 {offsets = [0, 0], sizes = [2, 32], strides = [1, 1]} : vector<2x96xf32> to vector<2x32xf32>
    %327 = arith.mulf %326, %323 : vector<2x32xf32>
    %328 = arith.addf %325, %327 : vector<2x32xf32>
    %329 = vector.extract_strided_slice %321 {offsets = [0, 64], sizes = [2, 32], strides = [1, 1]} : vector<2x96xf32> to vector<2x32xf32>
    %330 = math.tanh %328 : vector<2x32xf32>
    %331 = arith.mulf %329, %330 : vector<2x32xf32>
    %cst_75 = arith.constant dense<0.000000e+00> : vector<2x512xf32>
    %332 = tpu.matmul %289, %73, %cst_75 {dimension_numbers = #tpu.dot_dimension_numbers<[1], [0], [0], [1], [0, 0, 1, 1], [], []>} : vector<2x32xf32>, vector<32x512xf32>, vector<2x512xf32> -> vector<2x512xf32>
    %cst_76 = arith.constant dense<0.000000e+00> : vector<2x512xf32>
    %333 = tpu.matmul %310, %74, %cst_76 {dimension_numbers = #tpu.dot_dimension_numbers<[1], [0], [0], [1], [0, 0, 1, 1], [], []>} : vector<2x128xf32>, vector<128x512xf32>, vector<2x512xf32> -> vector<2x512xf32>
    %334 = arith.addf %332, %333 : vector<2x512xf32>
    %335 = vector.broadcast %75 : vector<1x512xf32> to vector<2x512xf32>
    %336 = arith.addf %334, %335 : vector<2x512xf32>
    %337 = vector.extract_strided_slice %336 {offsets = [0, 0], sizes = [2, 384], strides = [1, 1]} : vector<2x512xf32> to vector<2x384xf32>
    %338 = arith.negf %337 : vector<2x384xf32>
    %339 = math.exp %338 : vector<2x384xf32>
    %cst_77 = arith.constant 1.000000e+00 : f32
    %340 = vector.broadcast %cst_77 : f32 to vector<2x384xf32>
    %341 = arith.addf %340, %339 : vector<2x384xf32>
    %342 = arith.divf %340, %341 : vector<2x384xf32>
    %343 = vector.extract_strided_slice %336 {offsets = [0, 384], sizes = [2, 128], strides = [1, 1]} : vector<2x512xf32> to vector<2x128xf32>
    %344 = math.tanh %343 : vector<2x128xf32>
    %345 = vector.extract_strided_slice %342 {offsets = [0, 128], sizes = [2, 128], strides = [1, 1]} : vector<2x384xf32> to vector<2x128xf32>
    %346 = arith.mulf %345, %307 : vector<2x128xf32>
    %347 = vector.extract_strided_slice %342 {offsets = [0, 0], sizes = [2, 128], strides = [1, 1]} : vector<2x384xf32> to vector<2x128xf32>
    %348 = arith.mulf %347, %344 : vector<2x128xf32>
    %349 = arith.addf %346, %348 : vector<2x128xf32>
    %350 = vector.extract_strided_slice %342 {offsets = [0, 256], sizes = [2, 128], strides = [1, 1]} : vector<2x384xf32> to vector<2x128xf32>
    %351 = math.tanh %349 : vector<2x128xf32>
    %352 = arith.mulf %350, %351 : vector<2x128xf32>
    %353 = vector.extract_strided_slice %67 {offsets = [7, 0], sizes = [1, 128], strides = [1, 1]} : vector<8x128xf32> to vector<1x128xf32>
    %354 = vector.extract_strided_slice %71 {offsets = [7, 0], sizes = [1, 128], strides = [1, 1]} : vector<8x128xf32> to vector<1x128xf32>
    %355 = tpu.concatenate %353, %354 in 0 : vector<1x128xf32>, vector<1x128xf32> -> vector<2x128xf32>
    %cst_78 = arith.constant dense<0.000000e+00> : vector<2x128xf32>
    %356 = tpu.matmul %331, %72, %cst_78 {dimension_numbers = #tpu.dot_dimension_numbers<[1], [0], [0], [1], [0, 0, 1, 1], [], []>} : vector<2x32xf32>, vector<32x128xf32>, vector<2x128xf32> -> vector<2x128xf32>
    %357 = arith.addf %355, %356 : vector<2x128xf32>
    %358 = vector.extract_strided_slice %357 {offsets = [0, 0], sizes = [2, 96], strides = [1, 1]} : vector<2x128xf32> to vector<2x96xf32>
    %359 = arith.negf %358 : vector<2x96xf32>
    %360 = math.exp %359 : vector<2x96xf32>
    %cst_79 = arith.constant 1.000000e+00 : f32
    %361 = vector.broadcast %cst_79 : f32 to vector<2x96xf32>
    %362 = arith.addf %361, %360 : vector<2x96xf32>
    %363 = arith.divf %361, %362 : vector<2x96xf32>
    %364 = vector.extract_strided_slice %357 {offsets = [0, 96], sizes = [2, 32], strides = [1, 1]} : vector<2x128xf32> to vector<2x32xf32>
    %365 = math.tanh %364 : vector<2x32xf32>
    %366 = vector.extract_strided_slice %363 {offsets = [0, 32], sizes = [2, 32], strides = [1, 1]} : vector<2x96xf32> to vector<2x32xf32>
    %367 = arith.mulf %366, %328 : vector<2x32xf32>
    %368 = vector.extract_strided_slice %363 {offsets = [0, 0], sizes = [2, 32], strides = [1, 1]} : vector<2x96xf32> to vector<2x32xf32>
    %369 = arith.mulf %368, %365 : vector<2x32xf32>
    %370 = arith.addf %367, %369 : vector<2x32xf32>
    %371 = vector.extract_strided_slice %363 {offsets = [0, 64], sizes = [2, 32], strides = [1, 1]} : vector<2x96xf32> to vector<2x32xf32>
    %372 = math.tanh %370 : vector<2x32xf32>
    %373 = arith.mulf %371, %372 : vector<2x32xf32>
    %cst_80 = arith.constant dense<0.000000e+00> : vector<2x512xf32>
    %374 = tpu.matmul %331, %73, %cst_80 {dimension_numbers = #tpu.dot_dimension_numbers<[1], [0], [0], [1], [0, 0, 1, 1], [], []>} : vector<2x32xf32>, vector<32x512xf32>, vector<2x512xf32> -> vector<2x512xf32>
    %cst_81 = arith.constant dense<0.000000e+00> : vector<2x512xf32>
    %375 = tpu.matmul %352, %74, %cst_81 {dimension_numbers = #tpu.dot_dimension_numbers<[1], [0], [0], [1], [0, 0, 1, 1], [], []>} : vector<2x128xf32>, vector<128x512xf32>, vector<2x512xf32> -> vector<2x512xf32>
    %376 = arith.addf %374, %375 : vector<2x512xf32>
    %377 = vector.broadcast %75 : vector<1x512xf32> to vector<2x512xf32>
    %378 = arith.addf %376, %377 : vector<2x512xf32>
    %379 = vector.extract_strided_slice %378 {offsets = [0, 0], sizes = [2, 384], strides = [1, 1]} : vector<2x512xf32> to vector<2x384xf32>
    %380 = arith.negf %379 : vector<2x384xf32>
    %381 = math.exp %380 : vector<2x384xf32>
    %cst_82 = arith.constant 1.000000e+00 : f32
    %382 = vector.broadcast %cst_82 : f32 to vector<2x384xf32>
    %383 = arith.addf %382, %381 : vector<2x384xf32>
    %384 = arith.divf %382, %383 : vector<2x384xf32>
    %385 = vector.extract_strided_slice %378 {offsets = [0, 384], sizes = [2, 128], strides = [1, 1]} : vector<2x512xf32> to vector<2x128xf32>
    %386 = math.tanh %385 : vector<2x128xf32>
    %387 = vector.extract_strided_slice %384 {offsets = [0, 128], sizes = [2, 128], strides = [1, 1]} : vector<2x384xf32> to vector<2x128xf32>
    %388 = arith.mulf %387, %349 : vector<2x128xf32>
    %389 = vector.extract_strided_slice %384 {offsets = [0, 0], sizes = [2, 128], strides = [1, 1]} : vector<2x384xf32> to vector<2x128xf32>
    %390 = arith.mulf %389, %386 : vector<2x128xf32>
    %391 = arith.addf %388, %390 : vector<2x128xf32>
    %392 = vector.extract_strided_slice %384 {offsets = [0, 256], sizes = [2, 128], strides = [1, 1]} : vector<2x384xf32> to vector<2x128xf32>
    %393 = math.tanh %391 : vector<2x128xf32>
    %394 = arith.mulf %392, %393 : vector<2x128xf32>
    %cst_83 = arith.constant dense<0.000000e+00> : vector<2x512xf32>
    %395 = tpu.matmul %373, %73, %cst_83 {dimension_numbers = #tpu.dot_dimension_numbers<[1], [0], [0], [1], [0, 0, 1, 1], [], []>} : vector<2x32xf32>, vector<32x512xf32>, vector<2x512xf32> -> vector<2x512xf32>
    %cst_84 = arith.constant dense<0.000000e+00> : vector<2x512xf32>
    %396 = tpu.matmul %394, %74, %cst_84 {dimension_numbers = #tpu.dot_dimension_numbers<[1], [0], [0], [1], [0, 0, 1, 1], [], []>} : vector<2x128xf32>, vector<128x512xf32>, vector<2x512xf32> -> vector<2x512xf32>
    %397 = arith.addf %395, %396 : vector<2x512xf32>
    %398 = vector.broadcast %75 : vector<1x512xf32> to vector<2x512xf32>
    %399 = arith.addf %397, %398 : vector<2x512xf32>
    %400 = vector.extract_strided_slice %399 {offsets = [0, 0], sizes = [2, 384], strides = [1, 1]} : vector<2x512xf32> to vector<2x384xf32>
    %401 = arith.negf %400 : vector<2x384xf32>
    %402 = math.exp %401 : vector<2x384xf32>
    %cst_85 = arith.constant 1.000000e+00 : f32
    %403 = vector.broadcast %cst_85 : f32 to vector<2x384xf32>
    %404 = arith.addf %403, %402 : vector<2x384xf32>
    %405 = arith.divf %403, %404 : vector<2x384xf32>
    %406 = vector.extract_strided_slice %399 {offsets = [0, 384], sizes = [2, 128], strides = [1, 1]} : vector<2x512xf32> to vector<2x128xf32>
    %407 = math.tanh %406 : vector<2x128xf32>
    %408 = vector.extract_strided_slice %405 {offsets = [0, 128], sizes = [2, 128], strides = [1, 1]} : vector<2x384xf32> to vector<2x128xf32>
    %409 = arith.mulf %408, %391 : vector<2x128xf32>
    %410 = vector.extract_strided_slice %405 {offsets = [0, 0], sizes = [2, 128], strides = [1, 1]} : vector<2x384xf32> to vector<2x128xf32>
    %411 = arith.mulf %410, %407 : vector<2x128xf32>
    %412 = arith.addf %409, %411 : vector<2x128xf32>
    %413 = vector.extract_strided_slice %405 {offsets = [0, 256], sizes = [2, 128], strides = [1, 1]} : vector<2x384xf32> to vector<2x128xf32>
    %414 = math.tanh %412 : vector<2x128xf32>
    %415 = arith.mulf %413, %414 : vector<2x128xf32>
    %c16_86 = arith.constant 16 : index
    %c0_87 = arith.constant 0 : index
    %416 = vector.load %arg2[%c16_86, %c0_87] : memref<145x64xf32, #tpu.memory_space<vmem>>, vector<128x64xf32>
    %cst_88 = arith.constant dense<0.000000e+00> : vector<2x64xf32>
    %417 = tpu.matmul %415, %416, %cst_88 {dimension_numbers = #tpu.dot_dimension_numbers<[1], [0], [0], [1], [0, 0, 1, 1], [], []>} : vector<2x128xf32>, vector<128x64xf32>, vector<2x64xf32> -> vector<2x64xf32>
    %c144 = arith.constant 144 : index
    %c0_89 = arith.constant 0 : index
    %418 = vector.load %arg2[%c144, %c0_89] : memref<145x64xf32, #tpu.memory_space<vmem>>, vector<1x64xf32>
    %419 = vector.broadcast %418 : vector<1x64xf32> to vector<2x64xf32>
    %420 = arith.addf %417, %419 : vector<2x64xf32>
    %c0_90 = arith.constant 0 : index
    %c0_91 = arith.constant 0 : index
    %421 = vector.load %arg6[%c0_90, %c0_91] : memref<2x64xf32, #tpu.memory_space<vmem>>, vector<2x64xf32>
    tpu.vector_store %arg6[%c0_90, %c0_91], %420 {strides = array<i32>} : memref<2x64xf32, #tpu.memory_space<vmem>>, vector<2x64xf32>,
    return
  }
}

</mosaic_0001>

<llo_original>
// kernel: tpu_custom_call.1
$region0: #{tpu_custom_call.1}
  #allocation0 [shape = 'u32[]', space=smem, size = 0x4, offset = 0x4, fixed_abs, tag = 'smem constant byte address 0x4 - core index']
  #allocation1 [shape = 'u32[144,128]{1,0:T(1,128)}', space=vmem, size = 0x12000, scoped, tag = 'internal scratch']
  %s0 = inlined_call_operand.vmem [shape: f32[32,8], index: 0, kind: input, shape index: {}]
  %s1 = inlined_call_operand.vmem [shape: f32[385,8], index: 1, kind: input, shape index: {}]
  %s2 = inlined_call_operand.vmem [shape: f32[145,64], index: 2, kind: input, shape index: {}]
  %s3 = inlined_call_operand.hbm [shape: f32[49,128], index: 3, kind: input, shape index: {}]
  %s4 = inlined_call_operand.vmem [shape: f32[40,256], index: 4, kind: input, shape index: {}]
  %s5 = inlined_call_operand.vmem [shape: f32[161,512], index: 5, kind: input, shape index: {}]
  %s6 = inlined_call_operand.hbm [shape: f32[2,64], index: 6, kind: output, shape index: {}]
  %s7 = sld [smem:[#allocation0]]
  $region38: #{tpu_custom_call.1} parent=0
    _
  %s9 = ssub.s32 1, %s7
  %s10 = scalar_select 0, %s9, %s7
  $region1: #{tpu_custom_call.1} parent=0
    #allocation2 [shape = 'u8[28672]{0}', space=vmem, size = 0x7000, scoped, tag = 'input window, operand 3, single buffered']
    #allocation3 [shape = 's32[1]{0}', space=sflag, size = 0x4, scoped, tag = 'scoped memory for tpu_custom_call.1']
    #allocation4 [shape = 's32[1]{0}', space=sflag, size = 0x4, scoped, tag = 'scoped memory for tpu_custom_call.1']
    #allocation5 [shape = 'u8[1024]{0}', space=vmem, size = 0x400, scoped, tag = 'output window, operand 0, single buffered']
    %11 = vsyncpa [#allocation3], 0
    %12 = vsyncpa [#allocation4], 0
    // Predicated region
    $region2: #{tpu_custom_call.1} parent=1 // pred_check
      _
    $region3: #{tpu_custom_call.1} parent=1 // pred_check_branch
      %14 = sbr.rel (0) target = $region5
    $region4: #{tpu_custom_call.1} parent=1 // pred_region
      _
    $region5: #{tpu_custom_call.1} parent=1 // pred_fallthru
      _
    // Predicated region
    $region6: #{tpu_custom_call.1} parent=1 // pred_check
      _
    $region7: #{tpu_custom_call.1} parent=1 // pred_check_branch
      %16 = sbr.rel (0) target = $region9
    $region8: #{tpu_custom_call.1} parent=1 // pred_region
      _
    $region9: #{tpu_custom_call.1} parent=1 // pred_fallthru
      _
    // Predicated region
    $region10: #{tpu_custom_call.1} parent=1 // pred_check
      _
    $region11: #{tpu_custom_call.1} parent=1 // pred_check_branch
      %18 = sbr.rel (0) target = $region13
    $region12: #{tpu_custom_call.1} parent=1 // pred_region
      _
    $region13: #{tpu_custom_call.1} parent=1 // pred_fallthru
      _
    // Predicated region
    $region14: #{tpu_custom_call.1} parent=1 // pred_check
      _
    $region15: #{tpu_custom_call.1} parent=1 // pred_check_branch
      %20 = sbr.rel (0) target = $region17
    $region16: #{tpu_custom_call.1} parent=1 // pred_region
      %s22 = ssub.s32 896, 896
      %23 = vsyncadd [#allocation3], %s22
      %s24 = sshll.u32 [#allocation2], 4
      %s25 = int_to_ptr.vmem [resolvable:$true] %s24
      %30 = dma.hbm_to_vmem [thread:$0]  %s3, 896, %s25, [#allocation3], 128, 128, 8
    $region17: #{tpu_custom_call.1} parent=1 // pred_fallthru
      _
    // Predicated region
    $region18: #{tpu_custom_call.1} parent=1 // pred_check
      _
    $region19: #{tpu_custom_call.1} parent=1 // pred_check_branch
      %32 = sbr.rel (0) target = $region21
    $region20: #{tpu_custom_call.1} parent=1 // pred_region
      _
    $region21: #{tpu_custom_call.1} parent=1 // pred_fallthru
      _
    // Predicated region
    $region22: #{tpu_custom_call.1} parent=1 // pred_check
      _
    $region23: #{tpu_custom_call.1} parent=1 // pred_check_branch
      %34 = sbr.rel (0) target = $region25
    $region24: #{tpu_custom_call.1} parent=1 // pred_region
      _
    $region25: #{tpu_custom_call.1} parent=1 // pred_fallthru
      _
    // Predicated region
    $region26: #{tpu_custom_call.1} parent=1 // pred_check
      _
    $region27: #{tpu_custom_call.1} parent=1 // pred_check_branch
      %36 = sbr.rel (0) target = $region29
    $region28: #{tpu_custom_call.1} parent=1 // pred_region
      %37 = dma.done [#allocation3], 896
    $region29: #{tpu_custom_call.1} parent=1 // pred_fallthru
      _
    %v38 = vld [vmem:[%s0] sm:$0xff]
    %v39 = vld [vmem:[%s0 + $0x8] sm:$0xff]
    %v40 = vld [vmem:[%s0 + $0x10] sm:$0xff]
    %v41 = vld [vmem:[%s0 + $0x18] sm:$0xff]
    %v42 = vld [vmem:[%s4] sm:$0xff]
    %v43 = vld [vmem:[%s4 + $0x8] sm:$0xff]
    %v44 = vld [vmem:[%s2] sm:$0xff]
    %vm45 = vcmask 64512
    %v47 = vsel %vm45, %v38, 0
    %v50 = vsel %vm45, %v39, 0
    %v53 = vsel %vm45, %v40, 0
    %v56 = vsel %vm45, %v41, 0
    %58 = vmatprep.subr.mxu0 0.0
    %59 = vmatpush1.msra.mxu0 %v44
    %60 = vmatprep.subr.mxu0 0.0
    %61 = vmatpush1.msra.mxu0 0.0
    %62 = vmatprep.subr.mxu0 0.0
    %63 = vmatpush1.msra.mxu0 0.0
    %64 = vmatprep.subr.mxu0 0.0
    %65 = vmatpush1.msra.mxu0 0.0
    %66 = vmatprep.subr.mxu0 0.0
    %67 = vmatpush1.msra.mxu0 0.0
    %68 = vmatprep.subr.mxu0 0.0
    %69 = vmatpush1.msra.mxu0 0.0
    %70 = vmatprep.subr.mxu0 0.0
    %71 = vmatpush1.msra.mxu0 0.0
    %72 = vmatprep.subr.mxu0 0.0
    %73 = vmatpush1.msra.mxu0 0.0
    %74 = vmatprep.subr.mxu0 0.0
    %75 = vmatpush1.msra.mxu0 0.0
    %76 = vmatprep.subr.mxu0 0.0
    %77 = vmatpush1.msra.mxu0 0.0
    %78 = vmatprep.subr.mxu0 0.0
    %79 = vmatpush1.msra.mxu0 0.0
    %80 = vmatprep.subr.mxu0 0.0
    %81 = vmatpush1.msra.mxu0 0.0
    %82 = vmatprep.subr.mxu0 0.0
    %83 = vmatpush1.msra.mxu0 0.0
    %84 = vmatprep.subr.mxu0 0.0
    %85 = vmatpush1.msra.mxu0 0.0
    %86 = vmatprep.subr.mxu0 0.0
    %87 = vmatpush1.msra.mxu0 0.0
    %88 = vmatprep.subr.mxu0 0.0
    %89 = vmatpush1.msra.mxu0 0.0
    %90 = vmatprep.subr.mxu0 0.0
    %91 = vmatpush1.msra.mxu0 0.0
    %92 = vmatprep.subr.mxu0 0.0
    %93 = vmatpush1.msra.mxu0 0.0
    %94 = vmatprep.subr.mxu0 0.0
    %95 = vmatpush1.msra.mxu0 0.0
    %96 = vmatprep.subr.mxu0 0.0
    %97 = vmatpush1.msra.mxu0 0.0
    %98 = vmatprep.subr.mxu0 0.0
    %99 = vmatpush1.msra.mxu0 0.0
    %100 = vmatprep.subr.mxu0 0.0
    %101 = vmatpush1.msra.mxu0 0.0
    %102 = vmatprep.subr.mxu0 0.0
    %103 = vmatpush1.msra.mxu0 0.0
    %104 = vmatprep.subr.mxu0 0.0
    %105 = vmatpush1.msra.mxu0 0.0
    %106 = vmatprep.subr.mxu0 0.0
    %107 = vmatpush1.msra.mxu0 0.0
    %108 = vmatprep.subr.mxu0 0.0
    %109 = vmatpush1.msra.mxu0 0.0
    %110 = vmatprep.subr.mxu0 0.0
    %111 = vmatpush1.msra.mxu0 0.0
    %112 = vmatprep.subr.mxu0 0.0
    %113 = vmatpush1.msra.mxu0 0.0
    %114 = vmatprep.subr.mxu0 0.0
    %115 = vmatpush1.msra.mxu0 0.0
    %116 = vmatprep.subr.mxu0 0.0
    %117 = vmatpush1.msra.mxu0 0.0
    %118 = vmatprep.subr.mxu0 0.0
    %119 = vmatpush1.msra.mxu0 0.0
    %120 = vmatprep.subr.mxu0 0.0
    %121 = vmatpush1.msra.mxu0 0.0
    %122 = vmatprep.mubr.f32.mxu0 0.0
    %123 = vmatmul.mubr.f32.gmra.mrb[0].mxu0 %v47
    %v124 = vpop.f32.mrb[0].mxu0
    %v125 = vadd.f32 0.0, %v124
    %v126 = vpop.f32.mrb[0].mxu0
    %127 = vmatprep.mubr.f32.mxu0 0.0
    %128 = vmatmul.mubr.f32.gmra.mrb[0].mxu0 %v50
    %v129 = vpop.f32.mrb[0].mxu0
    %v130 = vadd.f32 0.0, %v129
    %v131 = vpop.f32.mrb[0].mxu0
    %132 = vmatprep.mubr.f32.mxu0 0.0
    %133 = vmatmul.mubr.f32.gmra.mrb[0].mxu0 %v53
    %v134 = vpop.f32.mrb[0].mxu0
    %v135 = vadd.f32 0.0, %v134
    %v136 = vpop.f32.mrb[0].mxu0
    %137 = vmatprep.mubr.f32.mxu0 0.0
    %138 = vmatmul.mubr.f32.gmra.mrb[0].mxu0 %v56
    %v139 = vpop.f32.mrb[0].mxu0
    %v140 = vadd.f32 0.0, %v139
    %v141 = vpop.f32.mrb[0].mxu0
    %142 = vdwg.mxu0
    %v143 = vld [vmem:[%s1] sm:$0xff]
    %v144 = vld [vmem:[%s1 + $0x8] sm:$0xff]
    %v145 = vld [vmem:[%s1 + $0x10] sm:$0xff]
    %v146 = vld [vmem:[%s1 + $0x18] sm:$0xff]
    %v147 = vld [vmem:[%s1 + $0x20] sm:$0xff]
    %v148 = vld [vmem:[%s1 + $0x28] sm:$0xff]
    %v149 = vld [vmem:[%s1 + $0x30] sm:$0xff]
    %v150 = vld [vmem:[%s1 + $0x38] sm:$0xff]
    %vm151 = vcmask 523264
    %v153 = vsel %vm151, %v125, 0
    %v156 = vsel %vm151, %v130, 0
    %v159 = vsel %vm151, %v135, 0
    %v162 = vsel %vm151, %v140, 0
    %164 = vmatprep.subr.mxu0 0.0
    %165 = vmatpush1.msra.mxu0 %v143
    %166 = vmatprep.subr.mxu0 0.0
    %167 = vmatpush1.msra.mxu0 %v144
    %168 = vmatprep.subr.mxu0 0.0
    %169 = vmatpush1.msra.mxu0 %v145
    %170 = vmatprep.subr.mxu0 0.0
    %171 = vmatpush1.msra.mxu0 %v146
    %172 = vmatprep.subr.mxu0 0.0
    %173 = vmatpush1.msra.mxu0 %v147
    %174 = vmatprep.subr.mxu0 0.0
    %175 = vmatpush1.msra.mxu0 %v148
    %176 = vmatprep.subr.mxu0 0.0
    %177 = vmatpush1.msra.mxu0 %v149
    %178 = vmatprep.subr.mxu0 0.0
    %179 = vmatpush1.msra.mxu0 %v150
    %180 = vmatprep.subr.mxu0 0.0
    %181 = vmatpush1.msra.mxu0 0.0
    %182 = vmatprep.subr.mxu0 0.0
    %183 = vmatpush1.msra.mxu0 0.0
    %184 = vmatprep.subr.mxu0 0.0
    %185 = vmatpush1.msra.mxu0 0.0
    %186 = vmatprep.subr.mxu0 0.0
    %187 = vmatpush1.msra.mxu0 0.0
    %188 = vmatprep.subr.mxu0 0.0
    %189 = vmatpush1.msra.mxu0 0.0
    %190 = vmatprep.subr.mxu0 0.0
    %191 = vmatpush1.msra.mxu0 0.0
    %192 = vmatprep.subr.mxu0 0.0
    %193 = vmatpush1.msra.mxu0 0.0
    %194 = vmatprep.subr.mxu0 0.0
    %195 = vmatpush1.msra.mxu0 0.0
    %196 = vmatprep.subr.mxu0 0.0
    %197 = vmatpush1.msra.mxu0 0.0
    %198 = vmatprep.subr.mxu0 0.0
    %199 = vmatpush1.msra.mxu0 0.0
    %200 = vmatprep.subr.mxu0 0.0
    %201 = vmatpush1.msra.mxu0 0.0
    %202 = vmatprep.subr.mxu0 0.0
    %203 = vmatpush1.msra.mxu0 0.0
    %204 = vmatprep.subr.mxu0 0.0
    %205 = vmatpush1.msra.mxu0 0.0
    %206 = vmatprep.subr.mxu0 0.0
    %207 = vmatpush1.msra.mxu0 0.0
    %208 = vmatprep.subr.mxu0 0.0
    %209 = vmatpush1.msra.mxu0 0.0
    %210 = vmatprep.subr.mxu0 0.0
    %211 = vmatpush1.msra.mxu0 0.0
    %212 = vmatprep.subr.mxu0 0.0
    %213 = vmatpush1.msra.mxu0 0.0
    %214 = vmatprep.subr.mxu0 0.0
    %215 = vmatpush1.msra.mxu0 0.0
    %216 = vmatprep.subr.mxu0 0.0
    %217 = vmatpush1.msra.mxu0 0.0
    %218 = vmatprep.subr.mxu0 0.0
    %219 = vmatpush1.msra.mxu0 0.0
    %220 = vmatprep.subr.mxu0 0.0
    %221 = vmatpush1.msra.mxu0 0.0
    %222 = vmatprep.subr.mxu0 0.0
    %223 = vmatpush1.msra.mxu0 0.0
    %224 = vmatprep.subr.mxu0 0.0
    %225 = vmatpush1.msra.mxu0 0.0
    %226 = vmatprep.subr.mxu0 0.0
    %227 = vmatpush1.msra.mxu0 0.0
    %228 = vmatprep.mubr.f32.mxu0 0.0
    %229 = vmatmul.mubr.f32.gmra.mrb[0].mxu0 %v153
    %v230 = vpop.f32.mrb[0].mxu0
    %v231 = vadd.f32 0.0, %v230
    %v232 = vpop.f32.mrb[0].mxu0
    %233 = vmatprep.mubr.f32.mxu0 0.0
    %234 = vmatmul.mubr.f32.gmra.mrb[0].mxu0 %v156
    %v235 = vpop.f32.mrb[0].mxu0
    %v236 = vadd.f32 0.0, %v235
    %v237 = vpop.f32.mrb[0].mxu0
    %238 = vmatprep.mubr.f32.mxu0 0.0
    %239 = vmatmul.mubr.f32.gmra.mrb[0].mxu0 %v159
    %v240 = vpop.f32.mrb[0].mxu0
    %v241 = vadd.f32 0.0, %v240
    %v242 = vpop.f32.mrb[0].mxu0
    %243 = vmatprep.mubr.f32.mxu0 0.0
    %244 = vmatmul.mubr.f32.gmra.mrb[0].mxu0 %v162
    %v245 = vpop.f32.mrb[0].mxu0
    %v246 = vadd.f32 0.0, %v245
    %v247 = vpop.f32.mrb[0].mxu0
    %248 = vdwg.mxu0
    %v249 = vld [vmem:[%s2 + $0x8] sm:$0xff]
    %v251 = vsel %vm151, %v249, 0
    %253 = vmatprep.subr.mxu0 0.0
    %254 = vmatpush1.xpose.msra.mxu0 %v153
    %255 = vmatprep.subr.mxu0 0.0
    %256 = vmatpush1.xpose.msra.mxu0 %v156
    %257 = vmatprep.subr.mxu0 0.0
    %258 = vmatpush1.xpose.msra.mxu0 %v159
    %259 = vmatprep.subr.mxu0 0.0
    %260 = vmatpush1.xpose.msra.mxu0 %v162
    %261 = vmatprep.subr.mxu0 0.0
    %262 = vmatpush1.xpose.msra.mxu0 0.0
    %263 = vmatprep.subr.mxu0 0.0
    %264 = vmatpush1.xpose.msra.mxu0 0.0
    %265 = vmatprep.subr.mxu0 0.0
    %266 = vmatpush1.xpose.msra.mxu0 0.0
    %267 = vmatprep.subr.mxu0 0.0
    %268 = vmatpush1.xpose.msra.mxu0 0.0
    %269 = vmatprep.subr.mxu0 0.0
    %270 = vmatpush1.xpose.msra.mxu0 0.0
    %271 = vmatprep.subr.mxu0 0.0
    %272 = vmatpush1.xpose.msra.mxu0 0.0
    %273 = vmatprep.subr.mxu0 0.0
    %274 = vmatpush1.xpose.msra.mxu0 0.0
    %275 = vmatprep.subr.mxu0 0.0
    %276 = vmatpush1.xpose.msra.mxu0 0.0
    %277 = vmatprep.subr.mxu0 0.0
    %278 = vmatpush1.xpose.msra.mxu0 0.0
    %279 = vmatprep.subr.mxu0 0.0
    %280 = vmatpush1.xpose.msra.mxu0 0.0
    %281 = vmatprep.subr.mxu0 0.0
    %282 = vmatpush1.xpose.msra.mxu0 0.0
    %283 = vmatprep.subr.mxu0 0.0
    %284 = vmatpush1.xpose.msra.mxu0 0.0
    %285 = vmatprep.subr.mxu0 0.0
    %286 = vmatpush1.xpose.msra.mxu0 0.0
    %287 = vmatprep.subr.mxu0 0.0
    %288 = vmatpush1.xpose.msra.mxu0 0.0
    %289 = vmatprep.subr.mxu0 0.0
    %290 = vmatpush1.xpose.msra.mxu0 0.0
    %291 = vmatprep.subr.mxu0 0.0
    %292 = vmatpush1.xpose.msra.mxu0 0.0
    %293 = vmatprep.subr.mxu0 0.0
    %294 = vmatpush1.xpose.msra.mxu0 0.0
    %295 = vmatprep.subr.mxu0 0.0
    %296 = vmatpush1.xpose.msra.mxu0 0.0
    %297 = vmatprep.subr.mxu0 0.0
    %298 = vmatpush1.xpose.msra.mxu0 0.0
    %299 = vmatprep.subr.mxu0 0.0
    %300 = vmatpush1.xpose.msra.mxu0 0.0
    %301 = vmatprep.subr.mxu0 0.0
    %302 = vmatpush1.xpose.msra.mxu0 0.0
    %303 = vmatprep.subr.mxu0 0.0
    %304 = vmatpush1.xpose.msra.mxu0 0.0
    %305 = vmatprep.subr.mxu0 0.0
    %306 = vmatpush1.xpose.msra.mxu0 0.0
    %307 = vmatprep.subr.mxu0 0.0
    %308 = vmatpush1.xpose.msra.mxu0 0.0
    %309 = vmatprep.subr.mxu0 0.0
    %310 = vmatpush1.xpose.msra.mxu0 0.0
    %311 = vmatprep.subr.mxu0 0.0
    %312 = vmatpush1.xpose.msra.mxu0 0.0
    %313 = vmatprep.subr.mxu0 0.0
    %314 = vmatpush1.xpose.msra.mxu0 0.0
    %315 = vmatprep.subr.mxu0 0.0
    %316 = vmatpush1.xpose.msra.mxu0 0.0
    %317 = vmatprep.mubr.f32.mxu0 0.0
    %318 = vmatmul.mubr.f32.gmra.mrb[0].mxu0 %v251
    %v319 = vpop.f32.mrb[0].mxu0
    %v320 = vadd.f32 0.0, %v319
    %v321 = vpop.f32.mrb[0].mxu0
    %322 = vdwg.mxu0
    %v324 = vrot.slane %v320, 1
    %325 = vrot.lane.b32.xlu0 %v324, 32
    %v326 = vpop.permute.xlu0 %325
    %v328 = vrot.slane %v320, 2
    %329 = vrot.lane.b32.xlu0 %v328, 64
    %v330 = vpop.permute.xlu0 %329
    %v332 = vrot.slane %v320, 3
    %333 = vrot.lane.b32.xlu0 %v332, 96
    %v334 = vpop.permute.xlu0 %333
    %v336 = vrot.slane %v320, 4
    %v338 = vrot.slane %v320, 5
    %339 = vrot.lane.b32.xlu0 %v338, 32
    %v340 = vpop.permute.xlu0 %339
    %v342 = vrot.slane %v320, 6
    %343 = vrot.lane.b32.xlu0 %v342, 64
    %v344 = vpop.permute.xlu0 %343
    %v346 = vrot.slane %v320, 7
    %347 = vrot.lane.b32.xlu0 %v346, 96
    %v348 = vpop.permute.xlu0 %347
    %vm350 = vcmask 261120
    %v351 = vsel %vm350, %v320, %v326
    %v352 = vsel %vm151, %v351, %v330
    %vm353 = vcmask 785408
    %v354 = vsel %vm353, %v352, %v334
    %v355 = vsel %vm350, %v336, %v340
    %v356 = vsel %vm151, %v355, %v344
    %v357 = vsel %vm353, %v356, %v348
    %v358 = vlaneseq
    %v359 = vshrl.u32 %v358, 7
    %v360 = vsub.s32 0, %v359
    %v361 = vrot.slane %v354, %v360
    %v362 = vlaneseq
    %v363 = vshrl.u32 %v362, 7
    %v364 = vsub.s32 0, %v363
    %v365 = vrot.slane %v357, %v364
    %v367 = vsel %vm45, %v231, 0
    %v370 = vsel %vm45, %v236, 0
    %v373 = vsel %vm45, %v241, 0
    %v376 = vsel %vm45, %v246, 0
    %378 = vmatprep.subr.mxu0 %v43
    %379 = vmatpush1.msra.mxu0 %v42
    %380 = vmatprep.subr.mxu0 0.0
    %381 = vmatpush1.msra.mxu0 0.0
    %382 = vmatprep.subr.mxu0 0.0
    %383 = vmatpush1.msra.mxu0 0.0
    %384 = vmatprep.subr.mxu0 0.0
    %385 = vmatpush1.msra.mxu0 0.0
    %386 = vmatprep.subr.mxu0 0.0
    %387 = vmatpush1.msra.mxu0 0.0
    %388 = vmatprep.subr.mxu0 0.0
    %389 = vmatpush1.msra.mxu0 0.0
    %390 = vmatprep.subr.mxu0 0.0
    %391 = vmatpush1.msra.mxu0 0.0
    %392 = vmatprep.subr.mxu0 0.0
    %393 = vmatpush1.msra.mxu0 0.0
    %394 = vmatprep.subr.mxu0 0.0
    %395 = vmatpush1.msra.mxu0 0.0
    %396 = vmatprep.subr.mxu0 0.0
    %397 = vmatpush1.msra.mxu0 0.0
    %398 = vmatprep.subr.mxu0 0.0
    %399 = vmatpush1.msra.mxu0 0.0
    %400 = vmatprep.subr.mxu0 0.0
    %401 = vmatpush1.msra.mxu0 0.0
    %402 = vmatprep.subr.mxu0 0.0
    %403 = vmatpush1.msra.mxu0 0.0
    %404 = vmatprep.subr.mxu0 0.0
    %405 = vmatpush1.msra.mxu0 0.0
    %406 = vmatprep.subr.mxu0 0.0
    %407 = vmatpush1.msra.mxu0 0.0
    %408 = vmatprep.subr.mxu0 0.0
    %409 = vmatpush1.msra.mxu0 0.0
    %410 = vmatprep.subr.mxu0 0.0
    %411 = vmatpush1.msra.mxu0 0.0
    %412 = vmatprep.subr.mxu0 0.0
    %413 = vmatpush1.msra.mxu0 0.0
    %414 = vmatprep.subr.mxu0 0.0
    %415 = vmatpush1.msra.mxu0 0.0
    %416 = vmatprep.subr.mxu0 0.0
    %417 = vmatpush1.msra.mxu0 0.0
    %418 = vmatprep.subr.mxu0 0.0
    %419 = vmatpush1.msra.mxu0 0.0
    %420 = vmatprep.subr.mxu0 0.0
    %421 = vmatpush1.msra.mxu0 0.0
    %422 = vmatprep.subr.mxu0 0.0
    %423 = vmatpush1.msra.mxu0 0.0
    %424 = vmatprep.subr.mxu0 0.0
    %425 = vmatpush1.msra.mxu0 0.0
    %426 = vmatprep.subr.mxu0 0.0
    %427 = vmatpush1.msra.mxu0 0.0
    %428 = vmatprep.subr.mxu0 0.0
    %429 = vmatpush1.msra.mxu0 0.0
    %430 = vmatprep.subr.mxu0 0.0
    %431 = vmatpush1.msra.mxu0 0.0
    %432 = vmatprep.subr.mxu0 0.0
    %433 = vmatpush1.msra.mxu0 0.0
    %434 = vmatprep.subr.mxu0 0.0
    %435 = vmatpush1.msra.mxu0 0.0
    %436 = vmatprep.subr.mxu0 0.0
    %437 = vmatpush1.msra.mxu0 0.0
    %438 = vmatprep.subr.mxu0 0.0
    %439 = vmatpush1.msra.mxu0 0.0
    %440 = vmatprep.subr.mxu0 0.0
    %441 = vmatpush1.msra.mxu0 0.0
    %442 = vmatprep.mubr.f32.mxu0 0.0
    %443 = vmatmul.mubr.f32.gmra.mrb[0].mxu0 %v367
    %v444 = vpop.f32.mrb[0].mxu0
    %v445 = vadd.f32 %v361, %v444
    %v446 = vpop.f32.mrb[0].mxu0
    %v447 = vadd.f32 %v365, %v446
    %448 = vmatprep.mubr.f32.mxu0 0.0
    %449 = vmatmul.mubr.f32.gmra.mrb[0].mxu0 %v370
    %v450 = vpop.f32.mrb[0].mxu0
    %v451 = vadd.f32 %v361, %v450
    %v452 = vpop.f32.mrb[0].mxu0
    %v453 = vadd.f32 %v365, %v452
    %454 = vmatprep.mubr.f32.mxu0 0.0
    %455 = vmatmul.mubr.f32.gmra.mrb[0].mxu0 %v373
    %v456 = vpop.f32.mrb[0].mxu0
    %v457 = vadd.f32 %v361, %v456
    %v458 = vpop.f32.mrb[0].mxu0
    %v459 = vadd.f32 %v365, %v458
    %460 = vmatprep.mubr.f32.mxu0 0.0
    %461 = vmatmul.mubr.f32.gmra.mrb[0].mxu0 %v376
    %v462 = vpop.f32.mrb[0].mxu0
    %v463 = vadd.f32 %v361, %v462
    %v464 = vpop.f32.mrb[0].mxu0
    %v465 = vadd.f32 %v365, %v464
    %466 = vdwg.mxu0
    %vm467 = vcmp.gt.f32.partialorder %v445, 0.0
    %vm468 = vcmp.gt.f32.partialorder %v447, 0.0
    %vm469 = vcmp.gt.f32.partialorder %v451, 0.0
    %vm470 = vcmp.gt.f32.partialorder %v453, 0.0
    %vm471 = vcmp.gt.f32.partialorder %v457, 0.0
    %vm472 = vcmp.gt.f32.partialorder %v459, 0.0
    %vm473 = vcmp.gt.f32.partialorder %v463, 0.0
    %vm474 = vcmp.gt.f32.partialorder %v465, 0.0
    %v475 = vmul.f32 %v445, 0.2
    %v476 = vmul.f32 %v447, 0.2
    %v477 = vmul.f32 %v451, 0.2
    %v478 = vmul.f32 %v453, 0.2
    %v479 = vmul.f32 %v457, 0.2
    %v480 = vmul.f32 %v459, 0.2
    %v481 = vmul.f32 %v463, 0.2
    %v482 = vmul.f32 %v465, 0.2
    %v483 = vsel %vm467, %v445, %v475
    %v484 = vsel %vm468, %v447, %v476
    %v485 = vsel %vm469, %v451, %v477
    %v486 = vsel %vm470, %v453, %v478
    %v487 = vsel %vm471, %v457, %v479
    %v488 = vsel %vm472, %v459, %v480
    %v489 = vsel %vm473, %v463, %v481
    %v490 = vsel %vm474, %v465, %v482
    %v491 = vld [vmem:[%s4 + $0x10] sm:$0xff]
    %v492 = vld [vmem:[%s4 + $0x18] sm:$0xff]
    %v493 = vld [vmem:[%s4 + $0x20] sm:$0xff]
    %v494 = vld [vmem:[%s4 + $0x28] sm:$0xff]
    %v495 = vld [vmem:[%s4 + $0x30] sm:$0xff]
    %v496 = vld [vmem:[%s4 + $0x38] sm:$0xff]
    %v497 = vld [vmem:[%s4 + $0x40] sm:$0xff]
    %v498 = vld [vmem:[%s4 + $0x48] sm:$0xff]
    %v499 = vadd.f32 %v483, %v491
    %v500 = vadd.f32 %v484, %v492
    %v501 = vadd.f32 %v485, %v493
    %v502 = vadd.f32 %v486, %v494
    %v503 = vadd.f32 %v487, %v495
    %v504 = vadd.f32 %v488, %v496
    %v505 = vadd.f32 %v489, %v497
    %v506 = vadd.f32 %v490, %v498
    %v507 = vmax.f32 %v499, %v500
    %508 = vmax.xlane.f32.xlu0 %v507
    %v509 = vpop.xlane.xlu0 %508
    %v510 = vmax.f32 %v501, %v502
    %511 = vmax.xlane.f32.xlu0 %v510
    %v512 = vpop.xlane.xlu0 %511
    %v513 = vmax.f32 %v503, %v504
    %514 = vmax.xlane.f32.xlu0 %v513
    %v515 = vpop.xlane.xlu0 %514
    %v516 = vmax.f32 %v505, %v506
    %517 = vmax.xlane.f32.xlu0 %v516
    %v518 = vpop.xlane.xlu0 %517
    %v519 = vsub.f32 %v499, %v509
    %v520 = vsub.f32 %v500, %v509
    %v521 = vsub.f32 %v501, %v512
    %v522 = vsub.f32 %v502, %v512
    %v523 = vsub.f32 %v503, %v515
    %v524 = vsub.f32 %v504, %v515
    %v525 = vsub.f32 %v505, %v518
    %v526 = vsub.f32 %v506, %v518
    %v527 = vmul.f32 %v519, 1.442695
    %v528 = vpow.pop %v527
    %v529 = vmul.f32 %v520, 1.442695
    %v530 = vpow.pop %v529
    %v531 = vmul.f32 %v521, 1.442695
    %v532 = vpow.pop %v531
    %v533 = vmul.f32 %v522, 1.442695
    %v534 = vpow.pop %v533
    %v535 = vmul.f32 %v523, 1.442695
    %v536 = vpow.pop %v535
    %v537 = vmul.f32 %v524, 1.442695
    %v538 = vpow.pop %v537
    %v539 = vmul.f32 %v525, 1.442695
    %v540 = vpow.pop %v539
    %v541 = vmul.f32 %v526, 1.442695
    %v542 = vpow.pop %v541
    %v543 = vld [vmem:[%s1 + $0x40] sm:$0xff]
    %v544 = vld [vmem:[%s1 + $0x48] sm:$0xff]
    %v545 = vld [vmem:[%s1 + $0x50] sm:$0xff]
    %v546 = vld [vmem:[%s1 + $0x58] sm:$0xff]
    %v547 = vld [vmem:[%s1 + $0x60] sm:$0xff]
    %v548 = vld [vmem:[%s1 + $0x68] sm:$0xff]
    %v549 = vld [vmem:[%s1 + $0x70] sm:$0xff]
    %v550 = vld [vmem:[%s1 + $0x78] sm:$0xff]
    %v551 = vld [vmem:[%s1 + $0x80] sm:$0xff]
    %v552 = vld [vmem:[%s1 + $0x88] sm:$0xff]
    %v553 = vld [vmem:[%s1 + $0x90] sm:$0xff]
    %v554 = vld [vmem:[%s1 + $0x98] sm:$0xff]
    %v555 = vld [vmem:[%s1 + $0xa0] sm:$0xff]
    %v556 = vld [vmem:[%s1 + $0xa8] sm:$0xff]
    %v557 = vld [vmem:[%s1 + $0xb0] sm:$0xff]
    %v558 = vld [vmem:[%s1 + $0xb8] sm:$0xff]
    %v559 = vld [vmem:[%s1 + $0xc0] sm:$0xff]
    %v560 = vld [vmem:[%s1 + $0xc8] sm:$0xff]
    %v561 = vld [vmem:[%s1 + $0xd0] sm:$0xff]
    %v562 = vld [vmem:[%s1 + $0xd8] sm:$0xff]
    %v563 = vld [vmem:[%s1 + $0xe0] sm:$0xff]
    %v564 = vld [vmem:[%s1 + $0xe8] sm:$0xff]
    %v565 = vld [vmem:[%s1 + $0xf0] sm:$0xff]
    %v566 = vld [vmem:[%s1 + $0xf8] sm:$0xff]
    %v567 = vld [vmem:[%s1 + $0x100] sm:$0xff]
    %v568 = vld [vmem:[%s1 + $0x108] sm:$0xff]
    %v569 = vld [vmem:[%s1 + $0x110] sm:$0xff]
    %v570 = vld [vmem:[%s1 + $0x118] sm:$0xff]
    %v571 = vld [vmem:[%s1 + $0x120] sm:$0xff]
    %v572 = vld [vmem:[%s1 + $0x128] sm:$0xff]
    %v573 = vld [vmem:[%s1 + $0x130] sm:$0xff]
    %v574 = vld [vmem:[%s1 + $0x138] sm:$0xff]
    %575 = vmatprep.subr.mxu0 0.0
    %576 = vmatpush1.msra.mxu0 %v543
    %577 = vmatprep.subr.mxu0 0.0
    %578 = vmatpush1.msra.mxu0 %v544
    %579 = vmatprep.subr.mxu0 0.0
    %580 = vmatpush1.msra.mxu0 %v545
    %581 = vmatprep.subr.mxu0 0.0
    %582 = vmatpush1.msra.mxu0 %v546
    %583 = vmatprep.subr.mxu0 0.0
    %584 = vmatpush1.msra.mxu0 %v547
    %585 = vmatprep.subr.mxu0 0.0
    %586 = vmatpush1.msra.mxu0 %v548
    %587 = vmatprep.subr.mxu0 0.0
    %588 = vmatpush1.msra.mxu0 %v549
    %589 = vmatprep.subr.mxu0 0.0
    %590 = vmatpush1.msra.mxu0 %v550
    %591 = vmatprep.subr.mxu0 0.0
    %592 = vmatpush1.msra.mxu0 %v551
    %593 = vmatprep.subr.mxu0 0.0
    %594 = vmatpush1.msra.mxu0 %v552
    %595 = vmatprep.subr.mxu0 0.0
    %596 = vmatpush1.msra.mxu0 %v553
    %597 = vmatprep.subr.mxu0 0.0
    %598 = vmatpush1.msra.mxu0 %v554
    %599 = vmatprep.subr.mxu0 0.0
    %600 = vmatpush1.msra.mxu0 %v555
    %601 = vmatprep.subr.mxu0 0.0
    %602 = vmatpush1.msra.mxu0 %v556
    %603 = vmatprep.subr.mxu0 0.0
    %604 = vmatpush1.msra.mxu0 %v557
    %605 = vmatprep.subr.mxu0 0.0
    %606 = vmatpush1.msra.mxu0 %v558
    %607 = vmatprep.subr.mxu0 0.0
    %608 = vmatpush1.msra.mxu0 %v559
    %609 = vmatprep.subr.mxu0 0.0
    %610 = vmatpush1.msra.mxu0 %v560
    %611 = vmatprep.subr.mxu0 0.0
    %612 = vmatpush1.msra.mxu0 %v561
    %613 = vmatprep.subr.mxu0 0.0
    %614 = vmatpush1.msra.mxu0 %v562
    %615 = vmatprep.subr.mxu0 0.0
    %616 = vmatpush1.msra.mxu0 %v563
    %617 = vmatprep.subr.mxu0 0.0
    %618 = vmatpush1.msra.mxu0 %v564
    %619 = vmatprep.subr.mxu0 0.0
    %620 = vmatpush1.msra.mxu0 %v565
    %621 = vmatprep.subr.mxu0 0.0
    %622 = vmatpush1.msra.mxu0 %v566
    %623 = vmatprep.subr.mxu0 0.0
    %624 = vmatpush1.msra.mxu0 %v567
    %625 = vmatprep.subr.mxu0 0.0
    %626 = vmatpush1.msra.mxu0 %v568
    %627 = vmatprep.subr.mxu0 0.0
    %628 = vmatpush1.msra.mxu0 %v569
    %629 = vmatprep.subr.mxu0 0.0
    %630 = vmatpush1.msra.mxu0 %v570
    %631 = vmatprep.subr.mxu0 0.0
    %632 = vmatpush1.msra.mxu0 %v571
    %633 = vmatprep.subr.mxu0 0.0
    %634 = vmatpush1.msra.mxu0 %v572
    %635 = vmatprep.subr.mxu0 0.0
    %636 = vmatpush1.msra.mxu0 %v573
    %637 = vmatprep.subr.mxu0 0.0
    %638 = vmatpush1.msra.mxu0 %v574
    %639 = vmatprep.mubr.f32.mxu0 %v530
    %640 = vmatmul.mubr.f32.gmra.mrb[0].mxu0 %v528
    %v641 = vpop.f32.mrb[0].mxu0
    %v642 = vadd.f32 0.0, %v641
    %v643 = vpop.f32.mrb[0].mxu0
    %644 = vmatprep.mubr.f32.mxu0 %v534
    %645 = vmatmul.mubr.f32.gmra.mrb[0].mxu0 %v532
    %v646 = vpop.f32.mrb[0].mxu0
    %v647 = vadd.f32 0.0, %v646
    %v648 = vpop.f32.mrb[0].mxu0
    %649 = vmatprep.mubr.f32.mxu0 %v538
    %650 = vmatmul.mubr.f32.gmra.mrb[0].mxu0 %v536
    %v651 = vpop.f32.mrb[0].mxu0
    %v652 = vadd.f32 0.0, %v651
    %v653 = vpop.f32.mrb[0].mxu0
    %654 = vmatprep.mubr.f32.mxu0 %v542
    %655 = vmatmul.mubr.f32.gmra.mrb[0].mxu0 %v540
    %v656 = vpop.f32.mrb[0].mxu0
    %v657 = vadd.f32 0.0, %v656
    %v658 = vpop.f32.mrb[0].mxu0
    %659 = vdwg.mxu0
    %v660 = vrcp.pop %v642
    %v661 = vmul.f32 1.0, %v660
    %v662 = vrcp.pop %v647
    %v663 = vmul.f32 1.0, %v662
    %v664 = vrcp.pop %v652
    %v665 = vmul.f32 1.0, %v664
    %v666 = vrcp.pop %v657
    %v667 = vmul.f32 1.0, %v666
    %v669 = vsel %vm45, %v661, 0
    %v672 = vsel %vm45, %v663, 0
    %v675 = vsel %vm45, %v665, 0
    %v678 = vsel %vm45, %v667, 0
    %680 = vmatprep.subr.mxu0 %v43
    %681 = vmatpush1.msra.mxu0 %v42
    %682 = vmatprep.subr.mxu0 0.0
    %683 = vmatpush1.msra.mxu0 0.0
    %684 = vmatprep.subr.mxu0 0.0
    %685 = vmatpush1.msra.mxu0 0.0
    %686 = vmatprep.subr.mxu0 0.0
    %687 = vmatpush1.msra.mxu0 0.0
    %688 = vmatprep.subr.mxu0 0.0
    %689 = vmatpush1.msra.mxu0 0.0
    %690 = vmatprep.subr.mxu0 0.0
    %691 = vmatpush1.msra.mxu0 0.0
    %692 = vmatprep.subr.mxu0 0.0
    %693 = vmatpush1.msra.mxu0 0.0
    %694 = vmatprep.subr.mxu0 0.0
    %695 = vmatpush1.msra.mxu0 0.0
    %696 = vmatprep.subr.mxu0 0.0
    %697 = vmatpush1.msra.mxu0 0.0
    %698 = vmatprep.subr.mxu0 0.0
    %699 = vmatpush1.msra.mxu0 0.0
    %700 = vmatprep.subr.mxu0 0.0
    %701 = vmatpush1.msra.mxu0 0.0
    %702 = vmatprep.subr.mxu0 0.0
    %703 = vmatpush1.msra.mxu0 0.0
    %704 = vmatprep.subr.mxu0 0.0
    %705 = vmatpush1.msra.mxu0 0.0
    %706 = vmatprep.subr.mxu0 0.0
    %707 = vmatpush1.msra.mxu0 0.0
    %708 = vmatprep.subr.mxu0 0.0
    %709 = vmatpush1.msra.mxu0 0.0
    %710 = vmatprep.subr.mxu0 0.0
    %711 = vmatpush1.msra.mxu0 0.0
    %712 = vmatprep.subr.mxu0 0.0
    %713 = vmatpush1.msra.mxu0 0.0
    %714 = vmatprep.subr.mxu0 0.0
    %715 = vmatpush1.msra.mxu0 0.0
    %716 = vmatprep.subr.mxu0 0.0
    %717 = vmatpush1.msra.mxu0 0.0
    %718 = vmatprep.subr.mxu0 0.0
    %719 = vmatpush1.msra.mxu0 0.0
    %720 = vmatprep.subr.mxu0 0.0
    %721 = vmatpush1.msra.mxu0 0.0
    %722 = vmatprep.subr.mxu0 0.0
    %723 = vmatpush1.msra.mxu0 0.0
    %724 = vmatprep.subr.mxu0 0.0
    %725 = vmatpush1.msra.mxu0 0.0
    %726 = vmatprep.subr.mxu0 0.0
    %727 = vmatpush1.msra.mxu0 0.0
    %728 = vmatprep.subr.mxu0 0.0
    %729 = vmatpush1.msra.mxu0 0.0
    %730 = vmatprep.subr.mxu0 0.0
    %731 = vmatpush1.msra.mxu0 0.0
    %732 = vmatprep.subr.mxu0 0.0
    %733 = vmatpush1.msra.mxu0 0.0
    %734 = vmatprep.subr.mxu0 0.0
    %735 = vmatpush1.msra.mxu0 0.0
    %736 = vmatprep.subr.mxu0 0.0
    %737 = vmatpush1.msra.mxu0 0.0
    %738 = vmatprep.subr.mxu0 0.0
    %739 = vmatpush1.msra.mxu0 0.0
    %740 = vmatprep.subr.mxu0 0.0
    %741 = vmatpush1.msra.mxu0 0.0
    %742 = vmatprep.subr.mxu0 0.0
    %743 = vmatpush1.msra.mxu0 0.0
    %744 = vmatprep.mubr.f32.mxu0 0.0
    %745 = vmatmul.mubr.f32.gmra.mrb[0].mxu0 %v669
    %v746 = vpop.f32.mrb[0].mxu0
    %v747 = vadd.f32 0.0, %v746
    %v748 = vpop.f32.mrb[0].mxu0
    %v749 = vadd.f32 0.0, %v748
    %750 = vmatprep.mubr.f32.mxu0 0.0
    %751 = vmatmul.mubr.f32.gmra.mrb[0].mxu0 %v672
    %v752 = vpop.f32.mrb[0].mxu0
    %v753 = vadd.f32 0.0, %v752
    %v754 = vpop.f32.mrb[0].mxu0
    %v755 = vadd.f32 0.0, %v754
    %756 = vmatprep.mubr.f32.mxu0 0.0
    %757 = vmatmul.mubr.f32.gmra.mrb[0].mxu0 %v675
    %v758 = vpop.f32.mrb[0].mxu0
    %v759 = vadd.f32 0.0, %v758
    %v760 = vpop.f32.mrb[0].mxu0
    %v761 = vadd.f32 0.0, %v760
    %762 = vmatprep.mubr.f32.mxu0 0.0
    %763 = vmatmul.mubr.f32.gmra.mrb[0].mxu0 %v678
    %v764 = vpop.f32.mrb[0].mxu0
    %v765 = vadd.f32 0.0, %v764
    %v766 = vpop.f32.mrb[0].mxu0
    %v767 = vadd.f32 0.0, %v766
    %768 = vdwg.mxu0
    %v769 = vmul.f32 %v528, %v747
    %v770 = vmul.f32 %v530, %v749
    %v771 = vmul.f32 %v532, %v753
    %v772 = vmul.f32 %v534, %v755
    %v773 = vmul.f32 %v536, %v759
    %v774 = vmul.f32 %v538, %v761
    %v775 = vmul.f32 %v540, %v765
    %v776 = vmul.f32 %v542, %v767
    %v777 = vld [vmem:[%s1 + $0x140] sm:$0xff]
    %v778 = vld [vmem:[%s1 + $0x148] sm:$0xff]
    %v779 = vld [vmem:[%s1 + $0x150] sm:$0xff]
    %v780 = vld [vmem:[%s1 + $0x158] sm:$0xff]
    %v781 = vld [vmem:[%s1 + $0x160] sm:$0xff]
    %v782 = vld [vmem:[%s1 + $0x168] sm:$0xff]
    %v783 = vld [vmem:[%s1 + $0x170] sm:$0xff]
    %v784 = vld [vmem:[%s1 + $0x178] sm:$0xff]
    %785 = vmatprep.subr.mxu0 0.0
    %786 = vmatpush1.msra.mxu0 %v777
    %787 = vmatprep.subr.mxu0 0.0
    %788 = vmatpush1.msra.mxu0 0.0
    %789 = vmatprep.subr.mxu0 0.0
    %790 = vmatpush1.msra.mxu0 0.0
    %791 = vmatprep.subr.mxu0 0.0
    %792 = vmatpush1.msra.mxu0 0.0
    %793 = vmatprep.subr.mxu0 0.0
    %794 = vmatpush1.msra.mxu0 0.0
    %795 = vmatprep.subr.mxu0 0.0
    %796 = vmatpush1.msra.mxu0 0.0
    %797 = vmatprep.subr.mxu0 0.0
    %798 = vmatpush1.msra.mxu0 0.0
    %799 = vmatprep.subr.mxu0 0.0
    %800 = vmatpush1.msra.mxu0 0.0
    %801 = vmatprep.subr.mxu0 0.0
    %802 = vmatpush1.msra.mxu0 0.0
    %803 = vmatprep.subr.mxu0 0.0
    %804 = vmatpush1.msra.mxu0 0.0
    %805 = vmatprep.subr.mxu0 0.0
    %806 = vmatpush1.msra.mxu0 0.0
    %807 = vmatprep.subr.mxu0 0.0
    %808 = vmatpush1.msra.mxu0 0.0
    %809 = vmatprep.subr.mxu0 0.0
    %810 = vmatpush1.msra.mxu0 0.0
    %811 = vmatprep.subr.mxu0 0.0
    %812 = vmatpush1.msra.mxu0 0.0
    %813 = vmatprep.subr.mxu0 0.0
    %814 = vmatpush1.msra.mxu0 0.0
    %815 = vmatprep.subr.mxu0 0.0
    %816 = vmatpush1.msra.mxu0 0.0
    %817 = vmatprep.subr.mxu0 0.0
    %818 = vmatpush1.msra.mxu0 0.0
    %819 = vmatprep.subr.mxu0 0.0
    %820 = vmatpush1.msra.mxu0 0.0
    %821 = vmatprep.subr.mxu0 0.0
    %822 = vmatpush1.msra.mxu0 0.0
    %823 = vmatprep.subr.mxu0 0.0
    %824 = vmatpush1.msra.mxu0 0.0
    %825 = vmatprep.subr.mxu0 0.0
    %826 = vmatpush1.msra.mxu0 0.0
    %827 = vmatprep.subr.mxu0 0.0
    %828 = vmatpush1.msra.mxu0 0.0
    %829 = vmatprep.subr.mxu0 0.0
    %830 = vmatpush1.msra.mxu0 0.0
    %831 = vmatprep.subr.mxu0 0.0
    %832 = vmatpush1.msra.mxu0 0.0
    %833 = vmatprep.subr.mxu0 0.0
    %834 = vmatpush1.msra.mxu0 0.0
    %835 = vmatprep.subr.mxu0 0.0
    %836 = vmatpush1.msra.mxu0 0.0
    %837 = vmatprep.subr.mxu0 0.0
    %838 = vmatpush1.msra.mxu0 0.0
    %839 = vmatprep.subr.mxu0 0.0
    %840 = vmatpush1.msra.mxu0 0.0
    %841 = vmatprep.subr.mxu0 0.0
    %842 = vmatpush1.msra.mxu0 0.0
    %843 = vmatprep.subr.mxu0 0.0
    %844 = vmatpush1.msra.mxu0 0.0
    %845 = vmatprep.subr.mxu0 0.0
    %846 = vmatpush1.msra.mxu0 0.0
    %847 = vmatprep.subr.mxu0 0.0
    %848 = vmatpush1.msra.mxu0 0.0
    %849 = vmatprep.mubr.f32.mxu0 0.0
    %850 = vmatmul.mubr.f32.gmra.mrb[0].mxu0 %v47
    %v851 = vpop.f32.mrb[0].mxu0
    %v852 = vadd.f32 0.0, %v851
    %v853 = vpop.f32.mrb[0].mxu0
    %854 = vmatprep.mubr.f32.mxu0 0.0
    %855 = vmatmul.mubr.f32.gmra.mrb[0].mxu0 %v50
    %v856 = vpop.f32.mrb[0].mxu0
    %v857 = vadd.f32 0.0, %v856
    %v858 = vpop.f32.mrb[0].mxu0
    %859 = vmatprep.mubr.f32.mxu0 0.0
    %860 = vmatmul.mubr.f32.gmra.mrb[0].mxu0 %v53
    %v861 = vpop.f32.mrb[0].mxu0
    %v862 = vadd.f32 0.0, %v861
    %v863 = vpop.f32.mrb[0].mxu0
    %864 = vmatprep.mubr.f32.mxu0 0.0
    %865 = vmatmul.mubr.f32.gmra.mrb[0].mxu0 %v56
    %v866 = vpop.f32.mrb[0].mxu0
    %v867 = vadd.f32 0.0, %v866
    %v868 = vpop.f32.mrb[0].mxu0
    %869 = vdwg.mxu0
    %870 = vmatprep.subr.mxu0 0.0
    %871 = vmatpush1.msra.mxu0 %v778
    %872 = vmatprep.subr.mxu0 0.0
    %873 = vmatpush1.msra.mxu0 0.0
    %874 = vmatprep.subr.mxu0 0.0
    %875 = vmatpush1.msra.mxu0 0.0
    %876 = vmatprep.subr.mxu0 0.0
    %877 = vmatpush1.msra.mxu0 0.0
    %878 = vmatprep.subr.mxu0 0.0
    %879 = vmatpush1.msra.mxu0 0.0
    %880 = vmatprep.subr.mxu0 0.0
    %881 = vmatpush1.msra.mxu0 0.0
    %882 = vmatprep.subr.mxu0 0.0
    %883 = vmatpush1.msra.mxu0 0.0
    %884 = vmatprep.subr.mxu0 0.0
    %885 = vmatpush1.msra.mxu0 0.0
    %886 = vmatprep.subr.mxu0 0.0
    %887 = vmatpush1.msra.mxu0 0.0
    %888 = vmatprep.subr.mxu0 0.0
    %889 = vmatpush1.msra.mxu0 0.0
    %890 = vmatprep.subr.mxu0 0.0
    %891 = vmatpush1.msra.mxu0 0.0
    %892 = vmatprep.subr.mxu0 0.0
    %893 = vmatpush1.msra.mxu0 0.0
    %894 = vmatprep.subr.mxu0 0.0
    %895 = vmatpush1.msra.mxu0 0.0
    %896 = vmatprep.subr.mxu0 0.0
    %897 = vmatpush1.msra.mxu0 0.0
    %898 = vmatprep.subr.mxu0 0.0
    %899 = vmatpush1.msra.mxu0 0.0
    %900 = vmatprep.subr.mxu0 0.0
    %901 = vmatpush1.msra.mxu0 0.0
    %902 = vmatprep.subr.mxu0 0.0
    %903 = vmatpush1.msra.mxu0 0.0
    %904 = vmatprep.subr.mxu0 0.0
    %905 = vmatpush1.msra.mxu0 0.0
    %906 = vmatprep.subr.mxu0 0.0
    %907 = vmatpush1.msra.mxu0 0.0
    %908 = vmatprep.subr.mxu0 0.0
    %909 = vmatpush1.msra.mxu0 0.0
    %910 = vmatprep.subr.mxu0 0.0
    %911 = vmatpush1.msra.mxu0 0.0
    %912 = vmatprep.subr.mxu0 0.0
    %913 = vmatpush1.msra.mxu0 0.0
    %914 = vmatprep.subr.mxu0 0.0
    %915 = vmatpush1.msra.mxu0 0.0
    %916 = vmatprep.subr.mxu0 0.0
    %917 = vmatpush1.msra.mxu0 0.0
    %918 = vmatprep.subr.mxu0 0.0
    %919 = vmatpush1.msra.mxu0 0.0
    %920 = vmatprep.subr.mxu0 0.0
    %921 = vmatpush1.msra.mxu0 0.0
    %922 = vmatprep.subr.mxu0 0.0
    %923 = vmatpush1.msra.mxu0 0.0
    %924 = vmatprep.subr.mxu0 0.0
    %925 = vmatpush1.msra.mxu0 0.0
    %926 = vmatprep.subr.mxu0 0.0
    %927 = vmatpush1.msra.mxu0 0.0
    %928 = vmatprep.subr.mxu0 0.0
    %929 = vmatpush1.msra.mxu0 0.0
    %930 = vmatprep.subr.mxu0 0.0
    %931 = vmatpush1.msra.mxu0 0.0
    %932 = vmatprep.subr.mxu0 0.0
    %933 = vmatpush1.msra.mxu0 0.0
    %934 = vmatprep.mubr.f32.mxu0 0.0
    %935 = vmatmul.mubr.f32.gmra.mrb[0].mxu0 %v47
    %v936 = vpop.f32.mrb[0].mxu0
    %v937 = vadd.f32 0.0, %v936
    %v938 = vpop.f32.mrb[0].mxu0
    %939 = vmatprep.mubr.f32.mxu0 0.0
    %940 = vmatmul.mubr.f32.gmra.mrb[0].mxu0 %v50
    %v941 = vpop.f32.mrb[0].mxu0
    %v942 = vadd.f32 0.0, %v941
    %v943 = vpop.f32.mrb[0].mxu0
    %944 = vmatprep.mubr.f32.mxu0 0.0
    %945 = vmatmul.mubr.f32.gmra.mrb[0].mxu0 %v53
    %v946 = vpop.f32.mrb[0].mxu0
    %v947 = vadd.f32 0.0, %v946
    %v948 = vpop.f32.mrb[0].mxu0
    %949 = vmatprep.mubr.f32.mxu0 0.0
    %950 = vmatmul.mubr.f32.gmra.mrb[0].mxu0 %v56
    %v951 = vpop.f32.mrb[0].mxu0
    %v952 = vadd.f32 0.0, %v951
    %v953 = vpop.f32.mrb[0].mxu0
    %954 = vdwg.mxu0
    %955 = vmatprep.subr.mxu0 0.0
    %956 = vmatpush1.msra.mxu0 %v779
    %957 = vmatprep.subr.mxu0 0.0
    %958 = vmatpush1.msra.mxu0 0.0
    %959 = vmatprep.subr.mxu0 0.0
    %960 = vmatpush1.msra.mxu0 0.0
    %961 = vmatprep.subr.mxu0 0.0
    %962 = vmatpush1.msra.mxu0 0.0
    %963 = vmatprep.subr.mxu0 0.0
    %964 = vmatpush1.msra.mxu0 0.0
    %965 = vmatprep.subr.mxu0 0.0
    %966 = vmatpush1.msra.mxu0 0.0
    %967 = vmatprep.subr.mxu0 0.0
    %968 = vmatpush1.msra.mxu0 0.0
    %969 = vmatprep.subr.mxu0 0.0
    %970 = vmatpush1.msra.mxu0 0.0
    %971 = vmatprep.subr.mxu0 0.0
    %972 = vmatpush1.msra.mxu0 0.0
    %973 = vmatprep.subr.mxu0 0.0
    %974 = vmatpush1.msra.mxu0 0.0
    %975 = vmatprep.subr.mxu0 0.0
    %976 = vmatpush1.msra.mxu0 0.0
    %977 = vmatprep.subr.mxu0 0.0
    %978 = vmatpush1.msra.mxu0 0.0
    %979 = vmatprep.subr.mxu0 0.0
    %980 = vmatpush1.msra.mxu0 0.0
    %981 = vmatprep.subr.mxu0 0.0
    %982 = vmatpush1.msra.mxu0 0.0
    %983 = vmatprep.subr.mxu0 0.0
    %984 = vmatpush1.msra.mxu0 0.0
    %985 = vmatprep.subr.mxu0 0.0
    %986 = vmatpush1.msra.mxu0 0.0
    %987 = vmatprep.subr.mxu0 0.0
    %988 = vmatpush1.msra.mxu0 0.0
    %989 = vmatprep.subr.mxu0 0.0
    %990 = vmatpush1.msra.mxu0 0.0
    %991 = vmatprep.subr.mxu0 0.0
    %992 = vmatpush1.msra.mxu0 0.0
    %993 = vmatprep.subr.mxu0 0.0
    %994 = vmatpush1.msra.mxu0 0.0
    %995 = vmatprep.subr.mxu0 0.0
    %996 = vmatpush1.msra.mxu0 0.0
    %997 = vmatprep.subr.mxu0 0.0
    %998 = vmatpush1.msra.mxu0 0.0
    %999 = vmatprep.subr.mxu0 0.0
    %1000 = vmatpush1.msra.mxu0 0.0
    %1001 = vmatprep.subr.mxu0 0.0
    %1002 = vmatpush1.msra.mxu0 0.0
    %1003 = vmatprep.subr.mxu0 0.0
    %1004 = vmatpush1.msra.mxu0 0.0
    %1005 = vmatprep.subr.mxu0 0.0
    %1006 = vmatpush1.msra.mxu0 0.0
    %1007 = vmatprep.subr.mxu0 0.0
    %1008 = vmatpush1.msra.mxu0 0.0
    %1009 = vmatprep.subr.mxu0 0.0
    %1010 = vmatpush1.msra.mxu0 0.0
    %1011 = vmatprep.subr.mxu0 0.0
    %1012 = vmatpush1.msra.mxu0 0.0
    %1013 = vmatprep.subr.mxu0 0.0
    %1014 = vmatpush1.msra.mxu0 0.0
    %1015 = vmatprep.subr.mxu0 0.0
    %1016 = vmatpush1.msra.mxu0 0.0
    %1017 = vmatprep.subr.mxu0 0.0
    %1018 = vmatpush1.msra.mxu0 0.0
    %1019 = vmatprep.mubr.f32.mxu0 0.0
    %1020 = vmatmul.mubr.f32.gmra.mrb[0].mxu0 %v47
    %v1021 = vpop.f32.mrb[0].mxu0
    %v1022 = vadd.f32 0.0, %v1021
    %v1023 = vpop.f32.mrb[0].mxu0
    %1024 = vmatprep.mubr.f32.mxu0 0.0
    %1025 = vmatmul.mubr.f32.gmra.mrb[0].mxu0 %v50
    %v1026 = vpop.f32.mrb[0].mxu0
    %v1027 = vadd.f32 0.0, %v1026
    %v1028 = vpop.f32.mrb[0].mxu0
    %1029 = vmatprep.mubr.f32.mxu0 0.0
    %1030 = vmatmul.mubr.f32.gmra.mrb[0].mxu0 %v53
    %v1031 = vpop.f32.mrb[0].mxu0
    %v1032 = vadd.f32 0.0, %v1031
    %v1033 = vpop.f32.mrb[0].mxu0
    %1034 = vmatprep.mubr.f32.mxu0 0.0
    %1035 = vmatmul.mubr.f32.gmra.mrb[0].mxu0 %v56
    %v1036 = vpop.f32.mrb[0].mxu0
    %v1037 = vadd.f32 0.0, %v1036
    %v1038 = vpop.f32.mrb[0].mxu0
    %1039 = vdwg.mxu0
    %1040 = vmatprep.subr.mxu0 0.0
    %1041 = vmatpush1.msra.mxu0 %v780
    %1042 = vmatprep.subr.mxu0 0.0
    %1043 = vmatpush1.msra.mxu0 0.0
    %1044 = vmatprep.subr.mxu0 0.0
    %1045 = vmatpush1.msra.mxu0 0.0
    %1046 = vmatprep.subr.mxu0 0.0
    %1047 = vmatpush1.msra.mxu0 0.0
    %1048 = vmatprep.subr.mxu0 0.0
    %1049 = vmatpush1.msra.mxu0 0.0
    %1050 = vmatprep.subr.mxu0 0.0
    %1051 = vmatpush1.msra.mxu0 0.0
    %1052 = vmatprep.subr.mxu0 0.0
    %1053 = vmatpush1.msra.mxu0 0.0
    %1054 = vmatprep.subr.mxu0 0.0
    %1055 = vmatpush1.msra.mxu0 0.0
    %1056 = vmatprep.subr.mxu0 0.0
    %1057 = vmatpush1.msra.mxu0 0.0
    %1058 = vmatprep.subr.mxu0 0.0
    %1059 = vmatpush1.msra.mxu0 0.0
    %1060 = vmatprep.subr.mxu0 0.0
    %1061 = vmatpush1.msra.mxu0 0.0
    %1062 = vmatprep.subr.mxu0 0.0
    %1063 = vmatpush1.msra.mxu0 0.0
    %1064 = vmatprep.subr.mxu0 0.0
    %1065 = vmatpush1.msra.mxu0 0.0
    %1066 = vmatprep.subr.mxu0 0.0
    %1067 = vmatpush1.msra.mxu0 0.0
    %1068 = vmatprep.subr.mxu0 0.0
    %1069 = vmatpush1.msra.mxu0 0.0
    %1070 = vmatprep.subr.mxu0 0.0
    %1071 = vmatpush1.msra.mxu0 0.0
    %1072 = vmatprep.subr.mxu0 0.0
    %1073 = vmatpush1.msra.mxu0 0.0
    %1074 = vmatprep.subr.mxu0 0.0
    %1075 = vmatpush1.msra.mxu0 0.0
    %1076 = vmatprep.subr.mxu0 0.0
    %1077 = vmatpush1.msra.mxu0 0.0
    %1078 = vmatprep.subr.mxu0 0.0
    %1079 = vmatpush1.msra.mxu0 0.0
    %1080 = vmatprep.subr.mxu0 0.0
    %1081 = vmatpush1.msra.mxu0 0.0
    %1082 = vmatprep.subr.mxu0 0.0
    %1083 = vmatpush1.msra.mxu0 0.0
    %1084 = vmatprep.subr.mxu0 0.0
    %1085 = vmatpush1.msra.mxu0 0.0
    %1086 = vmatprep.subr.mxu0 0.0
    %1087 = vmatpush1.msra.mxu0 0.0
    %1088 = vmatprep.subr.mxu0 0.0
    %1089 = vmatpush1.msra.mxu0 0.0
    %1090 = vmatprep.subr.mxu0 0.0
    %1091 = vmatpush1.msra.mxu0 0.0
    %1092 = vmatprep.subr.mxu0 0.0
    %1093 = vmatpush1.msra.mxu0 0.0
    %1094 = vmatprep.subr.mxu0 0.0
    %1095 = vmatpush1.msra.mxu0 0.0
    %1096 = vmatprep.subr.mxu0 0.0
    %1097 = vmatpush1.msra.mxu0 0.0
    %1098 = vmatprep.subr.mxu0 0.0
    %1099 = vmatpush1.msra.mxu0 0.0
    %1100 = vmatprep.subr.mxu0 0.0
    %1101 = vmatpush1.msra.mxu0 0.0
    %1102 = vmatprep.subr.mxu0 0.0
    %1103 = vmatpush1.msra.mxu0 0.0
    %1104 = vmatprep.mubr.f32.mxu0 0.0
    %1105 = vmatmul.mubr.f32.gmra.mrb[0].mxu0 %v47
    %v1106 = vpop.f32.mrb[0].mxu0
    %v1107 = vadd.f32 0.0, %v1106
    %v1108 = vpop.f32.mrb[0].mxu0
    %1109 = vmatprep.mubr.f32.mxu0 0.0
    %1110 = vmatmul.mubr.f32.gmra.mrb[0].mxu0 %v50
    %v1111 = vpop.f32.mrb[0].mxu0
    %v1112 = vadd.f32 0.0, %v1111
    %v1113 = vpop.f32.mrb[0].mxu0
    %1114 = vmatprep.mubr.f32.mxu0 0.0
    %1115 = vmatmul.mubr.f32.gmra.mrb[0].mxu0 %v53
    %v1116 = vpop.f32.mrb[0].mxu0
    %v1117 = vadd.f32 0.0, %v1116
    %v1118 = vpop.f32.mrb[0].mxu0
    %1119 = vmatprep.mubr.f32.mxu0 0.0
    %1120 = vmatmul.mubr.f32.gmra.mrb[0].mxu0 %v56
    %v1121 = vpop.f32.mrb[0].mxu0
    %v1122 = vadd.f32 0.0, %v1121
    %v1123 = vpop.f32.mrb[0].mxu0
    %1124 = vdwg.mxu0
    %1125 = vmatprep.subr.mxu0 0.0
    %1126 = vmatpush1.msra.mxu0 %v781
    %1127 = vmatprep.subr.mxu0 0.0
    %1128 = vmatpush1.msra.mxu0 0.0
    %1129 = vmatprep.subr.mxu0 0.0
    %1130 = vmatpush1.msra.mxu0 0.0
    %1131 = vmatprep.subr.mxu0 0.0
    %1132 = vmatpush1.msra.mxu0 0.0
    %1133 = vmatprep.subr.mxu0 0.0
    %1134 = vmatpush1.msra.mxu0 0.0
    %1135 = vmatprep.subr.mxu0 0.0
    %1136 = vmatpush1.msra.mxu0 0.0
    %1137 = vmatprep.subr.mxu0 0.0
    %1138 = vmatpush1.msra.mxu0 0.0
    %1139 = vmatprep.subr.mxu0 0.0
    %1140 = vmatpush1.msra.mxu0 0.0
    %1141 = vmatprep.subr.mxu0 0.0
    %1142 = vmatpush1.msra.mxu0 0.0
    %1143 = vmatprep.subr.mxu0 0.0
    %1144 = vmatpush1.msra.mxu0 0.0
    %1145 = vmatprep.subr.mxu0 0.0
    %1146 = vmatpush1.msra.mxu0 0.0
    %1147 = vmatprep.subr.mxu0 0.0
    %1148 = vmatpush1.msra.mxu0 0.0
    %1149 = vmatprep.subr.mxu0 0.0
    %1150 = vmatpush1.msra.mxu0 0.0
    %1151 = vmatprep.subr.mxu0 0.0
    %1152 = vmatpush1.msra.mxu0 0.0
    %1153 = vmatprep.subr.mxu0 0.0
    %1154 = vmatpush1.msra.mxu0 0.0
    %1155 = vmatprep.subr.mxu0 0.0
    %1156 = vmatpush1.msra.mxu0 0.0
    %1157 = vmatprep.subr.mxu0 0.0
    %1158 = vmatpush1.msra.mxu0 0.0
    %1159 = vmatprep.subr.mxu0 0.0
    %1160 = vmatpush1.msra.mxu0 0.0
    %1161 = vmatprep.subr.mxu0 0.0
    %1162 = vmatpush1.msra.mxu0 0.0
    %1163 = vmatprep.subr.mxu0 0.0
    %1164 = vmatpush1.msra.mxu0 0.0
    %1165 = vmatprep.subr.mxu0 0.0
    %1166 = vmatpush1.msra.mxu0 0.0
    %1167 = vmatprep.subr.mxu0 0.0
    %1168 = vmatpush1.msra.mxu0 0.0
    %1169 = vmatprep.subr.mxu0 0.0
    %1170 = vmatpush1.msra.mxu0 0.0
    %1171 = vmatprep.subr.mxu0 0.0
    %1172 = vmatpush1.msra.mxu0 0.0
    %1173 = vmatprep.subr.mxu0 0.0
    %1174 = vmatpush1.msra.mxu0 0.0
    %1175 = vmatprep.subr.mxu0 0.0
    %1176 = vmatpush1.msra.mxu0 0.0
    %1177 = vmatprep.subr.mxu0 0.0
    %1178 = vmatpush1.msra.mxu0 0.0
    %1179 = vmatprep.subr.mxu0 0.0
    %1180 = vmatpush1.msra.mxu0 0.0
    %1181 = vmatprep.subr.mxu0 0.0
    %1182 = vmatpush1.msra.mxu0 0.0
    %1183 = vmatprep.subr.mxu0 0.0
    %1184 = vmatpush1.msra.mxu0 0.0
    %1185 = vmatprep.subr.mxu0 0.0
    %1186 = vmatpush1.msra.mxu0 0.0
    %1187 = vmatprep.subr.mxu0 0.0
    %1188 = vmatpush1.msra.mxu0 0.0
    %1189 = vmatprep.mubr.f32.mxu0 0.0
    %1190 = vmatmul.mubr.f32.gmra.mrb[0].mxu0 %v47
    %v1191 = vpop.f32.mrb[0].mxu0
    %v1192 = vadd.f32 0.0, %v1191
    %v1193 = vpop.f32.mrb[0].mxu0
    %1194 = vmatprep.mubr.f32.mxu0 0.0
    %1195 = vmatmul.mubr.f32.gmra.mrb[0].mxu0 %v50
    %v1196 = vpop.f32.mrb[0].mxu0
    %v1197 = vadd.f32 0.0, %v1196
    %v1198 = vpop.f32.mrb[0].mxu0
    %1199 = vmatprep.mubr.f32.mxu0 0.0
    %1200 = vmatmul.mubr.f32.gmra.mrb[0].mxu0 %v53
    %v1201 = vpop.f32.mrb[0].mxu0
    %v1202 = vadd.f32 0.0, %v1201
    %v1203 = vpop.f32.mrb[0].mxu0
    %1204 = vmatprep.mubr.f32.mxu0 0.0
    %1205 = vmatmul.mubr.f32.gmra.mrb[0].mxu0 %v56
    %v1206 = vpop.f32.mrb[0].mxu0
    %v1207 = vadd.f32 0.0, %v1206
    %v1208 = vpop.f32.mrb[0].mxu0
    %1209 = vdwg.mxu0
    %1210 = vmatprep.subr.mxu0 0.0
    %1211 = vmatpush1.msra.mxu0 %v782
    %1212 = vmatprep.subr.mxu0 0.0
    %1213 = vmatpush1.msra.mxu0 0.0
    %1214 = vmatprep.subr.mxu0 0.0
    %1215 = vmatpush1.msra.mxu0 0.0
    %1216 = vmatprep.subr.mxu0 0.0
    %1217 = vmatpush1.msra.mxu0 0.0
    %1218 = vmatprep.subr.mxu0 0.0
    %1219 = vmatpush1.msra.mxu0 0.0
    %1220 = vmatprep.subr.mxu0 0.0
    %1221 = vmatpush1.msra.mxu0 0.0
    %1222 = vmatprep.subr.mxu0 0.0
    %1223 = vmatpush1.msra.mxu0 0.0
    %1224 = vmatprep.subr.mxu0 0.0
    %1225 = vmatpush1.msra.mxu0 0.0
    %1226 = vmatprep.subr.mxu0 0.0
    %1227 = vmatpush1.msra.mxu0 0.0
    %1228 = vmatprep.subr.mxu0 0.0
    %1229 = vmatpush1.msra.mxu0 0.0
    %1230 = vmatprep.subr.mxu0 0.0
    %1231 = vmatpush1.msra.mxu0 0.0
    %1232 = vmatprep.subr.mxu0 0.0
    %1233 = vmatpush1.msra.mxu0 0.0
    %1234 = vmatprep.subr.mxu0 0.0
    %1235 = vmatpush1.msra.mxu0 0.0
    %1236 = vmatprep.subr.mxu0 0.0
    %1237 = vmatpush1.msra.mxu0 0.0
    %1238 = vmatprep.subr.mxu0 0.0
    %1239 = vmatpush1.msra.mxu0 0.0
    %1240 = vmatprep.subr.mxu0 0.0
    %1241 = vmatpush1.msra.mxu0 0.0
    %1242 = vmatprep.subr.mxu0 0.0
    %1243 = vmatpush1.msra.mxu0 0.0
    %1244 = vmatprep.subr.mxu0 0.0
    %1245 = vmatpush1.msra.mxu0 0.0
    %1246 = vmatprep.subr.mxu0 0.0
    %1247 = vmatpush1.msra.mxu0 0.0
    %1248 = vmatprep.subr.mxu0 0.0
    %1249 = vmatpush1.msra.mxu0 0.0
    %1250 = vmatprep.subr.mxu0 0.0
    %1251 = vmatpush1.msra.mxu0 0.0
    %1252 = vmatprep.subr.mxu0 0.0
    %1253 = vmatpush1.msra.mxu0 0.0
    %1254 = vmatprep.subr.mxu0 0.0
    %1255 = vmatpush1.msra.mxu0 0.0
    %1256 = vmatprep.subr.mxu0 0.0
    %1257 = vmatpush1.msra.mxu0 0.0
    %1258 = vmatprep.subr.mxu0 0.0
    %1259 = vmatpush1.msra.mxu0 0.0
    %1260 = vmatprep.subr.mxu0 0.0
    %1261 = vmatpush1.msra.mxu0 0.0
    %1262 = vmatprep.subr.mxu0 0.0
    %1263 = vmatpush1.msra.mxu0 0.0
    %1264 = vmatprep.subr.mxu0 0.0
    %1265 = vmatpush1.msra.mxu0 0.0
    %1266 = vmatprep.subr.mxu0 0.0
    %1267 = vmatpush1.msra.mxu0 0.0
    %1268 = vmatprep.subr.mxu0 0.0
    %1269 = vmatpush1.msra.mxu0 0.0
    %1270 = vmatprep.subr.mxu0 0.0
    %1271 = vmatpush1.msra.mxu0 0.0
    %1272 = vmatprep.subr.mxu0 0.0
    %1273 = vmatpush1.msra.mxu0 0.0
    %1274 = vmatprep.mubr.f32.mxu0 0.0
    %1275 = vmatmul.mubr.f32.gmra.mrb[0].mxu0 %v47
    %v1276 = vpop.f32.mrb[0].mxu0
    %v1277 = vadd.f32 0.0, %v1276
    %v1278 = vpop.f32.mrb[0].mxu0
    %1279 = vmatprep.mubr.f32.mxu0 0.0
    %1280 = vmatmul.mubr.f32.gmra.mrb[0].mxu0 %v50
    %v1281 = vpop.f32.mrb[0].mxu0
    %v1282 = vadd.f32 0.0, %v1281
    %v1283 = vpop.f32.mrb[0].mxu0
    %1284 = vmatprep.mubr.f32.mxu0 0.0
    %1285 = vmatmul.mubr.f32.gmra.mrb[0].mxu0 %v53
    %v1286 = vpop.f32.mrb[0].mxu0
    %v1287 = vadd.f32 0.0, %v1286
    %v1288 = vpop.f32.mrb[0].mxu0
    %1289 = vmatprep.mubr.f32.mxu0 0.0
    %1290 = vmatmul.mubr.f32.gmra.mrb[0].mxu0 %v56
    %v1291 = vpop.f32.mrb[0].mxu0
    %v1292 = vadd.f32 0.0, %v1291
    %v1293 = vpop.f32.mrb[0].mxu0
    %1294 = vdwg.mxu0
    %1295 = vmatprep.subr.mxu0 0.0
    %1296 = vmatpush1.msra.mxu0 %v783
    %1297 = vmatprep.subr.mxu0 0.0
    %1298 = vmatpush1.msra.mxu0 0.0
    %1299 = vmatprep.subr.mxu0 0.0
    %1300 = vmatpush1.msra.mxu0 0.0
    %1301 = vmatprep.subr.mxu0 0.0
    %1302 = vmatpush1.msra.mxu0 0.0
    %1303 = vmatprep.subr.mxu0 0.0
    %1304 = vmatpush1.msra.mxu0 0.0
    %1305 = vmatprep.subr.mxu0 0.0
    %1306 = vmatpush1.msra.mxu0 0.0
    %1307 = vmatprep.subr.mxu0 0.0
    %1308 = vmatpush1.msra.mxu0 0.0
    %1309 = vmatprep.subr.mxu0 0.0
    %1310 = vmatpush1.msra.mxu0 0.0
    %1311 = vmatprep.subr.mxu0 0.0
    %1312 = vmatpush1.msra.mxu0 0.0
    %1313 = vmatprep.subr.mxu0 0.0
    %1314 = vmatpush1.msra.mxu0 0.0
    %1315 = vmatprep.subr.mxu0 0.0
    %1316 = vmatpush1.msra.mxu0 0.0
    %1317 = vmatprep.subr.mxu0 0.0
    %1318 = vmatpush1.msra.mxu0 0.0
    %1319 = vmatprep.subr.mxu0 0.0
    %1320 = vmatpush1.msra.mxu0 0.0
    %1321 = vmatprep.subr.mxu0 0.0
    %1322 = vmatpush1.msra.mxu0 0.0
    %1323 = vmatprep.subr.mxu0 0.0
    %1324 = vmatpush1.msra.mxu0 0.0
    %1325 = vmatprep.subr.mxu0 0.0
    %1326 = vmatpush1.msra.mxu0 0.0
    %1327 = vmatprep.subr.mxu0 0.0
    %1328 = vmatpush1.msra.mxu0 0.0
    %1329 = vmatprep.subr.mxu0 0.0
    %1330 = vmatpush1.msra.mxu0 0.0
    %1331 = vmatprep.subr.mxu0 0.0
    %1332 = vmatpush1.msra.mxu0 0.0
    %1333 = vmatprep.subr.mxu0 0.0
    %1334 = vmatpush1.msra.mxu0 0.0
    %1335 = vmatprep.subr.mxu0 0.0
    %1336 = vmatpush1.msra.mxu0 0.0
    %1337 = vmatprep.subr.mxu0 0.0
    %1338 = vmatpush1.msra.mxu0 0.0
    %1339 = vmatprep.subr.mxu0 0.0
    %1340 = vmatpush1.msra.mxu0 0.0
    %1341 = vmatprep.subr.mxu0 0.0
    %1342 = vmatpush1.msra.mxu0 0.0
    %1343 = vmatprep.subr.mxu0 0.0
    %1344 = vmatpush1.msra.mxu0 0.0
    %1345 = vmatprep.subr.mxu0 0.0
    %1346 = vmatpush1.msra.mxu0 0.0
    %1347 = vmatprep.subr.mxu0 0.0
    %1348 = vmatpush1.msra.mxu0 0.0
    %1349 = vmatprep.subr.mxu0 0.0
    %1350 = vmatpush1.msra.mxu0 0.0
    %1351 = vmatprep.subr.mxu0 0.0
    %1352 = vmatpush1.msra.mxu0 0.0
    %1353 = vmatprep.subr.mxu0 0.0
    %1354 = vmatpush1.msra.mxu0 0.0
    %1355 = vmatprep.subr.mxu0 0.0
    %1356 = vmatpush1.msra.mxu0 0.0
    %1357 = vmatprep.subr.mxu0 0.0
    %1358 = vmatpush1.msra.mxu0 0.0
    %1359 = vmatprep.mubr.f32.mxu0 0.0
    %1360 = vmatmul.mubr.f32.gmra.mrb[0].mxu0 %v47
    %v1361 = vpop.f32.mrb[0].mxu0
    %v1362 = vadd.f32 0.0, %v1361
    %v1363 = vpop.f32.mrb[0].mxu0
    %1364 = vmatprep.mubr.f32.mxu0 0.0
    %1365 = vmatmul.mubr.f32.gmra.mrb[0].mxu0 %v50
    %v1366 = vpop.f32.mrb[0].mxu0
    %v1367 = vadd.f32 0.0, %v1366
    %v1368 = vpop.f32.mrb[0].mxu0
    %1369 = vmatprep.mubr.f32.mxu0 0.0
    %1370 = vmatmul.mubr.f32.gmra.mrb[0].mxu0 %v53
    %v1371 = vpop.f32.mrb[0].mxu0
    %v1372 = vadd.f32 0.0, %v1371
    %v1373 = vpop.f32.mrb[0].mxu0
    %1374 = vmatprep.mubr.f32.mxu0 0.0
    %1375 = vmatmul.mubr.f32.gmra.mrb[0].mxu0 %v56
    %v1376 = vpop.f32.mrb[0].mxu0
    %v1377 = vadd.f32 0.0, %v1376
    %v1378 = vpop.f32.mrb[0].mxu0
    %1379 = vdwg.mxu0
    %1380 = vmatprep.subr.mxu0 0.0
    %1381 = vmatpush1.msra.mxu0 %v784
    %1382 = vmatprep.subr.mxu0 0.0
    %1383 = vmatpush1.msra.mxu0 0.0
    %1384 = vmatprep.subr.mxu0 0.0
    %1385 = vmatpush1.msra.mxu0 0.0
    %1386 = vmatprep.subr.mxu0 0.0
    %1387 = vmatpush1.msra.mxu0 0.0
    %1388 = vmatprep.subr.mxu0 0.0
    %1389 = vmatpush1.msra.mxu0 0.0
    %1390 = vmatprep.subr.mxu0 0.0
    %1391 = vmatpush1.msra.mxu0 0.0
    %1392 = vmatprep.subr.mxu0 0.0
    %1393 = vmatpush1.msra.mxu0 0.0
    %1394 = vmatprep.subr.mxu0 0.0
    %1395 = vmatpush1.msra.mxu0 0.0
    %1396 = vmatprep.subr.mxu0 0.0
    %1397 = vmatpush1.msra.mxu0 0.0
    %1398 = vmatprep.subr.mxu0 0.0
    %1399 = vmatpush1.msra.mxu0 0.0
    %1400 = vmatprep.subr.mxu0 0.0
    %1401 = vmatpush1.msra.mxu0 0.0
    %1402 = vmatprep.subr.mxu0 0.0
    %1403 = vmatpush1.msra.mxu0 0.0
    %1404 = vmatprep.subr.mxu0 0.0
    %1405 = vmatpush1.msra.mxu0 0.0
    %1406 = vmatprep.subr.mxu0 0.0
    %1407 = vmatpush1.msra.mxu0 0.0
    %1408 = vmatprep.subr.mxu0 0.0
    %1409 = vmatpush1.msra.mxu0 0.0
    %1410 = vmatprep.subr.mxu0 0.0
    %1411 = vmatpush1.msra.mxu0 0.0
    %1412 = vmatprep.subr.mxu0 0.0
    %1413 = vmatpush1.msra.mxu0 0.0
    %1414 = vmatprep.subr.mxu0 0.0
    %1415 = vmatpush1.msra.mxu0 0.0
    %1416 = vmatprep.subr.mxu0 0.0
    %1417 = vmatpush1.msra.mxu0 0.0
    %1418 = vmatprep.subr.mxu0 0.0
    %1419 = vmatpush1.msra.mxu0 0.0
    %1420 = vmatprep.subr.mxu0 0.0
    %1421 = vmatpush1.msra.mxu0 0.0
    %1422 = vmatprep.subr.mxu0 0.0
    %1423 = vmatpush1.msra.mxu0 0.0
    %1424 = vmatprep.subr.mxu0 0.0
    %1425 = vmatpush1.msra.mxu0 0.0
    %1426 = vmatprep.subr.mxu0 0.0
    %1427 = vmatpush1.msra.mxu0 0.0
    %1428 = vmatprep.subr.mxu0 0.0
    %1429 = vmatpush1.msra.mxu0 0.0
    %1430 = vmatprep.subr.mxu0 0.0
    %1431 = vmatpush1.msra.mxu0 0.0
    %1432 = vmatprep.subr.mxu0 0.0
    %1433 = vmatpush1.msra.mxu0 0.0
    %1434 = vmatprep.subr.mxu0 0.0
    %1435 = vmatpush1.msra.mxu0 0.0
    %1436 = vmatprep.subr.mxu0 0.0
    %1437 = vmatpush1.msra.mxu0 0.0
    %1438 = vmatprep.subr.mxu0 0.0
    %1439 = vmatpush1.msra.mxu0 0.0
    %1440 = vmatprep.subr.mxu0 0.0
    %1441 = vmatpush1.msra.mxu0 0.0
    %1442 = vmatprep.subr.mxu0 0.0
    %1443 = vmatpush1.msra.mxu0 0.0
    %1444 = vmatprep.mubr.f32.mxu0 0.0
    %1445 = vmatmul.mubr.f32.gmra.mrb[0].mxu0 %v47
    %v1446 = vpop.f32.mrb[0].mxu0
    %v1447 = vadd.f32 0.0, %v1446
    %v1448 = vpop.f32.mrb[0].mxu0
    %1449 = vmatprep.mubr.f32.mxu0 0.0
    %1450 = vmatmul.mubr.f32.gmra.mrb[0].mxu0 %v50
    %v1451 = vpop.f32.mrb[0].mxu0
    %v1452 = vadd.f32 0.0, %v1451
    %v1453 = vpop.f32.mrb[0].mxu0
    %1454 = vmatprep.mubr.f32.mxu0 0.0
    %1455 = vmatmul.mubr.f32.gmra.mrb[0].mxu0 %v53
    %v1456 = vpop.f32.mrb[0].mxu0
    %v1457 = vadd.f32 0.0, %v1456
    %v1458 = vpop.f32.mrb[0].mxu0
    %1459 = vmatprep.mubr.f32.mxu0 0.0
    %1460 = vmatmul.mubr.f32.gmra.mrb[0].mxu0 %v56
    %v1461 = vpop.f32.mrb[0].mxu0
    %v1462 = vadd.f32 0.0, %v1461
    %v1463 = vpop.f32.mrb[0].mxu0
    %1464 = vdwg.mxu0
    %1465 = vmatprep.subr.mxu0 0.0
    %1466 = vmatpush1.msra.mxu0 %v852
    %1467 = vmatprep.subr.mxu0 0.0
    %1468 = vmatpush1.msra.mxu0 %v857
    %1469 = vmatprep.subr.mxu0 0.0
    %1470 = vmatpush1.msra.mxu0 %v862
    %1471 = vmatprep.subr.mxu0 0.0
    %1472 = vmatpush1.msra.mxu0 %v867
    %1473 = vmatprep.subr.mxu0 0.0
    %1474 = vmatpush1.msra.mxu0 %v937
    %1475 = vmatprep.subr.mxu0 0.0
    %1476 = vmatpush1.msra.mxu0 %v942
    %1477 = vmatprep.subr.mxu0 0.0
    %1478 = vmatpush1.msra.mxu0 %v947
    %1479 = vmatprep.subr.mxu0 0.0
    %1480 = vmatpush1.msra.mxu0 %v952
    %1481 = vmatprep.subr.mxu0 0.0
    %1482 = vmatpush1.msra.mxu0 %v1022
    %1483 = vmatprep.subr.mxu0 0.0
    %1484 = vmatpush1.msra.mxu0 %v1027
    %1485 = vmatprep.subr.mxu0 0.0
    %1486 = vmatpush1.msra.mxu0 %v1032
    %1487 = vmatprep.subr.mxu0 0.0
    %1488 = vmatpush1.msra.mxu0 %v1037
    %1489 = vmatprep.subr.mxu0 0.0
    %1490 = vmatpush1.msra.mxu0 %v1107
    %1491 = vmatprep.subr.mxu0 0.0
    %1492 = vmatpush1.msra.mxu0 %v1112
    %1493 = vmatprep.subr.mxu0 0.0
    %1494 = vmatpush1.msra.mxu0 %v1117
    %1495 = vmatprep.subr.mxu0 0.0
    %1496 = vmatpush1.msra.mxu0 %v1122
    %1497 = vmatprep.subr.mxu0 0.0
    %1498 = vmatpush1.msra.mxu0 %v1192
    %1499 = vmatprep.subr.mxu0 0.0
    %1500 = vmatpush1.msra.mxu0 %v1197
    %1501 = vmatprep.subr.mxu0 0.0
    %1502 = vmatpush1.msra.mxu0 %v1202
    %1503 = vmatprep.subr.mxu0 0.0
    %1504 = vmatpush1.msra.mxu0 %v1207
    %1505 = vmatprep.subr.mxu0 0.0
    %1506 = vmatpush1.msra.mxu0 %v1277
    %1507 = vmatprep.subr.mxu0 0.0
    %1508 = vmatpush1.msra.mxu0 %v1282
    %1509 = vmatprep.subr.mxu0 0.0
    %1510 = vmatpush1.msra.mxu0 %v1287
    %1511 = vmatprep.subr.mxu0 0.0
    %1512 = vmatpush1.msra.mxu0 %v1292
    %1513 = vmatprep.subr.mxu0 0.0
    %1514 = vmatpush1.msra.mxu0 %v1362
    %1515 = vmatprep.subr.mxu0 0.0
    %1516 = vmatpush1.msra.mxu0 %v1367
    %1517 = vmatprep.subr.mxu0 0.0
    %1518 = vmatpush1.msra.mxu0 %v1372
    %1519 = vmatprep.subr.mxu0 0.0
    %1520 = vmatpush1.msra.mxu0 %v1377
    %1521 = vmatprep.subr.mxu0 0.0
    %1522 = vmatpush1.msra.mxu0 %v1447
    %1523 = vmatprep.subr.mxu0 0.0
    %1524 = vmatpush1.msra.mxu0 %v1452
    %1525 = vmatprep.subr.mxu0 0.0
    %1526 = vmatpush1.msra.mxu0 %v1457
    %1527 = vmatprep.subr.mxu0 0.0
    %1528 = vmatpush1.msra.mxu0 %v1462
    %1529 = vmatprep.mubr.f32.mxu0 %v770
    %1530 = vmatmul.mubr.f32.gmra.mrb[0].mxu0 %v769
    %v1531 = vpop.f32.mrb[0].mxu0
    %v1532 = vadd.f32 0.0, %v1531
    %v1533 = vpop.f32.mrb[0].mxu0
    %1534 = vmatprep.mubr.f32.mxu0 %v772
    %1535 = vmatmul.mubr.f32.gmra.mrb[0].mxu0 %v771
    %v1536 = vpop.f32.mrb[0].mxu0
    %v1537 = vadd.f32 0.0, %v1536
    %v1538 = vpop.f32.mrb[0].mxu0
    %1539 = vmatprep.mubr.f32.mxu0 %v774
    %1540 = vmatmul.mubr.f32.gmra.mrb[0].mxu0 %v773
    %v1541 = vpop.f32.mrb[0].mxu0
    %v1542 = vadd.f32 0.0, %v1541
    %v1543 = vpop.f32.mrb[0].mxu0
    %1544 = vmatprep.mubr.f32.mxu0 %v776
    %1545 = vmatmul.mubr.f32.gmra.mrb[0].mxu0 %v775
    %v1546 = vpop.f32.mrb[0].mxu0
    %v1547 = vadd.f32 0.0, %v1546
    %v1548 = vpop.f32.mrb[0].mxu0
    %1549 = vdwg.mxu0
    %v1550 = vmul.f32 %v1532, 0.125
    %v1551 = vmul.f32 %v1537, 0.125
    %v1552 = vmul.f32 %v1542, 0.125
    %v1553 = vmul.f32 %v1547, 0.125
    %v1554 = vld [vmem:[%s1 + $0x180] sm:$0x1]
    %v1555 = vlaneseq
    %v1556 = vshrl.u32 %v1555, 7
    %v1557 = vsub.s32 0, %v1556
    %v1558 = vrot.slane %v1554, %v1557
    %v1559 = vadd.f32 %v1550, %v1558
    %v1560 = vadd.f32 %v1551, %v1558
    %v1561 = vadd.f32 %v1552, %v1558
    %v1562 = vadd.f32 %v1553, %v1558
    %v1563 = vld [vmem:[#allocation2] sm:$0xff]
    %v1564 = vld [vmem:[#allocation2 + $0x8] sm:$0xff]
    %v1565 = vld [vmem:[#allocation2 + $0x30] sm:$0x1]
    %v1566 = vlaneseq
    %v1567 = vshrl.u32 %v1566, 7
    %v1568 = vsub.s32 0, %v1567
    %v1569 = vrot.slane %v1565, %v1568
    %1570 = vxpose.xlu0.b32.start [1/16] %v1559, 128
    %1571 = vxpose.xlu0.b32.cont [2/16] %v1560, 128
    %1572 = vxpose.xlu0.b32.cont [3/16] 0.0, 128
    %1573 = vxpose.xlu0.b32.cont [4/16] 0.0, 128
    %1574 = vxpose.xlu0.b32.cont [5/16] 0.0, 128
    %1575 = vxpose.xlu0.b32.cont [6/16] 0.0, 128
    %1576 = vxpose.xlu0.b32.cont [7/16] 0.0, 128
    %1577 = vxpose.xlu0.b32.cont [8/16] 0.0, 128
    %1578 = vxpose.xlu0.b32.cont [9/16] 0.0, 128
    %1579 = vxpose.xlu0.b32.cont [10/16] 0.0, 128
    %1580 = vxpose.xlu0.b32.cont [11/16] 0.0, 128
    %1581 = vxpose.xlu0.b32.cont [12/16] 0.0, 128
    %1582 = vxpose.xlu0.b32.cont [13/16] 0.0, 128
    %1583 = vxpose.xlu0.b32.cont [14/16] 0.0, 128
    %1584 = vxpose.xlu0.b32.cont [15/16] 0.0, 128
    %1585 = vxpose.xlu0.b32.end [16/16] 0.0, 128
    %v1586 = vpop.trf.xlu0
    %v1587 = vpop.trf.xlu0
    %v1588 = vpop.trf.xlu0
    %v1589 = vpop.trf.xlu0
    %v1590 = vpop.trf.xlu0
    %v1591 = vpop.trf.xlu0
    %v1592 = vpop.trf.xlu0
    %v1593 = vpop.trf.xlu0
    %v1594 = vpop.trf.xlu0
    %v1595 = vpop.trf.xlu0
    %v1596 = vpop.trf.xlu0
    %v1597 = vpop.trf.xlu0
    %v1598 = vpop.trf.xlu0
    %v1599 = vpop.trf.xlu0
    %v1600 = vpop.trf.xlu0
    %v1601 = vpop.trf.xlu0
    %vm1602 = vcmask 130048
    %v1604 = vsel %vm1602, %v1586, 0
    %1606 = vmatprep.subr.mxu0 0.0
    %1607 = vmatpush1.msra.mxu0 %v1563
    %1608 = vmatprep.subr.mxu0 0.0
    %1609 = vmatpush1.msra.mxu0 %v1564
    %1610 = vmatprep.subr.mxu0 0.0
    %1611 = vmatpush1.msra.mxu0 0.0
    %1612 = vmatprep.subr.mxu0 0.0
    %1613 = vmatpush1.msra.mxu0 0.0
    %1614 = vmatprep.subr.mxu0 0.0
    %1615 = vmatpush1.msra.mxu0 0.0
    %1616 = vmatprep.subr.mxu0 0.0
    %1617 = vmatpush1.msra.mxu0 0.0
    %1618 = vmatprep.subr.mxu0 0.0
    %1619 = vmatpush1.msra.mxu0 0.0
    %1620 = vmatprep.subr.mxu0 0.0
    %1621 = vmatpush1.msra.mxu0 0.0
    %1622 = vmatprep.subr.mxu0 0.0
    %1623 = vmatpush1.msra.mxu0 0.0
    %1624 = vmatprep.subr.mxu0 0.0
    %1625 = vmatpush1.msra.mxu0 0.0
    %1626 = vmatprep.subr.mxu0 0.0
    %1627 = vmatpush1.msra.mxu0 0.0
    %1628 = vmatprep.subr.mxu0 0.0
    %1629 = vmatpush1.msra.mxu0 0.0
    %1630 = vmatprep.subr.mxu0 0.0
    %1631 = vmatpush1.msra.mxu0 0.0
    %1632 = vmatprep.subr.mxu0 0.0
    %1633 = vmatpush1.msra.mxu0 0.0
    %1634 = vmatprep.subr.mxu0 0.0
    %1635 = vmatpush1.msra.mxu0 0.0
    %1636 = vmatprep.subr.mxu0 0.0
    %1637 = vmatpush1.msra.mxu0 0.0
    %1638 = vmatprep.subr.mxu0 0.0
    %1639 = vmatpush1.msra.mxu0 0.0
    %1640 = vmatprep.subr.mxu0 0.0
    %1641 = vmatpush1.msra.mxu0 0.0
    %1642 = vmatprep.subr.mxu0 0.0
    %1643 = vmatpush1.msra.mxu0 0.0
    %1644 = vmatprep.subr.mxu0 0.0
    %1645 = vmatpush1.msra.mxu0 0.0
    %1646 = vmatprep.subr.mxu0 0.0
    %1647 = vmatpush1.msra.mxu0 0.0
    %1648 = vmatprep.subr.mxu0 0.0
    %1649 = vmatpush1.msra.mxu0 0.0
    %1650 = vmatprep.subr.mxu0 0.0
    %1651 = vmatpush1.msra.mxu0 0.0
    %1652 = vmatprep.subr.mxu0 0.0
    %1653 = vmatpush1.msra.mxu0 0.0
    %1654 = vmatprep.subr.mxu0 0.0
    %1655 = vmatpush1.msra.mxu0 0.0
    %1656 = vmatprep.subr.mxu0 0.0
    %1657 = vmatpush1.msra.mxu0 0.0
    %1658 = vmatprep.subr.mxu0 0.0
    %1659 = vmatpush1.msra.mxu0 0.0
    %1660 = vmatprep.subr.mxu0 0.0
    %1661 = vmatpush1.msra.mxu0 0.0
    %1662 = vmatprep.subr.mxu0 0.0
    %1663 = vmatpush1.msra.mxu0 0.0
    %1664 = vmatprep.subr.mxu0 0.0
    %1665 = vmatpush1.msra.mxu0 0.0
    %1666 = vmatprep.subr.mxu0 0.0
    %1667 = vmatpush1.msra.mxu0 0.0
    %1668 = vmatprep.subr.mxu0 0.0
    %1669 = vmatpush1.msra.mxu0 0.0
    %1670 = vmatprep.mubr.f32.mxu0 0.0
    %1671 = vmatmul.mubr.f32.gmra.mrb[0].mxu0 %v1604
    %v1672 = vpop.f32.mrb[0].mxu0
    %v1673 = vadd.f32 %v1569, %v1672
    %v1674 = vpop.f32.mrb[0].mxu0
    %1675 = vdwg.mxu0
    %1676 = vxpose.xlu0.b32.start [1/16] %v1561, 128
    %1677 = vxpose.xlu0.b32.cont [2/16] %v1562, 128
    %1678 = vxpose.xlu0.b32.cont [3/16] 0.0, 128
    %1679 = vxpose.xlu0.b32.cont [4/16] 0.0, 128
    %1680 = vxpose.xlu0.b32.cont [5/16] 0.0, 128
    %1681 = vxpose.xlu0.b32.cont [6/16] 0.0, 128
    %1682 = vxpose.xlu0.b32.cont [7/16] 0.0, 128
    %1683 = vxpose.xlu0.b32.cont [8/16] 0.0, 128
    %1684 = vxpose.xlu0.b32.cont [9/16] 0.0, 128
    %1685 = vxpose.xlu0.b32.cont [10/16] 0.0, 128
    %1686 = vxpose.xlu0.b32.cont [11/16] 0.0, 128
    %1687 = vxpose.xlu0.b32.cont [12/16] 0.0, 128
    %1688 = vxpose.xlu0.b32.cont [13/16] 0.0, 128
    %1689 = vxpose.xlu0.b32.cont [14/16] 0.0, 128
    %1690 = vxpose.xlu0.b32.cont [15/16] 0.0, 128
    %1691 = vxpose.xlu0.b32.end [16/16] 0.0, 128
    %v1692 = vpop.trf.xlu0
    %v1693 = vpop.trf.xlu0
    %v1694 = vpop.trf.xlu0
    %v1695 = vpop.trf.xlu0
    %v1696 = vpop.trf.xlu0
    %v1697 = vpop.trf.xlu0
    %v1698 = vpop.trf.xlu0
    %v1699 = vpop.trf.xlu0
    %v1700 = vpop.trf.xlu0
    %v1701 = vpop.trf.xlu0
    %v1702 = vpop.trf.xlu0
    %v1703 = vpop.trf.xlu0
    %v1704 = vpop.trf.xlu0
    %v1705 = vpop.trf.xlu0
    %v1706 = vpop.trf.xlu0
    %v1707 = vpop.trf.xlu0
    %v1709 = vsel %vm1602, %v1692, 0
    %1711 = vmatprep.subr.mxu0 0.0
    %1712 = vmatpush1.msra.mxu0 %v1563
    %1713 = vmatprep.subr.mxu0 0.0
    %1714 = vmatpush1.msra.mxu0 %v1564
    %1715 = vmatprep.subr.mxu0 0.0
    %1716 = vmatpush1.msra.mxu0 0.0
    %1717 = vmatprep.subr.mxu0 0.0
    %1718 = vmatpush1.msra.mxu0 0.0
    %1719 = vmatprep.subr.mxu0 0.0
    %1720 = vmatpush1.msra.mxu0 0.0
    %1721 = vmatprep.subr.mxu0 0.0
    %1722 = vmatpush1.msra.mxu0 0.0
    %1723 = vmatprep.subr.mxu0 0.0
    %1724 = vmatpush1.msra.mxu0 0.0
    %1725 = vmatprep.subr.mxu0 0.0
    %1726 = vmatpush1.msra.mxu0 0.0
    %1727 = vmatprep.subr.mxu0 0.0
    %1728 = vmatpush1.msra.mxu0 0.0
    %1729 = vmatprep.subr.mxu0 0.0
    %1730 = vmatpush1.msra.mxu0 0.0
    %1731 = vmatprep.subr.mxu0 0.0
    %1732 = vmatpush1.msra.mxu0 0.0
    %1733 = vmatprep.subr.mxu0 0.0
    %1734 = vmatpush1.msra.mxu0 0.0
    %1735 = vmatprep.subr.mxu0 0.0
    %1736 = vmatpush1.msra.mxu0 0.0
    %1737 = vmatprep.subr.mxu0 0.0
    %1738 = vmatpush1.msra.mxu0 0.0
    %1739 = vmatprep.subr.mxu0 0.0
    %1740 = vmatpush1.msra.mxu0 0.0
    %1741 = vmatprep.subr.mxu0 0.0
    %1742 = vmatpush1.msra.mxu0 0.0
    %1743 = vmatprep.subr.mxu0 0.0
    %1744 = vmatpush1.msra.mxu0 0.0
    %1745 = vmatprep.subr.mxu0 0.0
    %1746 = vmatpush1.msra.mxu0 0.0
    %1747 = vmatprep.subr.mxu0 0.0
    %1748 = vmatpush1.msra.mxu0 0.0
    %1749 = vmatprep.subr.mxu0 0.0
    %1750 = vmatpush1.msra.mxu0 0.0
    %1751 = vmatprep.subr.mxu0 0.0
    %1752 = vmatpush1.msra.mxu0 0.0
    %1753 = vmatprep.subr.mxu0 0.0
    %1754 = vmatpush1.msra.mxu0 0.0
    %1755 = vmatprep.subr.mxu0 0.0
    %1756 = vmatpush1.msra.mxu0 0.0
    %1757 = vmatprep.subr.mxu0 0.0
    %1758 = vmatpush1.msra.mxu0 0.0
    %1759 = vmatprep.subr.mxu0 0.0
    %1760 = vmatpush1.msra.mxu0 0.0
    %1761 = vmatprep.subr.mxu0 0.0
    %1762 = vmatpush1.msra.mxu0 0.0
    %1763 = vmatprep.subr.mxu0 0.0
    %1764 = vmatpush1.msra.mxu0 0.0
    %1765 = vmatprep.subr.mxu0 0.0
    %1766 = vmatpush1.msra.mxu0 0.0
    %1767 = vmatprep.subr.mxu0 0.0
    %1768 = vmatpush1.msra.mxu0 0.0
    %1769 = vmatprep.subr.mxu0 0.0
    %1770 = vmatpush1.msra.mxu0 0.0
    %1771 = vmatprep.subr.mxu0 0.0
    %1772 = vmatpush1.msra.mxu0 0.0
    %1773 = vmatprep.subr.mxu0 0.0
    %1774 = vmatpush1.msra.mxu0 0.0
    %1775 = vmatprep.mubr.f32.mxu0 0.0
    %1776 = vmatmul.mubr.f32.gmra.mrb[0].mxu0 %v1709
    %v1777 = vpop.f32.mrb[0].mxu0
    %v1778 = vadd.f32 %v1569, %v1777
    %v1779 = vpop.f32.mrb[0].mxu0
    %1780 = vdwg.mxu0
    %v1781 = vld [vmem:[#allocation2 + $0x10] sm:$0xff]
    %v1782 = vld [vmem:[#allocation2 + $0x18] sm:$0xff]
    %v1783 = vld [vmem:[#allocation2 + $0x20] sm:$0xff]
    %v1784 = vld [vmem:[#allocation2 + $0x28] sm:$0xff]
    %v1785 = vld [vmem:[%s5] sm:$0xff]
    %v1786 = vld [vmem:[%s5 + $0x8] sm:$0xff]
    %v1787 = vld [vmem:[%s5 + $0x10] sm:$0xff]
    %v1788 = vld [vmem:[%s5 + $0x18] sm:$0xff]
    %v1789 = vld [vmem:[%s5 + $0x20] sm:$0xff]
    %v1790 = vld [vmem:[%s5 + $0x28] sm:$0xff]
    %v1791 = vld [vmem:[%s5 + $0x30] sm:$0xff]
    %v1792 = vld [vmem:[%s5 + $0x38] sm:$0xff]
    %v1793 = vld [vmem:[%s5 + $0x40] sm:$0xff]
    %v1794 = vld [vmem:[%s5 + $0x48] sm:$0xff]
    %v1795 = vld [vmem:[%s5 + $0x50] sm:$0xff]
    %v1796 = vld [vmem:[%s5 + $0x58] sm:$0xff]
    %v1797 = vld [vmem:[%s5 + $0x60] sm:$0xff]
    %v1798 = vld [vmem:[%s5 + $0x68] sm:$0xff]
    %v1799 = vld [vmem:[%s5 + $0x70] sm:$0xff]
    %v1800 = vld [vmem:[%s5 + $0x78] sm:$0xff]
    %v1801 = vld [vmem:[%s5 + $0x80] sm:$0xff]
    %v1802 = vld [vmem:[%s5 + $0x88] sm:$0xff]
    %v1803 = vld [vmem:[%s5 + $0x90] sm:$0xff]
    %v1804 = vld [vmem:[%s5 + $0x98] sm:$0xff]
    %v1805 = vld [vmem:[%s5 + $0xa0] sm:$0xff]
    %v1806 = vld [vmem:[%s5 + $0xa8] sm:$0xff]
    %v1807 = vld [vmem:[%s5 + $0xb0] sm:$0xff]
    %v1808 = vld [vmem:[%s5 + $0xb8] sm:$0xff]
    %v1809 = vld [vmem:[%s5 + $0xc0] sm:$0xff]
    %v1810 = vld [vmem:[%s5 + $0xc8] sm:$0xff]
    %v1811 = vld [vmem:[%s5 + $0xd0] sm:$0xff]
    %v1812 = vld [vmem:[%s5 + $0xd8] sm:$0xff]
    %v1813 = vld [vmem:[%s5 + $0xe0] sm:$0xff]
    %v1814 = vld [vmem:[%s5 + $0xe8] sm:$0xff]
    %v1815 = vld [vmem:[%s5 + $0xf0] sm:$0xff]
    %v1816 = vld [vmem:[%s5 + $0xf8] sm:$0xff]
    %v1817 = vld [vmem:[%s5 + $0x100] sm:$0xff]
    %v1818 = vld [vmem:[%s5 + $0x108] sm:$0xff]
    %v1819 = vld [vmem:[%s5 + $0x110] sm:$0xff]
    %v1820 = vld [vmem:[%s5 + $0x118] sm:$0xff]
    %v1821 = vld [vmem:[%s5 + $0x120] sm:$0xff]
    %v1822 = vld [vmem:[%s5 + $0x128] sm:$0xff]
    %v1823 = vld [vmem:[%s5 + $0x130] sm:$0xff]
    %v1824 = vld [vmem:[%s5 + $0x138] sm:$0xff]
    %v1825 = vld [vmem:[%s5 + $0x140] sm:$0xff]
    %v1826 = vld [vmem:[%s5 + $0x148] sm:$0xff]
    %v1827 = vld [vmem:[%s5 + $0x150] sm:$0xff]
    %v1828 = vld [vmem:[%s5 + $0x158] sm:$0xff]
    %v1829 = vld [vmem:[%s5 + $0x160] sm:$0xff]
    %v1830 = vld [vmem:[%s5 + $0x168] sm:$0xff]
    %v1831 = vld [vmem:[%s5 + $0x170] sm:$0xff]
    %v1832 = vld [vmem:[%s5 + $0x178] sm:$0xff]
    %v1833 = vld [vmem:[%s5 + $0x180] sm:$0xff]
    %v1834 = vld [vmem:[%s5 + $0x188] sm:$0xff]
    %v1835 = vld [vmem:[%s5 + $0x190] sm:$0xff]
    %v1836 = vld [vmem:[%s5 + $0x198] sm:$0xff]
    %v1837 = vld [vmem:[%s5 + $0x1a0] sm:$0xff]
    %v1838 = vld [vmem:[%s5 + $0x1a8] sm:$0xff]
    %v1839 = vld [vmem:[%s5 + $0x1b0] sm:$0xff]
    %v1840 = vld [vmem:[%s5 + $0x1b8] sm:$0xff]
    %v1841 = vld [vmem:[%s5 + $0x1c0] sm:$0xff]
    %v1842 = vld [vmem:[%s5 + $0x1c8] sm:$0xff]
    %v1843 = vld [vmem:[%s5 + $0x1d0] sm:$0xff]
    %v1844 = vld [vmem:[%s5 + $0x1d8] sm:$0xff]
    %v1845 = vld [vmem:[%s5 + $0x1e0] sm:$0xff]
    %v1846 = vld [vmem:[%s5 + $0x1e8] sm:$0xff]
    %v1847 = vld [vmem:[%s5 + $0x1f0] sm:$0xff]
    %v1848 = vld [vmem:[%s5 + $0x1f8] sm:$0xff]
    %v1849 = vld [vmem:[%s5 + $0x200] sm:$0xff]
    %v1850 = vld [vmem:[%s5 + $0x208] sm:$0xff]
    %v1851 = vld [vmem:[%s5 + $0x210] sm:$0xff]
    %v1852 = vld [vmem:[%s5 + $0x218] sm:$0xff]
    %v1853 = vld [vmem:[%s5 + $0x220] sm:$0xff]
    %v1854 = vld [vmem:[%s5 + $0x228] sm:$0xff]
    %v1855 = vld [vmem:[%s5 + $0x230] sm:$0xff]
    %v1856 = vld [vmem:[%s5 + $0x238] sm:$0xff]
    %v1857 = vld [vmem:[%s5 + $0x240] sm:$0xff]
    %v1858 = vld [vmem:[%s5 + $0x248] sm:$0xff]
    %v1859 = vld [vmem:[%s5 + $0x250] sm:$0xff]
    %v1860 = vld [vmem:[%s5 + $0x258] sm:$0xff]
    %v1861 = vld [vmem:[%s5 + $0x260] sm:$0xff]
    %v1862 = vld [vmem:[%s5 + $0x268] sm:$0xff]
    %v1863 = vld [vmem:[%s5 + $0x270] sm:$0xff]
    %v1864 = vld [vmem:[%s5 + $0x278] sm:$0xff]
    %s1865 = scalar_lea.vmem %s5, 640
    %v1866 = vld [vmem:[%s1865] ss:$8 sm:$0xf]
    %v1868 = vrot.slane %v1778, 7
    %vm1870 = vcmask 1040384
    %v1871 = vsel %vm1870, %v1673, %v1868
    %v1873 = vsel %vm350, 0.0, 0
    %1875 = vmatprep.subr.mxu0 0.0
    %1876 = vmatpush1.msra.mxu0 %v1781
    %1877 = vmatprep.subr.mxu0 0.0
    %1878 = vmatpush1.msra.mxu0 %v1782
    %1879 = vmatprep.subr.mxu0 0.0
    %1880 = vmatpush1.msra.mxu0 %v1783
    %1881 = vmatprep.subr.mxu0 0.0
    %1882 = vmatpush1.msra.mxu0 %v1784
    %1883 = vmatprep.subr.mxu0 0.0
    %1884 = vmatpush1.msra.mxu0 0.0
    %1885 = vmatprep.subr.mxu0 0.0
    %1886 = vmatpush1.msra.mxu0 0.0
    %1887 = vmatprep.subr.mxu0 0.0
    %1888 = vmatpush1.msra.mxu0 0.0
    %1889 = vmatprep.subr.mxu0 0.0
    %1890 = vmatpush1.msra.mxu0 0.0
    %1891 = vmatprep.subr.mxu0 0.0
    %1892 = vmatpush1.msra.mxu0 0.0
    %1893 = vmatprep.subr.mxu0 0.0
    %1894 = vmatpush1.msra.mxu0 0.0
    %1895 = vmatprep.subr.mxu0 0.0
    %1896 = vmatpush1.msra.mxu0 0.0
    %1897 = vmatprep.subr.mxu0 0.0
    %1898 = vmatpush1.msra.mxu0 0.0
    %1899 = vmatprep.subr.mxu0 0.0
    %1900 = vmatpush1.msra.mxu0 0.0
    %1901 = vmatprep.subr.mxu0 0.0
    %1902 = vmatpush1.msra.mxu0 0.0
    %1903 = vmatprep.subr.mxu0 0.0
    %1904 = vmatpush1.msra.mxu0 0.0
    %1905 = vmatprep.subr.mxu0 0.0
    %1906 = vmatpush1.msra.mxu0 0.0
    %1907 = vmatprep.subr.mxu0 0.0
    %1908 = vmatpush1.msra.mxu0 0.0
    %1909 = vmatprep.subr.mxu0 0.0
    %1910 = vmatpush1.msra.mxu0 0.0
    %1911 = vmatprep.subr.mxu0 0.0
    %1912 = vmatpush1.msra.mxu0 0.0
    %1913 = vmatprep.subr.mxu0 0.0
    %1914 = vmatpush1.msra.mxu0 0.0
    %1915 = vmatprep.subr.mxu0 0.0
    %1916 = vmatpush1.msra.mxu0 0.0
    %1917 = vmatprep.subr.mxu0 0.0
    %1918 = vmatpush1.msra.mxu0 0.0
    %1919 = vmatprep.subr.mxu0 0.0
    %1920 = vmatpush1.msra.mxu0 0.0
    %1921 = vmatprep.subr.mxu0 0.0
    %1922 = vmatpush1.msra.mxu0 0.0
    %1923 = vmatprep.subr.mxu0 0.0
    %1924 = vmatpush1.msra.mxu0 0.0
    %1925 = vmatprep.subr.mxu0 0.0
    %1926 = vmatpush1.msra.mxu0 0.0
    %1927 = vmatprep.subr.mxu0 0.0
    %1928 = vmatpush1.msra.mxu0 0.0
    %1929 = vmatprep.subr.mxu0 0.0
    %1930 = vmatpush1.msra.mxu0 0.0
    %1931 = vmatprep.subr.mxu0 0.0
    %1932 = vmatpush1.msra.mxu0 0.0
    %1933 = vmatprep.subr.mxu0 0.0
    %1934 = vmatpush1.msra.mxu0 0.0
    %1935 = vmatprep.subr.mxu0 0.0
    %1936 = vmatpush1.msra.mxu0 0.0
    %1937 = vmatprep.subr.mxu0 0.0
    %1938 = vmatpush1.msra.mxu0 0.0
    %1939 = vmatprep.mubr.f32.mxu0 0.0
    %1940 = vmatmul.mubr.f32.gmra.mrb[0].mxu0 %v1873
    %v1941 = vpop.f32.mrb[0].mxu0
    %v1942 = vadd.f32 0.0, %v1941
    %v1943 = vpop.f32.mrb[0].mxu0
    %1944 = vdwg.mxu0
    %v1945 = vadd.f32 %v1871, %v1942
    %v1946 = vxor.u32 %v1945, 2147483648
    %v1947 = vmul.f32 %v1946, 1.442695
    %v1948 = vpow.pop %v1947
    %v1949 = vadd.f32 %v1948, 1.0
    %v1950 = vrcp.pop %v1949
    %v1951 = vmul.f32 1.0, %v1950
    %v1952 = vtanh.pop %v1945
    %v1953 = vmul.f32 %v1951, 0.0
    %1955 = vrot.lane.b32.xlu0 %v1952, 32
    %v1956 = vpop.permute.xlu0 %1955
    %v1958 = vmul.f32 %v1951, %v1956
    %1960 = vrot.lane.b32.xlu0 %v1958, 32
    %v1961 = vpop.permute.xlu0 %1960
    %v1963 = vadd.f32 %v1953, %v1961
    %v1964 = vtanh.pop %v1963
    %1966 = vrot.lane.b32.xlu0 %v1964, 32
    %v1967 = vpop.permute.xlu0 %1966
    %v1969 = vmul.f32 %v1951, %v1967
    %v1971 = vrot.slane %v1673, 1
    %v1973 = vsel %vm1870, %v1971, %v1778
    %1975 = vrot.lane.b32.xlu0 %v1969, 64
    %v1976 = vpop.permute.xlu0 %1975
    %v1977 = vsel %vm350, %v1976, 0
    %1979 = vmatprep.subr.mxu0 0.0
    %1980 = vmatpush1.msra.mxu0 %v1781
    %1981 = vmatprep.subr.mxu0 0.0
    %1982 = vmatpush1.msra.mxu0 %v1782
    %1983 = vmatprep.subr.mxu0 0.0
    %1984 = vmatpush1.msra.mxu0 %v1783
    %1985 = vmatprep.subr.mxu0 0.0
    %1986 = vmatpush1.msra.mxu0 %v1784
    %1987 = vmatprep.subr.mxu0 0.0
    %1988 = vmatpush1.msra.mxu0 0.0
    %1989 = vmatprep.subr.mxu0 0.0
    %1990 = vmatpush1.msra.mxu0 0.0
    %1991 = vmatprep.subr.mxu0 0.0
    %1992 = vmatpush1.msra.mxu0 0.0
    %1993 = vmatprep.subr.mxu0 0.0
    %1994 = vmatpush1.msra.mxu0 0.0
    %1995 = vmatprep.subr.mxu0 0.0
    %1996 = vmatpush1.msra.mxu0 0.0
    %1997 = vmatprep.subr.mxu0 0.0
    %1998 = vmatpush1.msra.mxu0 0.0
    %1999 = vmatprep.subr.mxu0 0.0
    %2000 = vmatpush1.msra.mxu0 0.0
    %2001 = vmatprep.subr.mxu0 0.0
    %2002 = vmatpush1.msra.mxu0 0.0
    %2003 = vmatprep.subr.mxu0 0.0
    %2004 = vmatpush1.msra.mxu0 0.0
    %2005 = vmatprep.subr.mxu0 0.0
    %2006 = vmatpush1.msra.mxu0 0.0
    %2007 = vmatprep.subr.mxu0 0.0
    %2008 = vmatpush1.msra.mxu0 0.0
    %2009 = vmatprep.subr.mxu0 0.0
    %2010 = vmatpush1.msra.mxu0 0.0
    %2011 = vmatprep.subr.mxu0 0.0
    %2012 = vmatpush1.msra.mxu0 0.0
    %2013 = vmatprep.subr.mxu0 0.0
    %2014 = vmatpush1.msra.mxu0 0.0
    %2015 = vmatprep.subr.mxu0 0.0
    %2016 = vmatpush1.msra.mxu0 0.0
    %2017 = vmatprep.subr.mxu0 0.0
    %2018 = vmatpush1.msra.mxu0 0.0
    %2019 = vmatprep.subr.mxu0 0.0
    %2020 = vmatpush1.msra.mxu0 0.0
    %2021 = vmatprep.subr.mxu0 0.0
    %2022 = vmatpush1.msra.mxu0 0.0
    %2023 = vmatprep.subr.mxu0 0.0
    %2024 = vmatpush1.msra.mxu0 0.0
    %2025 = vmatprep.subr.mxu0 0.0
    %2026 = vmatpush1.msra.mxu0 0.0
    %2027 = vmatprep.subr.mxu0 0.0
    %2028 = vmatpush1.msra.mxu0 0.0
    %2029 = vmatprep.subr.mxu0 0.0
    %2030 = vmatpush1.msra.mxu0 0.0
    %2031 = vmatprep.subr.mxu0 0.0
    %2032 = vmatpush1.msra.mxu0 0.0
    %2033 = vmatprep.subr.mxu0 0.0
    %2034 = vmatpush1.msra.mxu0 0.0
    %2035 = vmatprep.subr.mxu0 0.0
    %2036 = vmatpush1.msra.mxu0 0.0
    %2037 = vmatprep.subr.mxu0 0.0
    %2038 = vmatpush1.msra.mxu0 0.0
    %2039 = vmatprep.subr.mxu0 0.0
    %2040 = vmatpush1.msra.mxu0 0.0
    %2041 = vmatprep.subr.mxu0 0.0
    %2042 = vmatpush1.msra.mxu0 0.0
    %2043 = vmatprep.mubr.f32.mxu0 0.0
    %2044 = vmatmul.mubr.f32.gmra.mrb[0].mxu0 %v1977
    %v2045 = vpop.f32.mrb[0].mxu0
    %v2046 = vadd.f32 0.0, %v2045
    %v2047 = vpop.f32.mrb[0].mxu0
    %2048 = vdwg.mxu0
    %v2049 = vadd.f32 %v1973, %v2046
    %v2050 = vxor.u32 %v2049, 2147483648
    %v2051 = vmul.f32 %v2050, 1.442695
    %v2052 = vpow.pop %v2051
    %v2053 = vadd.f32 %v2052, 1.0
    %v2054 = vrcp.pop %v2053
    %v2055 = vmul.f32 1.0, %v2054
    %v2056 = vtanh.pop %v2049
    %v2057 = vmul.f32 %v2055, %v1963
    %2059 = vrot.lane.b32.xlu0 %v2056, 32
    %v2060 = vpop.permute.xlu0 %2059
    %v2062 = vmul.f32 %v2055, %v2060
    %2064 = vrot.lane.b32.xlu0 %v2062, 32
    %v2065 = vpop.permute.xlu0 %2064
    %v2067 = vadd.f32 %v2057, %v2065
    %v2068 = vtanh.pop %v2067
    %2070 = vrot.lane.b32.xlu0 %v2068, 32
    %v2071 = vpop.permute.xlu0 %2070
    %v2073 = vmul.f32 %v2055, %v2071
    %2074 = vmatprep.subr.mxu0 %v1802
    %2075 = vmatpush1.msra.mxu0 %v1801
    %2076 = vmatprep.subr.mxu0 %v1806
    %2077 = vmatpush1.msra.mxu0 %v1805
    %2078 = vmatprep.subr.mxu0 %v1810
    %2079 = vmatpush1.msra.mxu0 %v1809
    %2080 = vmatprep.subr.mxu0 %v1814
    %2081 = vmatpush1.msra.mxu0 %v1813
    %2082 = vmatprep.subr.mxu0 %v1818
    %2083 = vmatpush1.msra.mxu0 %v1817
    %2084 = vmatprep.subr.mxu0 %v1822
    %2085 = vmatpush1.msra.mxu0 %v1821
    %2086 = vmatprep.subr.mxu0 %v1826
    %2087 = vmatpush1.msra.mxu0 %v1825
    %2088 = vmatprep.subr.mxu0 %v1830
    %2089 = vmatpush1.msra.mxu0 %v1829
    %2090 = vmatprep.subr.mxu0 %v1834
    %2091 = vmatpush1.msra.mxu0 %v1833
    %2092 = vmatprep.subr.mxu0 %v1838
    %2093 = vmatpush1.msra.mxu0 %v1837
    %2094 = vmatprep.subr.mxu0 %v1842
    %2095 = vmatpush1.msra.mxu0 %v1841
    %2096 = vmatprep.subr.mxu0 %v1846
    %2097 = vmatpush1.msra.mxu0 %v1845
    %2098 = vmatprep.subr.mxu0 %v1850
    %2099 = vmatpush1.msra.mxu0 %v1849
    %2100 = vmatprep.subr.mxu0 %v1854
    %2101 = vmatpush1.msra.mxu0 %v1853
    %2102 = vmatprep.subr.mxu0 %v1858
    %2103 = vmatpush1.msra.mxu0 %v1857
    %2104 = vmatprep.subr.mxu0 %v1862
    %2105 = vmatpush1.msra.mxu0 %v1861
    %2106 = vmatprep.subr.mxu0 0.0
    %2107 = vmatpush1.msra.mxu0 0.0
    %2108 = vmatprep.subr.mxu0 0.0
    %2109 = vmatpush1.msra.mxu0 0.0
    %2110 = vmatprep.subr.mxu0 0.0
    %2111 = vmatpush1.msra.mxu0 0.0
    %2112 = vmatprep.subr.mxu0 0.0
    %2113 = vmatpush1.msra.mxu0 0.0
    %2114 = vmatprep.subr.mxu0 0.0
    %2115 = vmatpush1.msra.mxu0 0.0
    %2116 = vmatprep.subr.mxu0 0.0
    %2117 = vmatpush1.msra.mxu0 0.0
    %2118 = vmatprep.subr.mxu0 0.0
    %2119 = vmatpush1.msra.mxu0 0.0
    %2120 = vmatprep.subr.mxu0 0.0
    %2121 = vmatpush1.msra.mxu0 0.0
    %2122 = vmatprep.subr.mxu0 0.0
    %2123 = vmatpush1.msra.mxu0 0.0
    %2124 = vmatprep.subr.mxu0 0.0
    %2125 = vmatpush1.msra.mxu0 0.0
    %2126 = vmatprep.subr.mxu0 0.0
    %2127 = vmatpush1.msra.mxu0 0.0
    %2128 = vmatprep.subr.mxu0 0.0
    %2129 = vmatpush1.msra.mxu0 0.0
    %2130 = vmatprep.subr.mxu0 0.0
    %2131 = vmatpush1.msra.mxu0 0.0
    %2132 = vmatprep.subr.mxu0 0.0
    %2133 = vmatpush1.msra.mxu0 0.0
    %2134 = vmatprep.subr.mxu0 0.0
    %2135 = vmatpush1.msra.mxu0 0.0
    %2136 = vmatprep.subr.mxu0 0.0
    %2137 = vmatpush1.msra.mxu0 0.0
    %2138 = vmatprep.mubr.f32.mxu0 0.0
    %2139 = vmatmul.mubr.f32.gmra.mrb[0].mxu0 0.0
    %v2140 = vpop.f32.mrb[0].mxu0
    %v2141 = vadd.f32 0.0, %v2140
    %v2142 = vpop.f32.mrb[0].mxu0
    %v2143 = vadd.f32 0.0, %v2142
    %2144 = vdwg.mxu0
    %2145 = vmatprep.subr.mxu0 %v1804
    %2146 = vmatpush1.msra.mxu0 %v1803
    %2147 = vmatprep.subr.mxu0 %v1808
    %2148 = vmatpush1.msra.mxu0 %v1807
    %2149 = vmatprep.subr.mxu0 %v1812
    %2150 = vmatpush1.msra.mxu0 %v1811
    %2151 = vmatprep.subr.mxu0 %v1816
    %2152 = vmatpush1.msra.mxu0 %v1815
    %2153 = vmatprep.subr.mxu0 %v1820
    %2154 = vmatpush1.msra.mxu0 %v1819
    %2155 = vmatprep.subr.mxu0 %v1824
    %2156 = vmatpush1.msra.mxu0 %v1823
    %2157 = vmatprep.subr.mxu0 %v1828
    %2158 = vmatpush1.msra.mxu0 %v1827
    %2159 = vmatprep.subr.mxu0 %v1832
    %2160 = vmatpush1.msra.mxu0 %v1831
    %2161 = vmatprep.subr.mxu0 %v1836
    %2162 = vmatpush1.msra.mxu0 %v1835
    %2163 = vmatprep.subr.mxu0 %v1840
    %2164 = vmatpush1.msra.mxu0 %v1839
    %2165 = vmatprep.subr.mxu0 %v1844
    %2166 = vmatpush1.msra.mxu0 %v1843
    %2167 = vmatprep.subr.mxu0 %v1848
    %2168 = vmatpush1.msra.mxu0 %v1847
    %2169 = vmatprep.subr.mxu0 %v1852
    %2170 = vmatpush1.msra.mxu0 %v1851
    %2171 = vmatprep.subr.mxu0 %v1856
    %2172 = vmatpush1.msra.mxu0 %v1855
    %2173 = vmatprep.subr.mxu0 %v1860
    %2174 = vmatpush1.msra.mxu0 %v1859
    %2175 = vmatprep.subr.mxu0 %v1864
    %2176 = vmatpush1.msra.mxu0 %v1863
    %2177 = vmatprep.subr.mxu0 0.0
    %2178 = vmatpush1.msra.mxu0 0.0
    %2179 = vmatprep.subr.mxu0 0.0
    %2180 = vmatpush1.msra.mxu0 0.0
    %2181 = vmatprep.subr.mxu0 0.0
    %2182 = vmatpush1.msra.mxu0 0.0
    %2183 = vmatprep.subr.mxu0 0.0
    %2184 = vmatpush1.msra.mxu0 0.0
    %2185 = vmatprep.subr.mxu0 0.0
    %2186 = vmatpush1.msra.mxu0 0.0
    %2187 = vmatprep.subr.mxu0 0.0
    %2188 = vmatpush1.msra.mxu0 0.0
    %2189 = vmatprep.subr.mxu0 0.0
    %2190 = vmatpush1.msra.mxu0 0.0
    %2191 = vmatprep.subr.mxu0 0.0
    %2192 = vmatpush1.msra.mxu0 0.0
    %2193 = vmatprep.subr.mxu0 0.0
    %2194 = vmatpush1.msra.mxu0 0.0
    %2195 = vmatprep.subr.mxu0 0.0
    %2196 = vmatpush1.msra.mxu0 0.0
    %2197 = vmatprep.subr.mxu0 0.0
    %2198 = vmatpush1.msra.mxu0 0.0
    %2199 = vmatprep.subr.mxu0 0.0
    %2200 = vmatpush1.msra.mxu0 0.0
    %2201 = vmatprep.subr.mxu0 0.0
    %2202 = vmatpush1.msra.mxu0 0.0
    %2203 = vmatprep.subr.mxu0 0.0
    %2204 = vmatpush1.msra.mxu0 0.0
    %2205 = vmatprep.subr.mxu0 0.0
    %2206 = vmatpush1.msra.mxu0 0.0
    %2207 = vmatprep.subr.mxu0 0.0
    %2208 = vmatpush1.msra.mxu0 0.0
    %2209 = vmatprep.mubr.f32.mxu0 0.0
    %2210 = vmatmul.mubr.f32.gmra.mrb[0].mxu0 0.0
    %v2211 = vpop.f32.mrb[0].mxu0
    %v2212 = vadd.f32 0.0, %v2211
    %v2213 = vpop.f32.mrb[0].mxu0
    %v2214 = vadd.f32 0.0, %v2213
    %2215 = vdwg.mxu0
    %2216 = vmatprep.subr.mxu0 %v1786
    %2217 = vmatpush1.msra.mxu0 %v1785
    %2218 = vmatprep.subr.mxu0 %v1790
    %2219 = vmatpush1.msra.mxu0 %v1789
    %2220 = vmatprep.subr.mxu0 %v1794
    %2221 = vmatpush1.msra.mxu0 %v1793
    %2222 = vmatprep.subr.mxu0 %v1798
    %2223 = vmatpush1.msra.mxu0 %v1797
    %2224 = vmatprep.subr.mxu0 0.0
    %2225 = vmatpush1.msra.mxu0 0.0
    %2226 = vmatprep.subr.mxu0 0.0
    %2227 = vmatpush1.msra.mxu0 0.0
    %2228 = vmatprep.subr.mxu0 0.0
    %2229 = vmatpush1.msra.mxu0 0.0
    %2230 = vmatprep.subr.mxu0 0.0
    %2231 = vmatpush1.msra.mxu0 0.0
    %2232 = vmatprep.subr.mxu0 0.0
    %2233 = vmatpush1.msra.mxu0 0.0
    %2234 = vmatprep.subr.mxu0 0.0
    %2235 = vmatpush1.msra.mxu0 0.0
    %2236 = vmatprep.subr.mxu0 0.0
    %2237 = vmatpush1.msra.mxu0 0.0
    %2238 = vmatprep.subr.mxu0 0.0
    %2239 = vmatpush1.msra.mxu0 0.0
    %2240 = vmatprep.subr.mxu0 0.0
    %2241 = vmatpush1.msra.mxu0 0.0
    %2242 = vmatprep.subr.mxu0 0.0
    %2243 = vmatpush1.msra.mxu0 0.0
    %2244 = vmatprep.subr.mxu0 0.0
    %2245 = vmatpush1.msra.mxu0 0.0
    %2246 = vmatprep.subr.mxu0 0.0
    %2247 = vmatpush1.msra.mxu0 0.0
    %2248 = vmatprep.subr.mxu0 0.0
    %2249 = vmatpush1.msra.mxu0 0.0
    %2250 = vmatprep.subr.mxu0 0.0
    %2251 = vmatpush1.msra.mxu0 0.0
    %2252 = vmatprep.subr.mxu0 0.0
    %2253 = vmatpush1.msra.mxu0 0.0
    %2254 = vmatprep.subr.mxu0 0.0
    %2255 = vmatpush1.msra.mxu0 0.0
    %2256 = vmatprep.subr.mxu0 0.0
    %2257 = vmatpush1.msra.mxu0 0.0
    %2258 = vmatprep.subr.mxu0 0.0
    %2259 = vmatpush1.msra.mxu0 0.0
    %2260 = vmatprep.subr.mxu0 0.0
    %2261 = vmatpush1.msra.mxu0 0.0
    %2262 = vmatprep.subr.mxu0 0.0
    %2263 = vmatpush1.msra.mxu0 0.0
    %2264 = vmatprep.subr.mxu0 0.0
    %2265 = vmatpush1.msra.mxu0 0.0
    %2266 = vmatprep.subr.mxu0 0.0
    %2267 = vmatpush1.msra.mxu0 0.0
    %2268 = vmatprep.subr.mxu0 0.0
    %2269 = vmatpush1.msra.mxu0 0.0
    %2270 = vmatprep.subr.mxu0 0.0
    %2271 = vmatpush1.msra.mxu0 0.0
    %2272 = vmatprep.subr.mxu0 0.0
    %2273 = vmatpush1.msra.mxu0 0.0
    %2274 = vmatprep.subr.mxu0 0.0
    %2275 = vmatpush1.msra.mxu0 0.0
    %2276 = vmatprep.subr.mxu0 0.0
    %2277 = vmatpush1.msra.mxu0 0.0
    %2278 = vmatprep.subr.mxu0 0.0
    %2279 = vmatpush1.msra.mxu0 0.0
    %2280 = vmatprep.mubr.f32.mxu0 0.0
    %2281 = vmatmul.mubr.f32.gmra.mrb[0].mxu0 %v1977
    %v2282 = vpop.f32.mrb[0].mxu0
    %v2283 = vadd.f32 %v2141, %v2282
    %v2284 = vpop.f32.mrb[0].mxu0
    %v2285 = vadd.f32 %v2143, %v2284
    %2286 = vdwg.mxu0
    %2287 = vmatprep.subr.mxu0 %v1788
    %2288 = vmatpush1.msra.mxu0 %v1787
    %2289 = vmatprep.subr.mxu0 %v1792
    %2290 = vmatpush1.msra.mxu0 %v1791
    %2291 = vmatprep.subr.mxu0 %v1796
    %2292 = vmatpush1.msra.mxu0 %v1795
    %2293 = vmatprep.subr.mxu0 %v1800
    %2294 = vmatpush1.msra.mxu0 %v1799
    %2295 = vmatprep.subr.mxu0 0.0
    %2296 = vmatpush1.msra.mxu0 0.0
    %2297 = vmatprep.subr.mxu0 0.0
    %2298 = vmatpush1.msra.mxu0 0.0
    %2299 = vmatprep.subr.mxu0 0.0
    %2300 = vmatpush1.msra.mxu0 0.0
    %2301 = vmatprep.subr.mxu0 0.0
    %2302 = vmatpush1.msra.mxu0 0.0
    %2303 = vmatprep.subr.mxu0 0.0
    %2304 = vmatpush1.msra.mxu0 0.0
    %2305 = vmatprep.subr.mxu0 0.0
    %2306 = vmatpush1.msra.mxu0 0.0
    %2307 = vmatprep.subr.mxu0 0.0
    %2308 = vmatpush1.msra.mxu0 0.0
    %2309 = vmatprep.subr.mxu0 0.0
    %2310 = vmatpush1.msra.mxu0 0.0
    %2311 = vmatprep.subr.mxu0 0.0
    %2312 = vmatpush1.msra.mxu0 0.0
    %2313 = vmatprep.subr.mxu0 0.0
    %2314 = vmatpush1.msra.mxu0 0.0
    %2315 = vmatprep.subr.mxu0 0.0
    %2316 = vmatpush1.msra.mxu0 0.0
    %2317 = vmatprep.subr.mxu0 0.0
    %2318 = vmatpush1.msra.mxu0 0.0
    %2319 = vmatprep.subr.mxu0 0.0
    %2320 = vmatpush1.msra.mxu0 0.0
    %2321 = vmatprep.subr.mxu0 0.0
    %2322 = vmatpush1.msra.mxu0 0.0
    %2323 = vmatprep.subr.mxu0 0.0
    %2324 = vmatpush1.msra.mxu0 0.0
    %2325 = vmatprep.subr.mxu0 0.0
    %2326 = vmatpush1.msra.mxu0 0.0
    %2327 = vmatprep.subr.mxu0 0.0
    %2328 = vmatpush1.msra.mxu0 0.0
    %2329 = vmatprep.subr.mxu0 0.0
    %2330 = vmatpush1.msra.mxu0 0.0
    %2331 = vmatprep.subr.mxu0 0.0
    %2332 = vmatpush1.msra.mxu0 0.0
    %2333 = vmatprep.subr.mxu0 0.0
    %2334 = vmatpush1.msra.mxu0 0.0
    %2335 = vmatprep.subr.mxu0 0.0
    %2336 = vmatpush1.msra.mxu0 0.0
    %2337 = vmatprep.subr.mxu0 0.0
    %2338 = vmatpush1.msra.mxu0 0.0
    %2339 = vmatprep.subr.mxu0 0.0
    %2340 = vmatpush1.msra.mxu0 0.0
    %2341 = vmatprep.subr.mxu0 0.0
    %2342 = vmatpush1.msra.mxu0 0.0
    %2343 = vmatprep.subr.mxu0 0.0
    %2344 = vmatpush1.msra.mxu0 0.0
    %2345 = vmatprep.subr.mxu0 0.0
    %2346 = vmatpush1.msra.mxu0 0.0
    %2347 = vmatprep.subr.mxu0 0.0
    %2348 = vmatpush1.msra.mxu0 0.0
    %2349 = vmatprep.subr.mxu0 0.0
    %2350 = vmatpush1.msra.mxu0 0.0
    %2351 = vmatprep.mubr.f32.mxu0 0.0
    %2352 = vmatmul.mubr.f32.gmra.mrb[0].mxu0 %v1977
    %v2353 = vpop.f32.mrb[0].mxu0
    %v2354 = vadd.f32 %v2212, %v2353
    %v2355 = vpop.f32.mrb[0].mxu0
    %v2356 = vadd.f32 %v2214, %v2355
    %2357 = vdwg.mxu0
    %v2359 = vlaneseq
    %v2360 = vshrl.u32 %v2359, 7
    %v2361 = vsub.s32 0, %v2360
    %v2362 = vrot.slane %v1866, %v2361
    %v2363 = vlaneseq
    %v2364 = vshrl.u32 %v2363, 7
    %v2365 = vsub.s32 1, %v2364
    %v2366 = vrot.slane %v1866, %v2365
    %v2367 = vlaneseq
    %v2368 = vshrl.u32 %v2367, 7
    %v2369 = vsub.s32 2, %v2368
    %v2370 = vrot.slane %v1866, %v2369
    %v2371 = vlaneseq
    %v2372 = vshrl.u32 %v2371, 7
    %v2373 = vsub.s32 3, %v2372
    %v2374 = vrot.slane %v1866, %v2373
    %v2379 = vadd.f32 %v2283, %v2362
    %v2380 = vadd.f32 %v2285, %v2366
    %v2381 = vadd.f32 %v2354, %v2370
    %v2382 = vadd.f32 %v2356, %v2374
    %v2383 = vxor.u32 %v2379, 2147483648
    %v2384 = vxor.u32 %v2380, 2147483648
    %v2385 = vxor.u32 %v2381, 2147483648
    %v2386 = vmul.f32 %v2383, 1.442695
    %v2387 = vpow.pop %v2386
    %v2388 = vmul.f32 %v2384, 1.442695
    %v2389 = vpow.pop %v2388
    %v2390 = vmul.f32 %v2385, 1.442695
    %v2391 = vpow.pop %v2390
    %v2392 = vadd.f32 %v2387, 1.0
    %v2393 = vadd.f32 %v2389, 1.0
    %v2394 = vadd.f32 %v2391, 1.0
    %v2395 = vrcp.pop %v2392
    %v2396 = vmul.f32 1.0, %v2395
    %v2397 = vrcp.pop %v2393
    %v2398 = vmul.f32 1.0, %v2397
    %v2399 = vrcp.pop %v2394
    %v2400 = vmul.f32 1.0, %v2399
    %v2401 = vtanh.pop %v2382
    %v2402 = vmul.f32 %v2398, 0.0
    %v2403 = vmul.f32 %v2396, %v2401
    %v2404 = vadd.f32 %v2402, %v2403
    %v2405 = vtanh.pop %v2404
    %v2406 = vmul.f32 %v2400, %v2405
    %v2407 = vrot.slane %v1673, 2
    %v2409 = vrot.slane %v1778, 1
    %v2411 = vsel %vm1870, %v2407, %v2409
    %2413 = vrot.lane.b32.xlu0 %v2073, 64
    %v2414 = vpop.permute.xlu0 %2413
    %v2415 = vsel %vm350, %v2414, 0
    %2417 = vmatprep.subr.mxu0 0.0
    %2418 = vmatpush1.msra.mxu0 %v1781
    %2419 = vmatprep.subr.mxu0 0.0
    %2420 = vmatpush1.msra.mxu0 %v1782
    %2421 = vmatprep.subr.mxu0 0.0
    %2422 = vmatpush1.msra.mxu0 %v1783
    %2423 = vmatprep.subr.mxu0 0.0
    %2424 = vmatpush1.msra.mxu0 %v1784
    %2425 = vmatprep.subr.mxu0 0.0
    %2426 = vmatpush1.msra.mxu0 0.0
    %2427 = vmatprep.subr.mxu0 0.0
    %2428 = vmatpush1.msra.mxu0 0.0
    %2429 = vmatprep.subr.mxu0 0.0
    %2430 = vmatpush1.msra.mxu0 0.0
    %2431 = vmatprep.subr.mxu0 0.0
    %2432 = vmatpush1.msra.mxu0 0.0
    %2433 = vmatprep.subr.mxu0 0.0
    %2434 = vmatpush1.msra.mxu0 0.0
    %2435 = vmatprep.subr.mxu0 0.0
    %2436 = vmatpush1.msra.mxu0 0.0
    %2437 = vmatprep.subr.mxu0 0.0
    %2438 = vmatpush1.msra.mxu0 0.0
    %2439 = vmatprep.subr.mxu0 0.0
    %2440 = vmatpush1.msra.mxu0 0.0
    %2441 = vmatprep.subr.mxu0 0.0
    %2442 = vmatpush1.msra.mxu0 0.0
    %2443 = vmatprep.subr.mxu0 0.0
    %2444 = vmatpush1.msra.mxu0 0.0
    %2445 = vmatprep.subr.mxu0 0.0
    %2446 = vmatpush1.msra.mxu0 0.0
    %2447 = vmatprep.subr.mxu0 0.0
    %2448 = vmatpush1.msra.mxu0 0.0
    %2449 = vmatprep.subr.mxu0 0.0
    %2450 = vmatpush1.msra.mxu0 0.0
    %2451 = vmatprep.subr.mxu0 0.0
    %2452 = vmatpush1.msra.mxu0 0.0
    %2453 = vmatprep.subr.mxu0 0.0
    %2454 = vmatpush1.msra.mxu0 0.0
    %2455 = vmatprep.subr.mxu0 0.0
    %2456 = vmatpush1.msra.mxu0 0.0
    %2457 = vmatprep.subr.mxu0 0.0
    %2458 = vmatpush1.msra.mxu0 0.0
    %2459 = vmatprep.subr.mxu0 0.0
    %2460 = vmatpush1.msra.mxu0 0.0
    %2461 = vmatprep.subr.mxu0 0.0
    %2462 = vmatpush1.msra.mxu0 0.0
    %2463 = vmatprep.subr.mxu0 0.0
    %2464 = vmatpush1.msra.mxu0 0.0
    %2465 = vmatprep.subr.mxu0 0.0
    %2466 = vmatpush1.msra.mxu0 0.0
    %2467 = vmatprep.subr.mxu0 0.0
    %2468 = vmatpush1.msra.mxu0 0.0
    %2469 = vmatprep.subr.mxu0 0.0
    %2470 = vmatpush1.msra.mxu0 0.0
    %2471 = vmatprep.subr.mxu0 0.0
    %2472 = vmatpush1.msra.mxu0 0.0
    %2473 = vmatprep.subr.mxu0 0.0
    %2474 = vmatpush1.msra.mxu0 0.0
    %2475 = vmatprep.subr.mxu0 0.0
    %2476 = vmatpush1.msra.mxu0 0.0
    %2477 = vmatprep.subr.mxu0 0.0
    %2478 = vmatpush1.msra.mxu0 0.0
    %2479 = vmatprep.subr.mxu0 0.0
    %2480 = vmatpush1.msra.mxu0 0.0
    %2481 = vmatprep.mubr.f32.mxu0 0.0
    %2482 = vmatmul.mubr.f32.gmra.mrb[0].mxu0 %v2415
    %v2483 = vpop.f32.mrb[0].mxu0
    %v2484 = vadd.f32 0.0, %v2483
    %v2485 = vpop.f32.mrb[0].mxu0
    %2486 = vdwg.mxu0
    %v2487 = vadd.f32 %v2411, %v2484
    %v2488 = vxor.u32 %v2487, 2147483648
    %v2489 = vmul.f32 %v2488, 1.442695
    %v2490 = vpow.pop %v2489
    %v2491 = vadd.f32 %v2490, 1.0
    %v2492 = vrcp.pop %v2491
    %v2493 = vmul.f32 1.0, %v2492
    %v2494 = vtanh.pop %v2487
    %v2495 = vmul.f32 %v2493, %v2067
    %2497 = vrot.lane.b32.xlu0 %v2494, 32
    %v2498 = vpop.permute.xlu0 %2497
    %v2500 = vmul.f32 %v2493, %v2498
    %2502 = vrot.lane.b32.xlu0 %v2500, 32
    %v2503 = vpop.permute.xlu0 %2502
    %v2505 = vadd.f32 %v2495, %v2503
    %v2506 = vtanh.pop %v2505
    %2508 = vrot.lane.b32.xlu0 %v2506, 32
    %v2509 = vpop.permute.xlu0 %2508
    %v2511 = vmul.f32 %v2493, %v2509
    %2512 = vmatprep.subr.mxu0 %v1802
    %2513 = vmatpush1.msra.mxu0 %v1801
    %2514 = vmatprep.subr.mxu0 %v1806
    %2515 = vmatpush1.msra.mxu0 %v1805
    %2516 = vmatprep.subr.mxu0 %v1810
    %2517 = vmatpush1.msra.mxu0 %v1809
    %2518 = vmatprep.subr.mxu0 %v1814
    %2519 = vmatpush1.msra.mxu0 %v1813
    %2520 = vmatprep.subr.mxu0 %v1818
    %2521 = vmatpush1.msra.mxu0 %v1817
    %2522 = vmatprep.subr.mxu0 %v1822
    %2523 = vmatpush1.msra.mxu0 %v1821
    %2524 = vmatprep.subr.mxu0 %v1826
    %2525 = vmatpush1.msra.mxu0 %v1825
    %2526 = vmatprep.subr.mxu0 %v1830
    %2527 = vmatpush1.msra.mxu0 %v1829
    %2528 = vmatprep.subr.mxu0 %v1834
    %2529 = vmatpush1.msra.mxu0 %v1833
    %2530 = vmatprep.subr.mxu0 %v1838
    %2531 = vmatpush1.msra.mxu0 %v1837
    %2532 = vmatprep.subr.mxu0 %v1842
    %2533 = vmatpush1.msra.mxu0 %v1841
    %2534 = vmatprep.subr.mxu0 %v1846
    %2535 = vmatpush1.msra.mxu0 %v1845
    %2536 = vmatprep.subr.mxu0 %v1850
    %2537 = vmatpush1.msra.mxu0 %v1849
    %2538 = vmatprep.subr.mxu0 %v1854
    %2539 = vmatpush1.msra.mxu0 %v1853
    %2540 = vmatprep.subr.mxu0 %v1858
    %2541 = vmatpush1.msra.mxu0 %v1857
    %2542 = vmatprep.subr.mxu0 %v1862
    %2543 = vmatpush1.msra.mxu0 %v1861
    %2544 = vmatprep.subr.mxu0 0.0
    %2545 = vmatpush1.msra.mxu0 0.0
    %2546 = vmatprep.subr.mxu0 0.0
    %2547 = vmatpush1.msra.mxu0 0.0
    %2548 = vmatprep.subr.mxu0 0.0
    %2549 = vmatpush1.msra.mxu0 0.0
    %2550 = vmatprep.subr.mxu0 0.0
    %2551 = vmatpush1.msra.mxu0 0.0
    %2552 = vmatprep.subr.mxu0 0.0
    %2553 = vmatpush1.msra.mxu0 0.0
    %2554 = vmatprep.subr.mxu0 0.0
    %2555 = vmatpush1.msra.mxu0 0.0
    %2556 = vmatprep.subr.mxu0 0.0
    %2557 = vmatpush1.msra.mxu0 0.0
    %2558 = vmatprep.subr.mxu0 0.0
    %2559 = vmatpush1.msra.mxu0 0.0
    %2560 = vmatprep.subr.mxu0 0.0
    %2561 = vmatpush1.msra.mxu0 0.0
    %2562 = vmatprep.subr.mxu0 0.0
    %2563 = vmatpush1.msra.mxu0 0.0
    %2564 = vmatprep.subr.mxu0 0.0
    %2565 = vmatpush1.msra.mxu0 0.0
    %2566 = vmatprep.subr.mxu0 0.0
    %2567 = vmatpush1.msra.mxu0 0.0
    %2568 = vmatprep.subr.mxu0 0.0
    %2569 = vmatpush1.msra.mxu0 0.0
    %2570 = vmatprep.subr.mxu0 0.0
    %2571 = vmatpush1.msra.mxu0 0.0
    %2572 = vmatprep.subr.mxu0 0.0
    %2573 = vmatpush1.msra.mxu0 0.0
    %2574 = vmatprep.subr.mxu0 0.0
    %2575 = vmatpush1.msra.mxu0 0.0
    %2576 = vmatprep.mubr.f32.mxu0 0.0
    %2577 = vmatmul.mubr.f32.gmra.mrb[0].mxu0 %v2406
    %v2578 = vpop.f32.mrb[0].mxu0
    %v2579 = vadd.f32 0.0, %v2578
    %v2580 = vpop.f32.mrb[0].mxu0
    %v2581 = vadd.f32 0.0, %v2580
    %2582 = vdwg.mxu0
    %2583 = vmatprep.subr.mxu0 %v1804
    %2584 = vmatpush1.msra.mxu0 %v1803
    %2585 = vmatprep.subr.mxu0 %v1808
    %2586 = vmatpush1.msra.mxu0 %v1807
    %2587 = vmatprep.subr.mxu0 %v1812
    %2588 = vmatpush1.msra.mxu0 %v1811
    %2589 = vmatprep.subr.mxu0 %v1816
    %2590 = vmatpush1.msra.mxu0 %v1815
    %2591 = vmatprep.subr.mxu0 %v1820
    %2592 = vmatpush1.msra.mxu0 %v1819
    %2593 = vmatprep.subr.mxu0 %v1824
    %2594 = vmatpush1.msra.mxu0 %v1823
    %2595 = vmatprep.subr.mxu0 %v1828
    %2596 = vmatpush1.msra.mxu0 %v1827
    %2597 = vmatprep.subr.mxu0 %v1832
    %2598 = vmatpush1.msra.mxu0 %v1831
    %2599 = vmatprep.subr.mxu0 %v1836
    %2600 = vmatpush1.msra.mxu0 %v1835
    %2601 = vmatprep.subr.mxu0 %v1840
    %2602 = vmatpush1.msra.mxu0 %v1839
    %2603 = vmatprep.subr.mxu0 %v1844
    %2604 = vmatpush1.msra.mxu0 %v1843
    %2605 = vmatprep.subr.mxu0 %v1848
    %2606 = vmatpush1.msra.mxu0 %v1847
    %2607 = vmatprep.subr.mxu0 %v1852
    %2608 = vmatpush1.msra.mxu0 %v1851
    %2609 = vmatprep.subr.mxu0 %v1856
    %2610 = vmatpush1.msra.mxu0 %v1855
    %2611 = vmatprep.subr.mxu0 %v1860
    %2612 = vmatpush1.msra.mxu0 %v1859
    %2613 = vmatprep.subr.mxu0 %v1864
    %2614 = vmatpush1.msra.mxu0 %v1863
    %2615 = vmatprep.subr.mxu0 0.0
    %2616 = vmatpush1.msra.mxu0 0.0
    %2617 = vmatprep.subr.mxu0 0.0
    %2618 = vmatpush1.msra.mxu0 0.0
    %2619 = vmatprep.subr.mxu0 0.0
    %2620 = vmatpush1.msra.mxu0 0.0
    %2621 = vmatprep.subr.mxu0 0.0
    %2622 = vmatpush1.msra.mxu0 0.0
    %2623 = vmatprep.subr.mxu0 0.0
    %2624 = vmatpush1.msra.mxu0 0.0
    %2625 = vmatprep.subr.mxu0 0.0
    %2626 = vmatpush1.msra.mxu0 0.0
    %2627 = vmatprep.subr.mxu0 0.0
    %2628 = vmatpush1.msra.mxu0 0.0
    %2629 = vmatprep.subr.mxu0 0.0
    %2630 = vmatpush1.msra.mxu0 0.0
    %2631 = vmatprep.subr.mxu0 0.0
    %2632 = vmatpush1.msra.mxu0 0.0
    %2633 = vmatprep.subr.mxu0 0.0
    %2634 = vmatpush1.msra.mxu0 0.0
    %2635 = vmatprep.subr.mxu0 0.0
    %2636 = vmatpush1.msra.mxu0 0.0
    %2637 = vmatprep.subr.mxu0 0.0
    %2638 = vmatpush1.msra.mxu0 0.0
    %2639 = vmatprep.subr.mxu0 0.0
    %2640 = vmatpush1.msra.mxu0 0.0
    %2641 = vmatprep.subr.mxu0 0.0
    %2642 = vmatpush1.msra.mxu0 0.0
    %2643 = vmatprep.subr.mxu0 0.0
    %2644 = vmatpush1.msra.mxu0 0.0
    %2645 = vmatprep.subr.mxu0 0.0
    %2646 = vmatpush1.msra.mxu0 0.0
    %2647 = vmatprep.mubr.f32.mxu0 0.0
    %2648 = vmatmul.mubr.f32.gmra.mrb[0].mxu0 %v2406
    %v2649 = vpop.f32.mrb[0].mxu0
    %v2650 = vadd.f32 0.0, %v2649
    %v2651 = vpop.f32.mrb[0].mxu0
    %v2652 = vadd.f32 0.0, %v2651
    %2653 = vdwg.mxu0
    %2654 = vmatprep.subr.mxu0 %v1786
    %2655 = vmatpush1.msra.mxu0 %v1785
    %2656 = vmatprep.subr.mxu0 %v1790
    %2657 = vmatpush1.msra.mxu0 %v1789
    %2658 = vmatprep.subr.mxu0 %v1794
    %2659 = vmatpush1.msra.mxu0 %v1793
    %2660 = vmatprep.subr.mxu0 %v1798
    %2661 = vmatpush1.msra.mxu0 %v1797
    %2662 = vmatprep.subr.mxu0 0.0
    %2663 = vmatpush1.msra.mxu0 0.0
    %2664 = vmatprep.subr.mxu0 0.0
    %2665 = vmatpush1.msra.mxu0 0.0
    %2666 = vmatprep.subr.mxu0 0.0
    %2667 = vmatpush1.msra.mxu0 0.0
    %2668 = vmatprep.subr.mxu0 0.0
    %2669 = vmatpush1.msra.mxu0 0.0
    %2670 = vmatprep.subr.mxu0 0.0
    %2671 = vmatpush1.msra.mxu0 0.0
    %2672 = vmatprep.subr.mxu0 0.0
    %2673 = vmatpush1.msra.mxu0 0.0
    %2674 = vmatprep.subr.mxu0 0.0
    %2675 = vmatpush1.msra.mxu0 0.0
    %2676 = vmatprep.subr.mxu0 0.0
    %2677 = vmatpush1.msra.mxu0 0.0
    %2678 = vmatprep.subr.mxu0 0.0
    %2679 = vmatpush1.msra.mxu0 0.0
    %2680 = vmatprep.subr.mxu0 0.0
    %2681 = vmatpush1.msra.mxu0 0.0
    %2682 = vmatprep.subr.mxu0 0.0
    %2683 = vmatpush1.msra.mxu0 0.0
    %2684 = vmatprep.subr.mxu0 0.0
    %2685 = vmatpush1.msra.mxu0 0.0
    %2686 = vmatprep.subr.mxu0 0.0
    %2687 = vmatpush1.msra.mxu0 0.0
    %2688 = vmatprep.subr.mxu0 0.0
    %2689 = vmatpush1.msra.mxu0 0.0
    %2690 = vmatprep.subr.mxu0 0.0
    %2691 = vmatpush1.msra.mxu0 0.0
    %2692 = vmatprep.subr.mxu0 0.0
    %2693 = vmatpush1.msra.mxu0 0.0
    %2694 = vmatprep.subr.mxu0 0.0
    %2695 = vmatpush1.msra.mxu0 0.0
    %2696 = vmatprep.subr.mxu0 0.0
    %2697 = vmatpush1.msra.mxu0 0.0
    %2698 = vmatprep.subr.mxu0 0.0
    %2699 = vmatpush1.msra.mxu0 0.0
    %2700 = vmatprep.subr.mxu0 0.0
    %2701 = vmatpush1.msra.mxu0 0.0
    %2702 = vmatprep.subr.mxu0 0.0
    %2703 = vmatpush1.msra.mxu0 0.0
    %2704 = vmatprep.subr.mxu0 0.0
    %2705 = vmatpush1.msra.mxu0 0.0
    %2706 = vmatprep.subr.mxu0 0.0
    %2707 = vmatpush1.msra.mxu0 0.0
    %2708 = vmatprep.subr.mxu0 0.0
    %2709 = vmatpush1.msra.mxu0 0.0
    %2710 = vmatprep.subr.mxu0 0.0
    %2711 = vmatpush1.msra.mxu0 0.0
    %2712 = vmatprep.subr.mxu0 0.0
    %2713 = vmatpush1.msra.mxu0 0.0
    %2714 = vmatprep.subr.mxu0 0.0
    %2715 = vmatpush1.msra.mxu0 0.0
    %2716 = vmatprep.subr.mxu0 0.0
    %2717 = vmatpush1.msra.mxu0 0.0
    %2718 = vmatprep.mubr.f32.mxu0 0.0
    %2719 = vmatmul.mubr.f32.gmra.mrb[0].mxu0 %v2415
    %v2720 = vpop.f32.mrb[0].mxu0
    %v2721 = vadd.f32 %v2579, %v2720
    %v2722 = vpop.f32.mrb[0].mxu0
    %v2723 = vadd.f32 %v2581, %v2722
    %2724 = vdwg.mxu0
    %2725 = vmatprep.subr.mxu0 %v1788
    %2726 = vmatpush1.msra.mxu0 %v1787
    %2727 = vmatprep.subr.mxu0 %v1792
    %2728 = vmatpush1.msra.mxu0 %v1791
    %2729 = vmatprep.subr.mxu0 %v1796
    %2730 = vmatpush1.msra.mxu0 %v1795
    %2731 = vmatprep.subr.mxu0 %v1800
    %2732 = vmatpush1.msra.mxu0 %v1799
    %2733 = vmatprep.subr.mxu0 0.0
    %2734 = vmatpush1.msra.mxu0 0.0
    %2735 = vmatprep.subr.mxu0 0.0
    %2736 = vmatpush1.msra.mxu0 0.0
    %2737 = vmatprep.subr.mxu0 0.0
    %2738 = vmatpush1.msra.mxu0 0.0
    %2739 = vmatprep.subr.mxu0 0.0
    %2740 = vmatpush1.msra.mxu0 0.0
    %2741 = vmatprep.subr.mxu0 0.0
    %2742 = vmatpush1.msra.mxu0 0.0
    %2743 = vmatprep.subr.mxu0 0.0
    %2744 = vmatpush1.msra.mxu0 0.0
    %2745 = vmatprep.subr.mxu0 0.0
    %2746 = vmatpush1.msra.mxu0 0.0
    %2747 = vmatprep.subr.mxu0 0.0
    %2748 = vmatpush1.msra.mxu0 0.0
    %2749 = vmatprep.subr.mxu0 0.0
    %2750 = vmatpush1.msra.mxu0 0.0
    %2751 = vmatprep.subr.mxu0 0.0
    %2752 = vmatpush1.msra.mxu0 0.0
    %2753 = vmatprep.subr.mxu0 0.0
    %2754 = vmatpush1.msra.mxu0 0.0
    %2755 = vmatprep.subr.mxu0 0.0
    %2756 = vmatpush1.msra.mxu0 0.0
    %2757 = vmatprep.subr.mxu0 0.0
    %2758 = vmatpush1.msra.mxu0 0.0
    %2759 = vmatprep.subr.mxu0 0.0
    %2760 = vmatpush1.msra.mxu0 0.0
    %2761 = vmatprep.subr.mxu0 0.0
    %2762 = vmatpush1.msra.mxu0 0.0
    %2763 = vmatprep.subr.mxu0 0.0
    %2764 = vmatpush1.msra.mxu0 0.0
    %2765 = vmatprep.subr.mxu0 0.0
    %2766 = vmatpush1.msra.mxu0 0.0
    %2767 = vmatprep.subr.mxu0 0.0
    %2768 = vmatpush1.msra.mxu0 0.0
    %2769 = vmatprep.subr.mxu0 0.0
    %2770 = vmatpush1.msra.mxu0 0.0
    %2771 = vmatprep.subr.mxu0 0.0
    %2772 = vmatpush1.msra.mxu0 0.0
    %2773 = vmatprep.subr.mxu0 0.0
    %2774 = vmatpush1.msra.mxu0 0.0
    %2775 = vmatprep.subr.mxu0 0.0
    %2776 = vmatpush1.msra.mxu0 0.0
    %2777 = vmatprep.subr.mxu0 0.0
    %2778 = vmatpush1.msra.mxu0 0.0
    %2779 = vmatprep.subr.mxu0 0.0
    %2780 = vmatpush1.msra.mxu0 0.0
    %2781 = vmatprep.subr.mxu0 0.0
    %2782 = vmatpush1.msra.mxu0 0.0
    %2783 = vmatprep.subr.mxu0 0.0
    %2784 = vmatpush1.msra.mxu0 0.0
    %2785 = vmatprep.subr.mxu0 0.0
    %2786 = vmatpush1.msra.mxu0 0.0
    %2787 = vmatprep.subr.mxu0 0.0
    %2788 = vmatpush1.msra.mxu0 0.0
    %2789 = vmatprep.mubr.f32.mxu0 0.0
    %2790 = vmatmul.mubr.f32.gmra.mrb[0].mxu0 %v2415
    %v2791 = vpop.f32.mrb[0].mxu0
    %v2792 = vadd.f32 %v2650, %v2791
    %v2793 = vpop.f32.mrb[0].mxu0
    %v2794 = vadd.f32 %v2652, %v2793
    %2795 = vdwg.mxu0
    %v2796 = vadd.f32 %v2721, %v2362
    %v2797 = vadd.f32 %v2723, %v2366
    %v2798 = vadd.f32 %v2792, %v2370
    %v2799 = vadd.f32 %v2794, %v2374
    %v2800 = vxor.u32 %v2796, 2147483648
    %v2801 = vxor.u32 %v2797, 2147483648
    %v2802 = vxor.u32 %v2798, 2147483648
    %v2803 = vmul.f32 %v2800, 1.442695
    %v2804 = vpow.pop %v2803
    %v2805 = vmul.f32 %v2801, 1.442695
    %v2806 = vpow.pop %v2805
    %v2807 = vmul.f32 %v2802, 1.442695
    %v2808 = vpow.pop %v2807
    %v2809 = vadd.f32 %v2804, 1.0
    %v2810 = vadd.f32 %v2806, 1.0
    %v2811 = vadd.f32 %v2808, 1.0
    %v2812 = vrcp.pop %v2809
    %v2813 = vmul.f32 1.0, %v2812
    %v2814 = vrcp.pop %v2810
    %v2815 = vmul.f32 1.0, %v2814
    %v2816 = vrcp.pop %v2811
    %v2817 = vmul.f32 1.0, %v2816
    %v2818 = vtanh.pop %v2799
    %v2819 = vmul.f32 %v2815, %v2404
    %v2820 = vmul.f32 %v2813, %v2818
    %v2821 = vadd.f32 %v2819, %v2820
    %v2822 = vtanh.pop %v2821
    %v2823 = vmul.f32 %v2817, %v2822
    %v2824 = vrot.slane %v1673, 3
    %v2826 = vrot.slane %v1778, 2
    %v2828 = vsel %vm1870, %v2824, %v2826
    %2830 = vrot.lane.b32.xlu0 %v2511, 64
    %v2831 = vpop.permute.xlu0 %2830
    %v2832 = vsel %vm350, %v2831, 0
    %2834 = vmatprep.subr.mxu0 0.0
    %2835 = vmatpush1.msra.mxu0 %v1781
    %2836 = vmatprep.subr.mxu0 0.0
    %2837 = vmatpush1.msra.mxu0 %v1782
    %2838 = vmatprep.subr.mxu0 0.0
    %2839 = vmatpush1.msra.mxu0 %v1783
    %2840 = vmatprep.subr.mxu0 0.0
    %2841 = vmatpush1.msra.mxu0 %v1784
    %2842 = vmatprep.subr.mxu0 0.0
    %2843 = vmatpush1.msra.mxu0 0.0
    %2844 = vmatprep.subr.mxu0 0.0
    %2845 = vmatpush1.msra.mxu0 0.0
    %2846 = vmatprep.subr.mxu0 0.0
    %2847 = vmatpush1.msra.mxu0 0.0
    %2848 = vmatprep.subr.mxu0 0.0
    %2849 = vmatpush1.msra.mxu0 0.0
    %2850 = vmatprep.subr.mxu0 0.0
    %2851 = vmatpush1.msra.mxu0 0.0
    %2852 = vmatprep.subr.mxu0 0.0
    %2853 = vmatpush1.msra.mxu0 0.0
    %2854 = vmatprep.subr.mxu0 0.0
    %2855 = vmatpush1.msra.mxu0 0.0
    %2856 = vmatprep.subr.mxu0 0.0
    %2857 = vmatpush1.msra.mxu0 0.0
    %2858 = vmatprep.subr.mxu0 0.0
    %2859 = vmatpush1.msra.mxu0 0.0
    %2860 = vmatprep.subr.mxu0 0.0
    %2861 = vmatpush1.msra.mxu0 0.0
    %2862 = vmatprep.subr.mxu0 0.0
    %2863 = vmatpush1.msra.mxu0 0.0
    %2864 = vmatprep.subr.mxu0 0.0
    %2865 = vmatpush1.msra.mxu0 0.0
    %2866 = vmatprep.subr.mxu0 0.0
    %2867 = vmatpush1.msra.mxu0 0.0
    %2868 = vmatprep.subr.mxu0 0.0
    %2869 = vmatpush1.msra.mxu0 0.0
    %2870 = vmatprep.subr.mxu0 0.0
    %2871 = vmatpush1.msra.mxu0 0.0
    %2872 = vmatprep.subr.mxu0 0.0
    %2873 = vmatpush1.msra.mxu0 0.0
    %2874 = vmatprep.subr.mxu0 0.0
    %2875 = vmatpush1.msra.mxu0 0.0
    %2876 = vmatprep.subr.mxu0 0.0
    %2877 = vmatpush1.msra.mxu0 0.0
    %2878 = vmatprep.subr.mxu0 0.0
    %2879 = vmatpush1.msra.mxu0 0.0
    %2880 = vmatprep.subr.mxu0 0.0
    %2881 = vmatpush1.msra.mxu0 0.0
    %2882 = vmatprep.subr.mxu0 0.0
    %2883 = vmatpush1.msra.mxu0 0.0
    %2884 = vmatprep.subr.mxu0 0.0
    %2885 = vmatpush1.msra.mxu0 0.0
    %2886 = vmatprep.subr.mxu0 0.0
    %2887 = vmatpush1.msra.mxu0 0.0
    %2888 = vmatprep.subr.mxu0 0.0
    %2889 = vmatpush1.msra.mxu0 0.0
    %2890 = vmatprep.subr.mxu0 0.0
    %2891 = vmatpush1.msra.mxu0 0.0
    %2892 = vmatprep.subr.mxu0 0.0
    %2893 = vmatpush1.msra.mxu0 0.0
    %2894 = vmatprep.subr.mxu0 0.0
    %2895 = vmatpush1.msra.mxu0 0.0
    %2896 = vmatprep.subr.mxu0 0.0
    %2897 = vmatpush1.msra.mxu0 0.0
    %2898 = vmatprep.mubr.f32.mxu0 0.0
    %2899 = vmatmul.mubr.f32.gmra.mrb[0].mxu0 %v2832
    %v2900 = vpop.f32.mrb[0].mxu0
    %v2901 = vadd.f32 0.0, %v2900
    %v2902 = vpop.f32.mrb[0].mxu0
    %2903 = vdwg.mxu0
    %v2904 = vadd.f32 %v2828, %v2901
    %v2905 = vxor.u32 %v2904, 2147483648
    %v2906 = vmul.f32 %v2905, 1.442695
    %v2907 = vpow.pop %v2906
    %v2908 = vadd.f32 %v2907, 1.0
    %v2909 = vrcp.pop %v2908
    %v2910 = vmul.f32 1.0, %v2909
    %v2911 = vtanh.pop %v2904
    %v2912 = vmul.f32 %v2910, %v2505
    %2914 = vrot.lane.b32.xlu0 %v2911, 32
    %v2915 = vpop.permute.xlu0 %2914
    %v2917 = vmul.f32 %v2910, %v2915
    %2919 = vrot.lane.b32.xlu0 %v2917, 32
    %v2920 = vpop.permute.xlu0 %2919
    %v2922 = vadd.f32 %v2912, %v2920
    %v2923 = vtanh.pop %v2922
    %2925 = vrot.lane.b32.xlu0 %v2923, 32
    %v2926 = vpop.permute.xlu0 %2925
    %v2928 = vmul.f32 %v2910, %v2926
    %2929 = vmatprep.subr.mxu0 %v1802
    %2930 = vmatpush1.msra.mxu0 %v1801
    %2931 = vmatprep.subr.mxu0 %v1806
    %2932 = vmatpush1.msra.mxu0 %v1805
    %2933 = vmatprep.subr.mxu0 %v1810
    %2934 = vmatpush1.msra.mxu0 %v1809
    %2935 = vmatprep.subr.mxu0 %v1814
    %2936 = vmatpush1.msra.mxu0 %v1813
    %2937 = vmatprep.subr.mxu0 %v1818
    %2938 = vmatpush1.msra.mxu0 %v1817
    %2939 = vmatprep.subr.mxu0 %v1822
    %2940 = vmatpush1.msra.mxu0 %v1821
    %2941 = vmatprep.subr.mxu0 %v1826
    %2942 = vmatpush1.msra.mxu0 %v1825
    %2943 = vmatprep.subr.mxu0 %v1830
    %2944 = vmatpush1.msra.mxu0 %v1829
    %2945 = vmatprep.subr.mxu0 %v1834
    %2946 = vmatpush1.msra.mxu0 %v1833
    %2947 = vmatprep.subr.mxu0 %v1838
    %2948 = vmatpush1.msra.mxu0 %v1837
    %2949 = vmatprep.subr.mxu0 %v1842
    %2950 = vmatpush1.msra.mxu0 %v1841
    %2951 = vmatprep.subr.mxu0 %v1846
    %2952 = vmatpush1.msra.mxu0 %v1845
    %2953 = vmatprep.subr.mxu0 %v1850
    %2954 = vmatpush1.msra.mxu0 %v1849
    %2955 = vmatprep.subr.mxu0 %v1854
    %2956 = vmatpush1.msra.mxu0 %v1853
    %2957 = vmatprep.subr.mxu0 %v1858
    %2958 = vmatpush1.msra.mxu0 %v1857
    %2959 = vmatprep.subr.mxu0 %v1862
    %2960 = vmatpush1.msra.mxu0 %v1861
    %2961 = vmatprep.subr.mxu0 0.0
    %2962 = vmatpush1.msra.mxu0 0.0
    %2963 = vmatprep.subr.mxu0 0.0
    %2964 = vmatpush1.msra.mxu0 0.0
    %2965 = vmatprep.subr.mxu0 0.0
    %2966 = vmatpush1.msra.mxu0 0.0
    %2967 = vmatprep.subr.mxu0 0.0
    %2968 = vmatpush1.msra.mxu0 0.0
    %2969 = vmatprep.subr.mxu0 0.0
    %2970 = vmatpush1.msra.mxu0 0.0
    %2971 = vmatprep.subr.mxu0 0.0
    %2972 = vmatpush1.msra.mxu0 0.0
    %2973 = vmatprep.subr.mxu0 0.0
    %2974 = vmatpush1.msra.mxu0 0.0
    %2975 = vmatprep.subr.mxu0 0.0
    %2976 = vmatpush1.msra.mxu0 0.0
    %2977 = vmatprep.subr.mxu0 0.0
    %2978 = vmatpush1.msra.mxu0 0.0
    %2979 = vmatprep.subr.mxu0 0.0
    %2980 = vmatpush1.msra.mxu0 0.0
    %2981 = vmatprep.subr.mxu0 0.0
    %2982 = vmatpush1.msra.mxu0 0.0
    %2983 = vmatprep.subr.mxu0 0.0
    %2984 = vmatpush1.msra.mxu0 0.0
    %2985 = vmatprep.subr.mxu0 0.0
    %2986 = vmatpush1.msra.mxu0 0.0
    %2987 = vmatprep.subr.mxu0 0.0
    %2988 = vmatpush1.msra.mxu0 0.0
    %2989 = vmatprep.subr.mxu0 0.0
    %2990 = vmatpush1.msra.mxu0 0.0
    %2991 = vmatprep.subr.mxu0 0.0
    %2992 = vmatpush1.msra.mxu0 0.0
    %2993 = vmatprep.mubr.f32.mxu0 0.0
    %2994 = vmatmul.mubr.f32.gmra.mrb[0].mxu0 %v2823
    %v2995 = vpop.f32.mrb[0].mxu0
    %v2996 = vadd.f32 0.0, %v2995
    %v2997 = vpop.f32.mrb[0].mxu0
    %v2998 = vadd.f32 0.0, %v2997
    %2999 = vdwg.mxu0
    %3000 = vmatprep.subr.mxu0 %v1804
    %3001 = vmatpush1.msra.mxu0 %v1803
    %3002 = vmatprep.subr.mxu0 %v1808
    %3003 = vmatpush1.msra.mxu0 %v1807
    %3004 = vmatprep.subr.mxu0 %v1812
    %3005 = vmatpush1.msra.mxu0 %v1811
    %3006 = vmatprep.subr.mxu0 %v1816
    %3007 = vmatpush1.msra.mxu0 %v1815
    %3008 = vmatprep.subr.mxu0 %v1820
    %3009 = vmatpush1.msra.mxu0 %v1819
    %3010 = vmatprep.subr.mxu0 %v1824
    %3011 = vmatpush1.msra.mxu0 %v1823
    %3012 = vmatprep.subr.mxu0 %v1828
    %3013 = vmatpush1.msra.mxu0 %v1827
    %3014 = vmatprep.subr.mxu0 %v1832
    %3015 = vmatpush1.msra.mxu0 %v1831
    %3016 = vmatprep.subr.mxu0 %v1836
    %3017 = vmatpush1.msra.mxu0 %v1835
    %3018 = vmatprep.subr.mxu0 %v1840
    %3019 = vmatpush1.msra.mxu0 %v1839
    %3020 = vmatprep.subr.mxu0 %v1844
    %3021 = vmatpush1.msra.mxu0 %v1843
    %3022 = vmatprep.subr.mxu0 %v1848
    %3023 = vmatpush1.msra.mxu0 %v1847
    %3024 = vmatprep.subr.mxu0 %v1852
    %3025 = vmatpush1.msra.mxu0 %v1851
    %3026 = vmatprep.subr.mxu0 %v1856
    %3027 = vmatpush1.msra.mxu0 %v1855
    %3028 = vmatprep.subr.mxu0 %v1860
    %3029 = vmatpush1.msra.mxu0 %v1859
    %3030 = vmatprep.subr.mxu0 %v1864
    %3031 = vmatpush1.msra.mxu0 %v1863
    %3032 = vmatprep.subr.mxu0 0.0
    %3033 = vmatpush1.msra.mxu0 0.0
    %3034 = vmatprep.subr.mxu0 0.0
    %3035 = vmatpush1.msra.mxu0 0.0
    %3036 = vmatprep.subr.mxu0 0.0
    %3037 = vmatpush1.msra.mxu0 0.0
    %3038 = vmatprep.subr.mxu0 0.0
    %3039 = vmatpush1.msra.mxu0 0.0
    %3040 = vmatprep.subr.mxu0 0.0
    %3041 = vmatpush1.msra.mxu0 0.0
    %3042 = vmatprep.subr.mxu0 0.0
    %3043 = vmatpush1.msra.mxu0 0.0
    %3044 = vmatprep.subr.mxu0 0.0
    %3045 = vmatpush1.msra.mxu0 0.0
    %3046 = vmatprep.subr.mxu0 0.0
    %3047 = vmatpush1.msra.mxu0 0.0
    %3048 = vmatprep.subr.mxu0 0.0
    %3049 = vmatpush1.msra.mxu0 0.0
    %3050 = vmatprep.subr.mxu0 0.0
    %3051 = vmatpush1.msra.mxu0 0.0
    %3052 = vmatprep.subr.mxu0 0.0
    %3053 = vmatpush1.msra.mxu0 0.0
    %3054 = vmatprep.subr.mxu0 0.0
    %3055 = vmatpush1.msra.mxu0 0.0
    %3056 = vmatprep.subr.mxu0 0.0
    %3057 = vmatpush1.msra.mxu0 0.0
    %3058 = vmatprep.subr.mxu0 0.0
    %3059 = vmatpush1.msra.mxu0 0.0
    %3060 = vmatprep.subr.mxu0 0.0
    %3061 = vmatpush1.msra.mxu0 0.0
    %3062 = vmatprep.subr.mxu0 0.0
    %3063 = vmatpush1.msra.mxu0 0.0
    %3064 = vmatprep.mubr.f32.mxu0 0.0
    %3065 = vmatmul.mubr.f32.gmra.mrb[0].mxu0 %v2823
    %v3066 = vpop.f32.mrb[0].mxu0
    %v3067 = vadd.f32 0.0, %v3066
    %v3068 = vpop.f32.mrb[0].mxu0
    %v3069 = vadd.f32 0.0, %v3068
    %3070 = vdwg.mxu0
    %3071 = vmatprep.subr.mxu0 %v1786
    %3072 = vmatpush1.msra.mxu0 %v1785
    %3073 = vmatprep.subr.mxu0 %v1790
    %3074 = vmatpush1.msra.mxu0 %v1789
    %3075 = vmatprep.subr.mxu0 %v1794
    %3076 = vmatpush1.msra.mxu0 %v1793
    %3077 = vmatprep.subr.mxu0 %v1798
    %3078 = vmatpush1.msra.mxu0 %v1797
    %3079 = vmatprep.subr.mxu0 0.0
    %3080 = vmatpush1.msra.mxu0 0.0
    %3081 = vmatprep.subr.mxu0 0.0
    %3082 = vmatpush1.msra.mxu0 0.0
    %3083 = vmatprep.subr.mxu0 0.0
    %3084 = vmatpush1.msra.mxu0 0.0
    %3085 = vmatprep.subr.mxu0 0.0
    %3086 = vmatpush1.msra.mxu0 0.0
    %3087 = vmatprep.subr.mxu0 0.0
    %3088 = vmatpush1.msra.mxu0 0.0
    %3089 = vmatprep.subr.mxu0 0.0
    %3090 = vmatpush1.msra.mxu0 0.0
    %3091 = vmatprep.subr.mxu0 0.0
    %3092 = vmatpush1.msra.mxu0 0.0
    %3093 = vmatprep.subr.mxu0 0.0
    %3094 = vmatpush1.msra.mxu0 0.0
    %3095 = vmatprep.subr.mxu0 0.0
    %3096 = vmatpush1.msra.mxu0 0.0
    %3097 = vmatprep.subr.mxu0 0.0
    %3098 = vmatpush1.msra.mxu0 0.0
    %3099 = vmatprep.subr.mxu0 0.0
    %3100 = vmatpush1.msra.mxu0 0.0
    %3101 = vmatprep.subr.mxu0 0.0
    %3102 = vmatpush1.msra.mxu0 0.0
    %3103 = vmatprep.subr.mxu0 0.0
    %3104 = vmatpush1.msra.mxu0 0.0
    %3105 = vmatprep.subr.mxu0 0.0
    %3106 = vmatpush1.msra.mxu0 0.0
    %3107 = vmatprep.subr.mxu0 0.0
    %3108 = vmatpush1.msra.mxu0 0.0
    %3109 = vmatprep.subr.mxu0 0.0
    %3110 = vmatpush1.msra.mxu0 0.0
    %3111 = vmatprep.subr.mxu0 0.0
    %3112 = vmatpush1.msra.mxu0 0.0
    %3113 = vmatprep.subr.mxu0 0.0
    %3114 = vmatpush1.msra.mxu0 0.0
    %3115 = vmatprep.subr.mxu0 0.0
    %3116 = vmatpush1.msra.mxu0 0.0
    %3117 = vmatprep.subr.mxu0 0.0
    %3118 = vmatpush1.msra.mxu0 0.0
    %3119 = vmatprep.subr.mxu0 0.0
    %3120 = vmatpush1.msra.mxu0 0.0
    %3121 = vmatprep.subr.mxu0 0.0
    %3122 = vmatpush1.msra.mxu0 0.0
    %3123 = vmatprep.subr.mxu0 0.0
    %3124 = vmatpush1.msra.mxu0 0.0
    %3125 = vmatprep.subr.mxu0 0.0
    %3126 = vmatpush1.msra.mxu0 0.0
    %3127 = vmatprep.subr.mxu0 0.0
    %3128 = vmatpush1.msra.mxu0 0.0
    %3129 = vmatprep.subr.mxu0 0.0
    %3130 = vmatpush1.msra.mxu0 0.0
    %3131 = vmatprep.subr.mxu0 0.0
    %3132 = vmatpush1.msra.mxu0 0.0
    %3133 = vmatprep.subr.mxu0 0.0
    %3134 = vmatpush1.msra.mxu0 0.0
    %3135 = vmatprep.mubr.f32.mxu0 0.0
    %3136 = vmatmul.mubr.f32.gmra.mrb[0].mxu0 %v2832
    %v3137 = vpop.f32.mrb[0].mxu0
    %v3138 = vadd.f32 %v2996, %v3137
    %v3139 = vpop.f32.mrb[0].mxu0
    %v3140 = vadd.f32 %v2998, %v3139
    %3141 = vdwg.mxu0
    %3142 = vmatprep.subr.mxu0 %v1788
    %3143 = vmatpush1.msra.mxu0 %v1787
    %3144 = vmatprep.subr.mxu0 %v1792
    %3145 = vmatpush1.msra.mxu0 %v1791
    %3146 = vmatprep.subr.mxu0 %v1796
    %3147 = vmatpush1.msra.mxu0 %v1795
    %3148 = vmatprep.subr.mxu0 %v1800
    %3149 = vmatpush1.msra.mxu0 %v1799
    %3150 = vmatprep.subr.mxu0 0.0
    %3151 = vmatpush1.msra.mxu0 0.0
    %3152 = vmatprep.subr.mxu0 0.0
    %3153 = vmatpush1.msra.mxu0 0.0
    %3154 = vmatprep.subr.mxu0 0.0
    %3155 = vmatpush1.msra.mxu0 0.0
    %3156 = vmatprep.subr.mxu0 0.0
    %3157 = vmatpush1.msra.mxu0 0.0
    %3158 = vmatprep.subr.mxu0 0.0
    %3159 = vmatpush1.msra.mxu0 0.0
    %3160 = vmatprep.subr.mxu0 0.0
    %3161 = vmatpush1.msra.mxu0 0.0
    %3162 = vmatprep.subr.mxu0 0.0
    %3163 = vmatpush1.msra.mxu0 0.0
    %3164 = vmatprep.subr.mxu0 0.0
    %3165 = vmatpush1.msra.mxu0 0.0
    %3166 = vmatprep.subr.mxu0 0.0
    %3167 = vmatpush1.msra.mxu0 0.0
    %3168 = vmatprep.subr.mxu0 0.0
    %3169 = vmatpush1.msra.mxu0 0.0
    %3170 = vmatprep.subr.mxu0 0.0
    %3171 = vmatpush1.msra.mxu0 0.0
    %3172 = vmatprep.subr.mxu0 0.0
    %3173 = vmatpush1.msra.mxu0 0.0
    %3174 = vmatprep.subr.mxu0 0.0
    %3175 = vmatpush1.msra.mxu0 0.0
    %3176 = vmatprep.subr.mxu0 0.0
    %3177 = vmatpush1.msra.mxu0 0.0
    %3178 = vmatprep.subr.mxu0 0.0
    %3179 = vmatpush1.msra.mxu0 0.0
    %3180 = vmatprep.subr.mxu0 0.0
    %3181 = vmatpush1.msra.mxu0 0.0
    %3182 = vmatprep.subr.mxu0 0.0
    %3183 = vmatpush1.msra.mxu0 0.0
    %3184 = vmatprep.subr.mxu0 0.0
    %3185 = vmatpush1.msra.mxu0 0.0
    %3186 = vmatprep.subr.mxu0 0.0
    %3187 = vmatpush1.msra.mxu0 0.0
    %3188 = vmatprep.subr.mxu0 0.0
    %3189 = vmatpush1.msra.mxu0 0.0
    %3190 = vmatprep.subr.mxu0 0.0
    %3191 = vmatpush1.msra.mxu0 0.0
    %3192 = vmatprep.subr.mxu0 0.0
    %3193 = vmatpush1.msra.mxu0 0.0
    %3194 = vmatprep.subr.mxu0 0.0
    %3195 = vmatpush1.msra.mxu0 0.0
    %3196 = vmatprep.subr.mxu0 0.0
    %3197 = vmatpush1.msra.mxu0 0.0
    %3198 = vmatprep.subr.mxu0 0.0
    %3199 = vmatpush1.msra.mxu0 0.0
    %3200 = vmatprep.subr.mxu0 0.0
    %3201 = vmatpush1.msra.mxu0 0.0
    %3202 = vmatprep.subr.mxu0 0.0
    %3203 = vmatpush1.msra.mxu0 0.0
    %3204 = vmatprep.subr.mxu0 0.0
    %3205 = vmatpush1.msra.mxu0 0.0
    %3206 = vmatprep.mubr.f32.mxu0 0.0
    %3207 = vmatmul.mubr.f32.gmra.mrb[0].mxu0 %v2832
    %v3208 = vpop.f32.mrb[0].mxu0
    %v3209 = vadd.f32 %v3067, %v3208
    %v3210 = vpop.f32.mrb[0].mxu0
    %v3211 = vadd.f32 %v3069, %v3210
    %3212 = vdwg.mxu0
    %v3213 = vadd.f32 %v3138, %v2362
    %v3214 = vadd.f32 %v3140, %v2366
    %v3215 = vadd.f32 %v3209, %v2370
    %v3216 = vadd.f32 %v3211, %v2374
    %v3217 = vxor.u32 %v3213, 2147483648
    %v3218 = vxor.u32 %v3214, 2147483648
    %v3219 = vxor.u32 %v3215, 2147483648
    %v3220 = vmul.f32 %v3217, 1.442695
    %v3221 = vpow.pop %v3220
    %v3222 = vmul.f32 %v3218, 1.442695
    %v3223 = vpow.pop %v3222
    %v3224 = vmul.f32 %v3219, 1.442695
    %v3225 = vpow.pop %v3224
    %v3226 = vadd.f32 %v3221, 1.0
    %v3227 = vadd.f32 %v3223, 1.0
    %v3228 = vadd.f32 %v3225, 1.0
    %v3229 = vrcp.pop %v3226
    %v3230 = vmul.f32 1.0, %v3229
    %v3231 = vrcp.pop %v3227
    %v3232 = vmul.f32 1.0, %v3231
    %v3233 = vrcp.pop %v3228
    %v3234 = vmul.f32 1.0, %v3233
    %v3235 = vtanh.pop %v3216
    %v3236 = vmul.f32 %v3232, %v2821
    %v3237 = vmul.f32 %v3230, %v3235
    %v3238 = vadd.f32 %v3236, %v3237
    %v3239 = vtanh.pop %v3238
    %v3240 = vmul.f32 %v3234, %v3239
    %v3241 = vrot.slane %v1673, 4
    %v3243 = vrot.slane %v1778, 3
    %v3245 = vsel %vm1870, %v3241, %v3243
    %3247 = vrot.lane.b32.xlu0 %v2928, 64
    %v3248 = vpop.permute.xlu0 %3247
    %v3249 = vsel %vm350, %v3248, 0
    %3251 = vmatprep.subr.mxu0 0.0
    %3252 = vmatpush1.msra.mxu0 %v1781
    %3253 = vmatprep.subr.mxu0 0.0
    %3254 = vmatpush1.msra.mxu0 %v1782
    %3255 = vmatprep.subr.mxu0 0.0
    %3256 = vmatpush1.msra.mxu0 %v1783
    %3257 = vmatprep.subr.mxu0 0.0
    %3258 = vmatpush1.msra.mxu0 %v1784
    %3259 = vmatprep.subr.mxu0 0.0
    %3260 = vmatpush1.msra.mxu0 0.0
    %3261 = vmatprep.subr.mxu0 0.0
    %3262 = vmatpush1.msra.mxu0 0.0
    %3263 = vmatprep.subr.mxu0 0.0
    %3264 = vmatpush1.msra.mxu0 0.0
    %3265 = vmatprep.subr.mxu0 0.0
    %3266 = vmatpush1.msra.mxu0 0.0
    %3267 = vmatprep.subr.mxu0 0.0
    %3268 = vmatpush1.msra.mxu0 0.0
    %3269 = vmatprep.subr.mxu0 0.0
    %3270 = vmatpush1.msra.mxu0 0.0
    %3271 = vmatprep.subr.mxu0 0.0
    %3272 = vmatpush1.msra.mxu0 0.0
    %3273 = vmatprep.subr.mxu0 0.0
    %3274 = vmatpush1.msra.mxu0 0.0
    %3275 = vmatprep.subr.mxu0 0.0
    %3276 = vmatpush1.msra.mxu0 0.0
    %3277 = vmatprep.subr.mxu0 0.0
    %3278 = vmatpush1.msra.mxu0 0.0
    %3279 = vmatprep.subr.mxu0 0.0
    %3280 = vmatpush1.msra.mxu0 0.0
    %3281 = vmatprep.subr.mxu0 0.0
    %3282 = vmatpush1.msra.mxu0 0.0
    %3283 = vmatprep.subr.mxu0 0.0
    %3284 = vmatpush1.msra.mxu0 0.0
    %3285 = vmatprep.subr.mxu0 0.0
    %3286 = vmatpush1.msra.mxu0 0.0
    %3287 = vmatprep.subr.mxu0 0.0
    %3288 = vmatpush1.msra.mxu0 0.0
    %3289 = vmatprep.subr.mxu0 0.0
    %3290 = vmatpush1.msra.mxu0 0.0
    %3291 = vmatprep.subr.mxu0 0.0
    %3292 = vmatpush1.msra.mxu0 0.0
    %3293 = vmatprep.subr.mxu0 0.0
    %3294 = vmatpush1.msra.mxu0 0.0
    %3295 = vmatprep.subr.mxu0 0.0
    %3296 = vmatpush1.msra.mxu0 0.0
    %3297 = vmatprep.subr.mxu0 0.0
    %3298 = vmatpush1.msra.mxu0 0.0
    %3299 = vmatprep.subr.mxu0 0.0
    %3300 = vmatpush1.msra.mxu0 0.0
    %3301 = vmatprep.subr.mxu0 0.0
    %3302 = vmatpush1.msra.mxu0 0.0
    %3303 = vmatprep.subr.mxu0 0.0
    %3304 = vmatpush1.msra.mxu0 0.0
    %3305 = vmatprep.subr.mxu0 0.0
    %3306 = vmatpush1.msra.mxu0 0.0
    %3307 = vmatprep.subr.mxu0 0.0
    %3308 = vmatpush1.msra.mxu0 0.0
    %3309 = vmatprep.subr.mxu0 0.0
    %3310 = vmatpush1.msra.mxu0 0.0
    %3311 = vmatprep.subr.mxu0 0.0
    %3312 = vmatpush1.msra.mxu0 0.0
    %3313 = vmatprep.subr.mxu0 0.0
    %3314 = vmatpush1.msra.mxu0 0.0
    %3315 = vmatprep.mubr.f32.mxu0 0.0
    %3316 = vmatmul.mubr.f32.gmra.mrb[0].mxu0 %v3249
    %v3317 = vpop.f32.mrb[0].mxu0
    %v3318 = vadd.f32 0.0, %v3317
    %v3319 = vpop.f32.mrb[0].mxu0
    %3320 = vdwg.mxu0
    %v3321 = vadd.f32 %v3245, %v3318
    %v3322 = vxor.u32 %v3321, 2147483648
    %v3323 = vmul.f32 %v3322, 1.442695
    %v3324 = vpow.pop %v3323
    %v3325 = vadd.f32 %v3324, 1.0
    %v3326 = vrcp.pop %v3325
    %v3327 = vmul.f32 1.0, %v3326
    %v3328 = vtanh.pop %v3321
    %v3329 = vmul.f32 %v3327, %v2922
    %3331 = vrot.lane.b32.xlu0 %v3328, 32
    %v3332 = vpop.permute.xlu0 %3331
    %v3334 = vmul.f32 %v3327, %v3332
    %3336 = vrot.lane.b32.xlu0 %v3334, 32
    %v3337 = vpop.permute.xlu0 %3336
    %v3339 = vadd.f32 %v3329, %v3337
    %v3340 = vtanh.pop %v3339
    %3342 = vrot.lane.b32.xlu0 %v3340, 32
    %v3343 = vpop.permute.xlu0 %3342
    %v3345 = vmul.f32 %v3327, %v3343
    %3346 = vmatprep.subr.mxu0 %v1802
    %3347 = vmatpush1.msra.mxu0 %v1801
    %3348 = vmatprep.subr.mxu0 %v1806
    %3349 = vmatpush1.msra.mxu0 %v1805
    %3350 = vmatprep.subr.mxu0 %v1810
    %3351 = vmatpush1.msra.mxu0 %v1809
    %3352 = vmatprep.subr.mxu0 %v1814
    %3353 = vmatpush1.msra.mxu0 %v1813
    %3354 = vmatprep.subr.mxu0 %v1818
    %3355 = vmatpush1.msra.mxu0 %v1817
    %3356 = vmatprep.subr.mxu0 %v1822
    %3357 = vmatpush1.msra.mxu0 %v1821
    %3358 = vmatprep.subr.mxu0 %v1826
    %3359 = vmatpush1.msra.mxu0 %v1825
    %3360 = vmatprep.subr.mxu0 %v1830
    %3361 = vmatpush1.msra.mxu0 %v1829
    %3362 = vmatprep.subr.mxu0 %v1834
    %3363 = vmatpush1.msra.mxu0 %v1833
    %3364 = vmatprep.subr.mxu0 %v1838
    %3365 = vmatpush1.msra.mxu0 %v1837
    %3366 = vmatprep.subr.mxu0 %v1842
    %3367 = vmatpush1.msra.mxu0 %v1841
    %3368 = vmatprep.subr.mxu0 %v1846
    %3369 = vmatpush1.msra.mxu0 %v1845
    %3370 = vmatprep.subr.mxu0 %v1850
    %3371 = vmatpush1.msra.mxu0 %v1849
    %3372 = vmatprep.subr.mxu0 %v1854
    %3373 = vmatpush1.msra.mxu0 %v1853
    %3374 = vmatprep.subr.mxu0 %v1858
    %3375 = vmatpush1.msra.mxu0 %v1857
    %3376 = vmatprep.subr.mxu0 %v1862
    %3377 = vmatpush1.msra.mxu0 %v1861
    %3378 = vmatprep.subr.mxu0 0.0
    %3379 = vmatpush1.msra.mxu0 0.0
    %3380 = vmatprep.subr.mxu0 0.0
    %3381 = vmatpush1.msra.mxu0 0.0
    %3382 = vmatprep.subr.mxu0 0.0
    %3383 = vmatpush1.msra.mxu0 0.0
    %3384 = vmatprep.subr.mxu0 0.0
    %3385 = vmatpush1.msra.mxu0 0.0
    %3386 = vmatprep.subr.mxu0 0.0
    %3387 = vmatpush1.msra.mxu0 0.0
    %3388 = vmatprep.subr.mxu0 0.0
    %3389 = vmatpush1.msra.mxu0 0.0
    %3390 = vmatprep.subr.mxu0 0.0
    %3391 = vmatpush1.msra.mxu0 0.0
    %3392 = vmatprep.subr.mxu0 0.0
    %3393 = vmatpush1.msra.mxu0 0.0
    %3394 = vmatprep.subr.mxu0 0.0
    %3395 = vmatpush1.msra.mxu0 0.0
    %3396 = vmatprep.subr.mxu0 0.0
    %3397 = vmatpush1.msra.mxu0 0.0
    %3398 = vmatprep.subr.mxu0 0.0
    %3399 = vmatpush1.msra.mxu0 0.0
    %3400 = vmatprep.subr.mxu0 0.0
    %3401 = vmatpush1.msra.mxu0 0.0
    %3402 = vmatprep.subr.mxu0 0.0
    %3403 = vmatpush1.msra.mxu0 0.0
    %3404 = vmatprep.subr.mxu0 0.0
    %3405 = vmatpush1.msra.mxu0 0.0
    %3406 = vmatprep.subr.mxu0 0.0
    %3407 = vmatpush1.msra.mxu0 0.0
    %3408 = vmatprep.subr.mxu0 0.0
    %3409 = vmatpush1.msra.mxu0 0.0
    %3410 = vmatprep.mubr.f32.mxu0 0.0
    %3411 = vmatmul.mubr.f32.gmra.mrb[0].mxu0 %v3240
    %v3412 = vpop.f32.mrb[0].mxu0
    %v3413 = vadd.f32 0.0, %v3412
    %v3414 = vpop.f32.mrb[0].mxu0
    %v3415 = vadd.f32 0.0, %v3414
    %3416 = vdwg.mxu0
    %3417 = vmatprep.subr.mxu0 %v1804
    %3418 = vmatpush1.msra.mxu0 %v1803
    %3419 = vmatprep.subr.mxu0 %v1808
    %3420 = vmatpush1.msra.mxu0 %v1807
    %3421 = vmatprep.subr.mxu0 %v1812
    %3422 = vmatpush1.msra.mxu0 %v1811
    %3423 = vmatprep.subr.mxu0 %v1816
    %3424 = vmatpush1.msra.mxu0 %v1815
    %3425 = vmatprep.subr.mxu0 %v1820
    %3426 = vmatpush1.msra.mxu0 %v1819
    %3427 = vmatprep.subr.mxu0 %v1824
    %3428 = vmatpush1.msra.mxu0 %v1823
    %3429 = vmatprep.subr.mxu0 %v1828
    %3430 = vmatpush1.msra.mxu0 %v1827
    %3431 = vmatprep.subr.mxu0 %v1832
    %3432 = vmatpush1.msra.mxu0 %v1831
    %3433 = vmatprep.subr.mxu0 %v1836
    %3434 = vmatpush1.msra.mxu0 %v1835
    %3435 = vmatprep.subr.mxu0 %v1840
    %3436 = vmatpush1.msra.mxu0 %v1839
    %3437 = vmatprep.subr.mxu0 %v1844
    %3438 = vmatpush1.msra.mxu0 %v1843
    %3439 = vmatprep.subr.mxu0 %v1848
    %3440 = vmatpush1.msra.mxu0 %v1847
    %3441 = vmatprep.subr.mxu0 %v1852
    %3442 = vmatpush1.msra.mxu0 %v1851
    %3443 = vmatprep.subr.mxu0 %v1856
    %3444 = vmatpush1.msra.mxu0 %v1855
    %3445 = vmatprep.subr.mxu0 %v1860
    %3446 = vmatpush1.msra.mxu0 %v1859
    %3447 = vmatprep.subr.mxu0 %v1864
    %3448 = vmatpush1.msra.mxu0 %v1863
    %3449 = vmatprep.subr.mxu0 0.0
    %3450 = vmatpush1.msra.mxu0 0.0
    %3451 = vmatprep.subr.mxu0 0.0
    %3452 = vmatpush1.msra.mxu0 0.0
    %3453 = vmatprep.subr.mxu0 0.0
    %3454 = vmatpush1.msra.mxu0 0.0
    %3455 = vmatprep.subr.mxu0 0.0
    %3456 = vmatpush1.msra.mxu0 0.0
    %3457 = vmatprep.subr.mxu0 0.0
    %3458 = vmatpush1.msra.mxu0 0.0
    %3459 = vmatprep.subr.mxu0 0.0
    %3460 = vmatpush1.msra.mxu0 0.0
    %3461 = vmatprep.subr.mxu0 0.0
    %3462 = vmatpush1.msra.mxu0 0.0
    %3463 = vmatprep.subr.mxu0 0.0
    %3464 = vmatpush1.msra.mxu0 0.0
    %3465 = vmatprep.subr.mxu0 0.0
    %3466 = vmatpush1.msra.mxu0 0.0
    %3467 = vmatprep.subr.mxu0 0.0
    %3468 = vmatpush1.msra.mxu0 0.0
    %3469 = vmatprep.subr.mxu0 0.0
    %3470 = vmatpush1.msra.mxu0 0.0
    %3471 = vmatprep.subr.mxu0 0.0
    %3472 = vmatpush1.msra.mxu0 0.0
    %3473 = vmatprep.subr.mxu0 0.0
    %3474 = vmatpush1.msra.mxu0 0.0
    %3475 = vmatprep.subr.mxu0 0.0
    %3476 = vmatpush1.msra.mxu0 0.0
    %3477 = vmatprep.subr.mxu0 0.0
    %3478 = vmatpush1.msra.mxu0 0.0
    %3479 = vmatprep.subr.mxu0 0.0
    %3480 = vmatpush1.msra.mxu0 0.0
    %3481 = vmatprep.mubr.f32.mxu0 0.0
    %3482 = vmatmul.mubr.f32.gmra.mrb[0].mxu0 %v3240
    %v3483 = vpop.f32.mrb[0].mxu0
    %v3484 = vadd.f32 0.0, %v3483
    %v3485 = vpop.f32.mrb[0].mxu0
    %v3486 = vadd.f32 0.0, %v3485
    %3487 = vdwg.mxu0
    %3488 = vmatprep.subr.mxu0 %v1786
    %3489 = vmatpush1.msra.mxu0 %v1785
    %3490 = vmatprep.subr.mxu0 %v1790
    %3491 = vmatpush1.msra.mxu0 %v1789
    %3492 = vmatprep.subr.mxu0 %v1794
    %3493 = vmatpush1.msra.mxu0 %v1793
    %3494 = vmatprep.subr.mxu0 %v1798
    %3495 = vmatpush1.msra.mxu0 %v1797
    %3496 = vmatprep.subr.mxu0 0.0
    %3497 = vmatpush1.msra.mxu0 0.0
    %3498 = vmatprep.subr.mxu0 0.0
    %3499 = vmatpush1.msra.mxu0 0.0
    %3500 = vmatprep.subr.mxu0 0.0
    %3501 = vmatpush1.msra.mxu0 0.0
    %3502 = vmatprep.subr.mxu0 0.0
    %3503 = vmatpush1.msra.mxu0 0.0
    %3504 = vmatprep.subr.mxu0 0.0
    %3505 = vmatpush1.msra.mxu0 0.0
    %3506 = vmatprep.subr.mxu0 0.0
    %3507 = vmatpush1.msra.mxu0 0.0
    %3508 = vmatprep.subr.mxu0 0.0
    %3509 = vmatpush1.msra.mxu0 0.0
    %3510 = vmatprep.subr.mxu0 0.0
    %3511 = vmatpush1.msra.mxu0 0.0
    %3512 = vmatprep.subr.mxu0 0.0
    %3513 = vmatpush1.msra.mxu0 0.0
    %3514 = vmatprep.subr.mxu0 0.0
    %3515 = vmatpush1.msra.mxu0 0.0
    %3516 = vmatprep.subr.mxu0 0.0
    %3517 = vmatpush1.msra.mxu0 0.0
    %3518 = vmatprep.subr.mxu0 0.0
    %3519 = vmatpush1.msra.mxu0 0.0
    %3520 = vmatprep.subr.mxu0 0.0
    %3521 = vmatpush1.msra.mxu0 0.0
    %3522 = vmatprep.subr.mxu0 0.0
    %3523 = vmatpush1.msra.mxu0 0.0
    %3524 = vmatprep.subr.mxu0 0.0
    %3525 = vmatpush1.msra.mxu0 0.0
    %3526 = vmatprep.subr.mxu0 0.0
    %3527 = vmatpush1.msra.mxu0 0.0
    %3528 = vmatprep.subr.mxu0 0.0
    %3529 = vmatpush1.msra.mxu0 0.0
    %3530 = vmatprep.subr.mxu0 0.0
    %3531 = vmatpush1.msra.mxu0 0.0
    %3532 = vmatprep.subr.mxu0 0.0
    %3533 = vmatpush1.msra.mxu0 0.0
    %3534 = vmatprep.subr.mxu0 0.0
    %3535 = vmatpush1.msra.mxu0 0.0
    %3536 = vmatprep.subr.mxu0 0.0
    %3537 = vmatpush1.msra.mxu0 0.0
    %3538 = vmatprep.subr.mxu0 0.0
    %3539 = vmatpush1.msra.mxu0 0.0
    %3540 = vmatprep.subr.mxu0 0.0
    %3541 = vmatpush1.msra.mxu0 0.0
    %3542 = vmatprep.subr.mxu0 0.0
    %3543 = vmatpush1.msra.mxu0 0.0
    %3544 = vmatprep.subr.mxu0 0.0
    %3545 = vmatpush1.msra.mxu0 0.0
    %3546 = vmatprep.subr.mxu0 0.0
    %3547 = vmatpush1.msra.mxu0 0.0
    %3548 = vmatprep.subr.mxu0 0.0
    %3549 = vmatpush1.msra.mxu0 0.0
    %3550 = vmatprep.subr.mxu0 0.0
    %3551 = vmatpush1.msra.mxu0 0.0
    %3552 = vmatprep.mubr.f32.mxu0 0.0
    %3553 = vmatmul.mubr.f32.gmra.mrb[0].mxu0 %v3249
    %v3554 = vpop.f32.mrb[0].mxu0
    %v3555 = vadd.f32 %v3413, %v3554
    %v3556 = vpop.f32.mrb[0].mxu0
    %v3557 = vadd.f32 %v3415, %v3556
    %3558 = vdwg.mxu0
    %3559 = vmatprep.subr.mxu0 %v1788
    %3560 = vmatpush1.msra.mxu0 %v1787
    %3561 = vmatprep.subr.mxu0 %v1792
    %3562 = vmatpush1.msra.mxu0 %v1791
    %3563 = vmatprep.subr.mxu0 %v1796
    %3564 = vmatpush1.msra.mxu0 %v1795
    %3565 = vmatprep.subr.mxu0 %v1800
    %3566 = vmatpush1.msra.mxu0 %v1799
    %3567 = vmatprep.subr.mxu0 0.0
    %3568 = vmatpush1.msra.mxu0 0.0
    %3569 = vmatprep.subr.mxu0 0.0
    %3570 = vmatpush1.msra.mxu0 0.0
    %3571 = vmatprep.subr.mxu0 0.0
    %3572 = vmatpush1.msra.mxu0 0.0
    %3573 = vmatprep.subr.mxu0 0.0
    %3574 = vmatpush1.msra.mxu0 0.0
    %3575 = vmatprep.subr.mxu0 0.0
    %3576 = vmatpush1.msra.mxu0 0.0
    %3577 = vmatprep.subr.mxu0 0.0
    %3578 = vmatpush1.msra.mxu0 0.0
    %3579 = vmatprep.subr.mxu0 0.0
    %3580 = vmatpush1.msra.mxu0 0.0
    %3581 = vmatprep.subr.mxu0 0.0
    %3582 = vmatpush1.msra.mxu0 0.0
    %3583 = vmatprep.subr.mxu0 0.0
    %3584 = vmatpush1.msra.mxu0 0.0
    %3585 = vmatprep.subr.mxu0 0.0
    %3586 = vmatpush1.msra.mxu0 0.0
    %3587 = vmatprep.subr.mxu0 0.0
    %3588 = vmatpush1.msra.mxu0 0.0
    %3589 = vmatprep.subr.mxu0 0.0
    %3590 = vmatpush1.msra.mxu0 0.0
    %3591 = vmatprep.subr.mxu0 0.0
    %3592 = vmatpush1.msra.mxu0 0.0
    %3593 = vmatprep.subr.mxu0 0.0
    %3594 = vmatpush1.msra.mxu0 0.0
    %3595 = vmatprep.subr.mxu0 0.0
    %3596 = vmatpush1.msra.mxu0 0.0
    %3597 = vmatprep.subr.mxu0 0.0
    %3598 = vmatpush1.msra.mxu0 0.0
    %3599 = vmatprep.subr.mxu0 0.0
    %3600 = vmatpush1.msra.mxu0 0.0
    %3601 = vmatprep.subr.mxu0 0.0
    %3602 = vmatpush1.msra.mxu0 0.0
    %3603 = vmatprep.subr.mxu0 0.0
    %3604 = vmatpush1.msra.mxu0 0.0
    %3605 = vmatprep.subr.mxu0 0.0
    %3606 = vmatpush1.msra.mxu0 0.0
    %3607 = vmatprep.subr.mxu0 0.0
    %3608 = vmatpush1.msra.mxu0 0.0
    %3609 = vmatprep.subr.mxu0 0.0
    %3610 = vmatpush1.msra.mxu0 0.0
    %3611 = vmatprep.subr.mxu0 0.0
    %3612 = vmatpush1.msra.mxu0 0.0
    %3613 = vmatprep.subr.mxu0 0.0
    %3614 = vmatpush1.msra.mxu0 0.0
    %3615 = vmatprep.subr.mxu0 0.0
    %3616 = vmatpush1.msra.mxu0 0.0
    %3617 = vmatprep.subr.mxu0 0.0
    %3618 = vmatpush1.msra.mxu0 0.0
    %3619 = vmatprep.subr.mxu0 0.0
    %3620 = vmatpush1.msra.mxu0 0.0
    %3621 = vmatprep.subr.mxu0 0.0
    %3622 = vmatpush1.msra.mxu0 0.0
    %3623 = vmatprep.mubr.f32.mxu0 0.0
    %3624 = vmatmul.mubr.f32.gmra.mrb[0].mxu0 %v3249
    %v3625 = vpop.f32.mrb[0].mxu0
    %v3626 = vadd.f32 %v3484, %v3625
    %v3627 = vpop.f32.mrb[0].mxu0
    %v3628 = vadd.f32 %v3486, %v3627
    %3629 = vdwg.mxu0
    %v3630 = vadd.f32 %v3555, %v2362
    %v3631 = vadd.f32 %v3557, %v2366
    %v3632 = vadd.f32 %v3626, %v2370
    %v3633 = vadd.f32 %v3628, %v2374
    %v3634 = vxor.u32 %v3630, 2147483648
    %v3635 = vxor.u32 %v3631, 2147483648
    %v3636 = vxor.u32 %v3632, 2147483648
    %v3637 = vmul.f32 %v3634, 1.442695
    %v3638 = vpow.pop %v3637
    %v3639 = vmul.f32 %v3635, 1.442695
    %v3640 = vpow.pop %v3639
    %v3641 = vmul.f32 %v3636, 1.442695
    %v3642 = vpow.pop %v3641
    %v3643 = vadd.f32 %v3638, 1.0
    %v3644 = vadd.f32 %v3640, 1.0
    %v3645 = vadd.f32 %v3642, 1.0
    %v3646 = vrcp.pop %v3643
    %v3647 = vmul.f32 1.0, %v3646
    %v3648 = vrcp.pop %v3644
    %v3649 = vmul.f32 1.0, %v3648
    %v3650 = vrcp.pop %v3645
    %v3651 = vmul.f32 1.0, %v3650
    %v3652 = vtanh.pop %v3633
    %v3653 = vmul.f32 %v3649, %v3238
    %v3654 = vmul.f32 %v3647, %v3652
    %v3655 = vadd.f32 %v3653, %v3654
    %v3656 = vtanh.pop %v3655
    %v3657 = vmul.f32 %v3651, %v3656
    %v3658 = vrot.slane %v1673, 5
    %v3660 = vrot.slane %v1778, 4
    %v3662 = vsel %vm1870, %v3658, %v3660
    %3664 = vrot.lane.b32.xlu0 %v3345, 64
    %v3665 = vpop.permute.xlu0 %3664
    %v3666 = vsel %vm350, %v3665, 0
    %3668 = vmatprep.subr.mxu0 0.0
    %3669 = vmatpush1.msra.mxu0 %v1781
    %3670 = vmatprep.subr.mxu0 0.0
    %3671 = vmatpush1.msra.mxu0 %v1782
    %3672 = vmatprep.subr.mxu0 0.0
    %3673 = vmatpush1.msra.mxu0 %v1783
    %3674 = vmatprep.subr.mxu0 0.0
    %3675 = vmatpush1.msra.mxu0 %v1784
    %3676 = vmatprep.subr.mxu0 0.0
    %3677 = vmatpush1.msra.mxu0 0.0
    %3678 = vmatprep.subr.mxu0 0.0
    %3679 = vmatpush1.msra.mxu0 0.0
    %3680 = vmatprep.subr.mxu0 0.0
    %3681 = vmatpush1.msra.mxu0 0.0
    %3682 = vmatprep.subr.mxu0 0.0
    %3683 = vmatpush1.msra.mxu0 0.0
    %3684 = vmatprep.subr.mxu0 0.0
    %3685 = vmatpush1.msra.mxu0 0.0
    %3686 = vmatprep.subr.mxu0 0.0
    %3687 = vmatpush1.msra.mxu0 0.0
    %3688 = vmatprep.subr.mxu0 0.0
    %3689 = vmatpush1.msra.mxu0 0.0
    %3690 = vmatprep.subr.mxu0 0.0
    %3691 = vmatpush1.msra.mxu0 0.0
    %3692 = vmatprep.subr.mxu0 0.0
    %3693 = vmatpush1.msra.mxu0 0.0
    %3694 = vmatprep.subr.mxu0 0.0
    %3695 = vmatpush1.msra.mxu0 0.0
    %3696 = vmatprep.subr.mxu0 0.0
    %3697 = vmatpush1.msra.mxu0 0.0
    %3698 = vmatprep.subr.mxu0 0.0
    %3699 = vmatpush1.msra.mxu0 0.0
    %3700 = vmatprep.subr.mxu0 0.0
    %3701 = vmatpush1.msra.mxu0 0.0
    %3702 = vmatprep.subr.mxu0 0.0
    %3703 = vmatpush1.msra.mxu0 0.0
    %3704 = vmatprep.subr.mxu0 0.0
    %3705 = vmatpush1.msra.mxu0 0.0
    %3706 = vmatprep.subr.mxu0 0.0
    %3707 = vmatpush1.msra.mxu0 0.0
    %3708 = vmatprep.subr.mxu0 0.0
    %3709 = vmatpush1.msra.mxu0 0.0
    %3710 = vmatprep.subr.mxu0 0.0
    %3711 = vmatpush1.msra.mxu0 0.0
    %3712 = vmatprep.subr.mxu0 0.0
    %3713 = vmatpush1.msra.mxu0 0.0
    %3714 = vmatprep.subr.mxu0 0.0
    %3715 = vmatpush1.msra.mxu0 0.0
    %3716 = vmatprep.subr.mxu0 0.0
    %3717 = vmatpush1.msra.mxu0 0.0
    %3718 = vmatprep.subr.mxu0 0.0
    %3719 = vmatpush1.msra.mxu0 0.0
    %3720 = vmatprep.subr.mxu0 0.0
    %3721 = vmatpush1.msra.mxu0 0.0
    %3722 = vmatprep.subr.mxu0 0.0
    %3723 = vmatpush1.msra.mxu0 0.0
    %3724 = vmatprep.subr.mxu0 0.0
    %3725 = vmatpush1.msra.mxu0 0.0
    %3726 = vmatprep.subr.mxu0 0.0
    %3727 = vmatpush1.msra.mxu0 0.0
    %3728 = vmatprep.subr.mxu0 0.0
    %3729 = vmatpush1.msra.mxu0 0.0
    %3730 = vmatprep.subr.mxu0 0.0
    %3731 = vmatpush1.msra.mxu0 0.0
    %3732 = vmatprep.mubr.f32.mxu0 0.0
    %3733 = vmatmul.mubr.f32.gmra.mrb[0].mxu0 %v3666
    %v3734 = vpop.f32.mrb[0].mxu0
    %v3735 = vadd.f32 0.0, %v3734
    %v3736 = vpop.f32.mrb[0].mxu0
    %3737 = vdwg.mxu0
    %v3738 = vadd.f32 %v3662, %v3735
    %v3739 = vxor.u32 %v3738, 2147483648
    %v3740 = vmul.f32 %v3739, 1.442695
    %v3741 = vpow.pop %v3740
    %v3742 = vadd.f32 %v3741, 1.0
    %v3743 = vrcp.pop %v3742
    %v3744 = vmul.f32 1.0, %v3743
    %v3745 = vtanh.pop %v3738
    %v3746 = vmul.f32 %v3744, %v3339
    %3748 = vrot.lane.b32.xlu0 %v3745, 32
    %v3749 = vpop.permute.xlu0 %3748
    %v3751 = vmul.f32 %v3744, %v3749
    %3753 = vrot.lane.b32.xlu0 %v3751, 32
    %v3754 = vpop.permute.xlu0 %3753
    %v3756 = vadd.f32 %v3746, %v3754
    %v3757 = vtanh.pop %v3756
    %3759 = vrot.lane.b32.xlu0 %v3757, 32
    %v3760 = vpop.permute.xlu0 %3759
    %v3762 = vmul.f32 %v3744, %v3760
    %3763 = vmatprep.subr.mxu0 %v1802
    %3764 = vmatpush1.msra.mxu0 %v1801
    %3765 = vmatprep.subr.mxu0 %v1806
    %3766 = vmatpush1.msra.mxu0 %v1805
    %3767 = vmatprep.subr.mxu0 %v1810
    %3768 = vmatpush1.msra.mxu0 %v1809
    %3769 = vmatprep.subr.mxu0 %v1814
    %3770 = vmatpush1.msra.mxu0 %v1813
    %3771 = vmatprep.subr.mxu0 %v1818
    %3772 = vmatpush1.msra.mxu0 %v1817
    %3773 = vmatprep.subr.mxu0 %v1822
    %3774 = vmatpush1.msra.mxu0 %v1821
    %3775 = vmatprep.subr.mxu0 %v1826
    %3776 = vmatpush1.msra.mxu0 %v1825
    %3777 = vmatprep.subr.mxu0 %v1830
    %3778 = vmatpush1.msra.mxu0 %v1829
    %3779 = vmatprep.subr.mxu0 %v1834
    %3780 = vmatpush1.msra.mxu0 %v1833
    %3781 = vmatprep.subr.mxu0 %v1838
    %3782 = vmatpush1.msra.mxu0 %v1837
    %3783 = vmatprep.subr.mxu0 %v1842
    %3784 = vmatpush1.msra.mxu0 %v1841
    %3785 = vmatprep.subr.mxu0 %v1846
    %3786 = vmatpush1.msra.mxu0 %v1845
    %3787 = vmatprep.subr.mxu0 %v1850
    %3788 = vmatpush1.msra.mxu0 %v1849
    %3789 = vmatprep.subr.mxu0 %v1854
    %3790 = vmatpush1.msra.mxu0 %v1853
    %3791 = vmatprep.subr.mxu0 %v1858
    %3792 = vmatpush1.msra.mxu0 %v1857
    %3793 = vmatprep.subr.mxu0 %v1862
    %3794 = vmatpush1.msra.mxu0 %v1861
    %3795 = vmatprep.subr.mxu0 0.0
    %3796 = vmatpush1.msra.mxu0 0.0
    %3797 = vmatprep.subr.mxu0 0.0
    %3798 = vmatpush1.msra.mxu0 0.0
    %3799 = vmatprep.subr.mxu0 0.0
    %3800 = vmatpush1.msra.mxu0 0.0
    %3801 = vmatprep.subr.mxu0 0.0
    %3802 = vmatpush1.msra.mxu0 0.0
    %3803 = vmatprep.subr.mxu0 0.0
    %3804 = vmatpush1.msra.mxu0 0.0
    %3805 = vmatprep.subr.mxu0 0.0
    %3806 = vmatpush1.msra.mxu0 0.0
    %3807 = vmatprep.subr.mxu0 0.0
    %3808 = vmatpush1.msra.mxu0 0.0
    %3809 = vmatprep.subr.mxu0 0.0
    %3810 = vmatpush1.msra.mxu0 0.0
    %3811 = vmatprep.subr.mxu0 0.0
    %3812 = vmatpush1.msra.mxu0 0.0
    %3813 = vmatprep.subr.mxu0 0.0
    %3814 = vmatpush1.msra.mxu0 0.0
    %3815 = vmatprep.subr.mxu0 0.0
    %3816 = vmatpush1.msra.mxu0 0.0
    %3817 = vmatprep.subr.mxu0 0.0
    %3818 = vmatpush1.msra.mxu0 0.0
    %3819 = vmatprep.subr.mxu0 0.0
    %3820 = vmatpush1.msra.mxu0 0.0
    %3821 = vmatprep.subr.mxu0 0.0
    %3822 = vmatpush1.msra.mxu0 0.0
    %3823 = vmatprep.subr.mxu0 0.0
    %3824 = vmatpush1.msra.mxu0 0.0
    %3825 = vmatprep.subr.mxu0 0.0
    %3826 = vmatpush1.msra.mxu0 0.0
    %3827 = vmatprep.mubr.f32.mxu0 0.0
    %3828 = vmatmul.mubr.f32.gmra.mrb[0].mxu0 %v3657
    %v3829 = vpop.f32.mrb[0].mxu0
    %v3830 = vadd.f32 0.0, %v3829
    %v3831 = vpop.f32.mrb[0].mxu0
    %v3832 = vadd.f32 0.0, %v3831
    %3833 = vdwg.mxu0
    %3834 = vmatprep.subr.mxu0 %v1804
    %3835 = vmatpush1.msra.mxu0 %v1803
    %3836 = vmatprep.subr.mxu0 %v1808
    %3837 = vmatpush1.msra.mxu0 %v1807
    %3838 = vmatprep.subr.mxu0 %v1812
    %3839 = vmatpush1.msra.mxu0 %v1811
    %3840 = vmatprep.subr.mxu0 %v1816
    %3841 = vmatpush1.msra.mxu0 %v1815
    %3842 = vmatprep.subr.mxu0 %v1820
    %3843 = vmatpush1.msra.mxu0 %v1819
    %3844 = vmatprep.subr.mxu0 %v1824
    %3845 = vmatpush1.msra.mxu0 %v1823
    %3846 = vmatprep.subr.mxu0 %v1828
    %3847 = vmatpush1.msra.mxu0 %v1827
    %3848 = vmatprep.subr.mxu0 %v1832
    %3849 = vmatpush1.msra.mxu0 %v1831
    %3850 = vmatprep.subr.mxu0 %v1836
    %3851 = vmatpush1.msra.mxu0 %v1835
    %3852 = vmatprep.subr.mxu0 %v1840
    %3853 = vmatpush1.msra.mxu0 %v1839
    %3854 = vmatprep.subr.mxu0 %v1844
    %3855 = vmatpush1.msra.mxu0 %v1843
    %3856 = vmatprep.subr.mxu0 %v1848
    %3857 = vmatpush1.msra.mxu0 %v1847
    %3858 = vmatprep.subr.mxu0 %v1852
    %3859 = vmatpush1.msra.mxu0 %v1851
    %3860 = vmatprep.subr.mxu0 %v1856
    %3861 = vmatpush1.msra.mxu0 %v1855
    %3862 = vmatprep.subr.mxu0 %v1860
    %3863 = vmatpush1.msra.mxu0 %v1859
    %3864 = vmatprep.subr.mxu0 %v1864
    %3865 = vmatpush1.msra.mxu0 %v1863
    %3866 = vmatprep.subr.mxu0 0.0
    %3867 = vmatpush1.msra.mxu0 0.0
    %3868 = vmatprep.subr.mxu0 0.0
    %3869 = vmatpush1.msra.mxu0 0.0
    %3870 = vmatprep.subr.mxu0 0.0
    %3871 = vmatpush1.msra.mxu0 0.0
    %3872 = vmatprep.subr.mxu0 0.0
    %3873 = vmatpush1.msra.mxu0 0.0
    %3874 = vmatprep.subr.mxu0 0.0
    %3875 = vmatpush1.msra.mxu0 0.0
    %3876 = vmatprep.subr.mxu0 0.0
    %3877 = vmatpush1.msra.mxu0 0.0
    %3878 = vmatprep.subr.mxu0 0.0
    %3879 = vmatpush1.msra.mxu0 0.0
    %3880 = vmatprep.subr.mxu0 0.0
    %3881 = vmatpush1.msra.mxu0 0.0
    %3882 = vmatprep.subr.mxu0 0.0
    %3883 = vmatpush1.msra.mxu0 0.0
    %3884 = vmatprep.subr.mxu0 0.0
    %3885 = vmatpush1.msra.mxu0 0.0
    %3886 = vmatprep.subr.mxu0 0.0
    %3887 = vmatpush1.msra.mxu0 0.0
    %3888 = vmatprep.subr.mxu0 0.0
    %3889 = vmatpush1.msra.mxu0 0.0
    %3890 = vmatprep.subr.mxu0 0.0
    %3891 = vmatpush1.msra.mxu0 0.0
    %3892 = vmatprep.subr.mxu0 0.0
    %3893 = vmatpush1.msra.mxu0 0.0
    %3894 = vmatprep.subr.mxu0 0.0
    %3895 = vmatpush1.msra.mxu0 0.0
    %3896 = vmatprep.subr.mxu0 0.0
    %3897 = vmatpush1.msra.mxu0 0.0
    %3898 = vmatprep.mubr.f32.mxu0 0.0
    %3899 = vmatmul.mubr.f32.gmra.mrb[0].mxu0 %v3657
    %v3900 = vpop.f32.mrb[0].mxu0
    %v3901 = vadd.f32 0.0, %v3900
    %v3902 = vpop.f32.mrb[0].mxu0
    %v3903 = vadd.f32 0.0, %v3902
    %3904 = vdwg.mxu0
    %3905 = vmatprep.subr.mxu0 %v1786
    %3906 = vmatpush1.msra.mxu0 %v1785
    %3907 = vmatprep.subr.mxu0 %v1790
    %3908 = vmatpush1.msra.mxu0 %v1789
    %3909 = vmatprep.subr.mxu0 %v1794
    %3910 = vmatpush1.msra.mxu0 %v1793
    %3911 = vmatprep.subr.mxu0 %v1798
    %3912 = vmatpush1.msra.mxu0 %v1797
    %3913 = vmatprep.subr.mxu0 0.0
    %3914 = vmatpush1.msra.mxu0 0.0
    %3915 = vmatprep.subr.mxu0 0.0
    %3916 = vmatpush1.msra.mxu0 0.0
    %3917 = vmatprep.subr.mxu0 0.0
    %3918 = vmatpush1.msra.mxu0 0.0
    %3919 = vmatprep.subr.mxu0 0.0
    %3920 = vmatpush1.msra.mxu0 0.0
    %3921 = vmatprep.subr.mxu0 0.0
    %3922 = vmatpush1.msra.mxu0 0.0
    %3923 = vmatprep.subr.mxu0 0.0
    %3924 = vmatpush1.msra.mxu0 0.0
    %3925 = vmatprep.subr.mxu0 0.0
    %3926 = vmatpush1.msra.mxu0 0.0
    %3927 = vmatprep.subr.mxu0 0.0
    %3928 = vmatpush1.msra.mxu0 0.0
    %3929 = vmatprep.subr.mxu0 0.0
    %3930 = vmatpush1.msra.mxu0 0.0
    %3931 = vmatprep.subr.mxu0 0.0
    %3932 = vmatpush1.msra.mxu0 0.0
    %3933 = vmatprep.subr.mxu0 0.0
    %3934 = vmatpush1.msra.mxu0 0.0
    %3935 = vmatprep.subr.mxu0 0.0
    %3936 = vmatpush1.msra.mxu0 0.0
    %3937 = vmatprep.subr.mxu0 0.0
    %3938 = vmatpush1.msra.mxu0 0.0
    %3939 = vmatprep.subr.mxu0 0.0
    %3940 = vmatpush1.msra.mxu0 0.0
    %3941 = vmatprep.subr.mxu0 0.0
    %3942 = vmatpush1.msra.mxu0 0.0
    %3943 = vmatprep.subr.mxu0 0.0
    %3944 = vmatpush1.msra.mxu0 0.0
    %3945 = vmatprep.subr.mxu0 0.0
    %3946 = vmatpush1.msra.mxu0 0.0
    %3947 = vmatprep.subr.mxu0 0.0
    %3948 = vmatpush1.msra.mxu0 0.0
    %3949 = vmatprep.subr.mxu0 0.0
    %3950 = vmatpush1.msra.mxu0 0.0
    %3951 = vmatprep.subr.mxu0 0.0
    %3952 = vmatpush1.msra.mxu0 0.0
    %3953 = vmatprep.subr.mxu0 0.0
    %3954 = vmatpush1.msra.mxu0 0.0
    %3955 = vmatprep.subr.mxu0 0.0
    %3956 = vmatpush1.msra.mxu0 0.0
    %3957 = vmatprep.subr.mxu0 0.0
    %3958 = vmatpush1.msra.mxu0 0.0
    %3959 = vmatprep.subr.mxu0 0.0
    %3960 = vmatpush1.msra.mxu0 0.0
    %3961 = vmatprep.subr.mxu0 0.0
    %3962 = vmatpush1.msra.mxu0 0.0
    %3963 = vmatprep.subr.mxu0 0.0
    %3964 = vmatpush1.msra.mxu0 0.0
    %3965 = vmatprep.subr.mxu0 0.0
    %3966 = vmatpush1.msra.mxu0 0.0
    %3967 = vmatprep.subr.mxu0 0.0
    %3968 = vmatpush1.msra.mxu0 0.0
    %3969 = vmatprep.mubr.f32.mxu0 0.0
    %3970 = vmatmul.mubr.f32.gmra.mrb[0].mxu0 %v3666
    %v3971 = vpop.f32.mrb[0].mxu0
    %v3972 = vadd.f32 %v3830, %v3971
    %v3973 = vpop.f32.mrb[0].mxu0
    %v3974 = vadd.f32 %v3832, %v3973
    %3975 = vdwg.mxu0
    %3976 = vmatprep.subr.mxu0 %v1788
    %3977 = vmatpush1.msra.mxu0 %v1787
    %3978 = vmatprep.subr.mxu0 %v1792
    %3979 = vmatpush1.msra.mxu0 %v1791
    %3980 = vmatprep.subr.mxu0 %v1796
    %3981 = vmatpush1.msra.mxu0 %v1795
    %3982 = vmatprep.subr.mxu0 %v1800
    %3983 = vmatpush1.msra.mxu0 %v1799
    %3984 = vmatprep.subr.mxu0 0.0
    %3985 = vmatpush1.msra.mxu0 0.0
    %3986 = vmatprep.subr.mxu0 0.0
    %3987 = vmatpush1.msra.mxu0 0.0
    %3988 = vmatprep.subr.mxu0 0.0
    %3989 = vmatpush1.msra.mxu0 0.0
    %3990 = vmatprep.subr.mxu0 0.0
    %3991 = vmatpush1.msra.mxu0 0.0
    %3992 = vmatprep.subr.mxu0 0.0
    %3993 = vmatpush1.msra.mxu0 0.0
    %3994 = vmatprep.subr.mxu0 0.0
    %3995 = vmatpush1.msra.mxu0 0.0
    %3996 = vmatprep.subr.mxu0 0.0
    %3997 = vmatpush1.msra.mxu0 0.0
    %3998 = vmatprep.subr.mxu0 0.0
    %3999 = vmatpush1.msra.mxu0 0.0
    %4000 = vmatprep.subr.mxu0 0.0
    %4001 = vmatpush1.msra.mxu0 0.0
    %4002 = vmatprep.subr.mxu0 0.0
    %4003 = vmatpush1.msra.mxu0 0.0
    %4004 = vmatprep.subr.mxu0 0.0
    %4005 = vmatpush1.msra.mxu0 0.0
    %4006 = vmatprep.subr.mxu0 0.0
    %4007 = vmatpush1.msra.mxu0 0.0
    %4008 = vmatprep.subr.mxu0 0.0
    %4009 = vmatpush1.msra.mxu0 0.0
    %4010 = vmatprep.subr.mxu0 0.0
    %4011 = vmatpush1.msra.mxu0 0.0
    %4012 = vmatprep.subr.mxu0 0.0
    %4013 = vmatpush1.msra.mxu0 0.0
    %4014 = vmatprep.subr.mxu0 0.0
    %4015 = vmatpush1.msra.mxu0 0.0
    %4016 = vmatprep.subr.mxu0 0.0
    %4017 = vmatpush1.msra.mxu0 0.0
    %4018 = vmatprep.subr.mxu0 0.0
    %4019 = vmatpush1.msra.mxu0 0.0
    %4020 = vmatprep.subr.mxu0 0.0
    %4021 = vmatpush1.msra.mxu0 0.0
    %4022 = vmatprep.subr.mxu0 0.0
    %4023 = vmatpush1.msra.mxu0 0.0
    %4024 = vmatprep.subr.mxu0 0.0
    %4025 = vmatpush1.msra.mxu0 0.0
    %4026 = vmatprep.subr.mxu0 0.0
    %4027 = vmatpush1.msra.mxu0 0.0
    %4028 = vmatprep.subr.mxu0 0.0
    %4029 = vmatpush1.msra.mxu0 0.0
    %4030 = vmatprep.subr.mxu0 0.0
    %4031 = vmatpush1.msra.mxu0 0.0
    %4032 = vmatprep.subr.mxu0 0.0
    %4033 = vmatpush1.msra.mxu0 0.0
    %4034 = vmatprep.subr.mxu0 0.0
    %4035 = vmatpush1.msra.mxu0 0.0
    %4036 = vmatprep.subr.mxu0 0.0
    %4037 = vmatpush1.msra.mxu0 0.0
    %4038 = vmatprep.subr.mxu0 0.0
    %4039 = vmatpush1.msra.mxu0 0.0
    %4040 = vmatprep.mubr.f32.mxu0 0.0
    %4041 = vmatmul.mubr.f32.gmra.mrb[0].mxu0 %v3666
    %v4042 = vpop.f32.mrb[0].mxu0
    %v4043 = vadd.f32 %v3901, %v4042
    %v4044 = vpop.f32.mrb[0].mxu0
    %v4045 = vadd.f32 %v3903, %v4044
    %4046 = vdwg.mxu0
    %v4047 = vadd.f32 %v3972, %v2362
    %v4048 = vadd.f32 %v3974, %v2366
    %v4049 = vadd.f32 %v4043, %v2370
    %v4050 = vadd.f32 %v4045, %v2374
    %v4051 = vxor.u32 %v4047, 2147483648
    %v4052 = vxor.u32 %v4048, 2147483648
    %v4053 = vxor.u32 %v4049, 2147483648
    %v4054 = vmul.f32 %v4051, 1.442695
    %v4055 = vpow.pop %v4054
    %v4056 = vmul.f32 %v4052, 1.442695
    %v4057 = vpow.pop %v4056
    %v4058 = vmul.f32 %v4053, 1.442695
    %v4059 = vpow.pop %v4058
    %v4060 = vadd.f32 %v4055, 1.0
    %v4061 = vadd.f32 %v4057, 1.0
    %v4062 = vadd.f32 %v4059, 1.0
    %v4063 = vrcp.pop %v4060
    %v4064 = vmul.f32 1.0, %v4063
    %v4065 = vrcp.pop %v4061
    %v4066 = vmul.f32 1.0, %v4065
    %v4067 = vrcp.pop %v4062
    %v4068 = vmul.f32 1.0, %v4067
    %v4069 = vtanh.pop %v4050
    %v4070 = vmul.f32 %v4066, %v3655
    %v4071 = vmul.f32 %v4064, %v4069
    %v4072 = vadd.f32 %v4070, %v4071
    %v4073 = vtanh.pop %v4072
    %v4074 = vmul.f32 %v4068, %v4073
    %v4075 = vrot.slane %v1673, 6
    %v4077 = vrot.slane %v1778, 5
    %v4079 = vsel %vm1870, %v4075, %v4077
    %4081 = vrot.lane.b32.xlu0 %v3762, 64
    %v4082 = vpop.permute.xlu0 %4081
    %v4083 = vsel %vm350, %v4082, 0
    %4085 = vmatprep.subr.mxu0 0.0
    %4086 = vmatpush1.msra.mxu0 %v1781
    %4087 = vmatprep.subr.mxu0 0.0
    %4088 = vmatpush1.msra.mxu0 %v1782
    %4089 = vmatprep.subr.mxu0 0.0
    %4090 = vmatpush1.msra.mxu0 %v1783
    %4091 = vmatprep.subr.mxu0 0.0
    %4092 = vmatpush1.msra.mxu0 %v1784
    %4093 = vmatprep.subr.mxu0 0.0
    %4094 = vmatpush1.msra.mxu0 0.0
    %4095 = vmatprep.subr.mxu0 0.0
    %4096 = vmatpush1.msra.mxu0 0.0
    %4097 = vmatprep.subr.mxu0 0.0
    %4098 = vmatpush1.msra.mxu0 0.0
    %4099 = vmatprep.subr.mxu0 0.0
    %4100 = vmatpush1.msra.mxu0 0.0
    %4101 = vmatprep.subr.mxu0 0.0
    %4102 = vmatpush1.msra.mxu0 0.0
    %4103 = vmatprep.subr.mxu0 0.0
    %4104 = vmatpush1.msra.mxu0 0.0
    %4105 = vmatprep.subr.mxu0 0.0
    %4106 = vmatpush1.msra.mxu0 0.0
    %4107 = vmatprep.subr.mxu0 0.0
    %4108 = vmatpush1.msra.mxu0 0.0
    %4109 = vmatprep.subr.mxu0 0.0
    %4110 = vmatpush1.msra.mxu0 0.0
    %4111 = vmatprep.subr.mxu0 0.0
    %4112 = vmatpush1.msra.mxu0 0.0
    %4113 = vmatprep.subr.mxu0 0.0
    %4114 = vmatpush1.msra.mxu0 0.0
    %4115 = vmatprep.subr.mxu0 0.0
    %4116 = vmatpush1.msra.mxu0 0.0
    %4117 = vmatprep.subr.mxu0 0.0
    %4118 = vmatpush1.msra.mxu0 0.0
    %4119 = vmatprep.subr.mxu0 0.0
    %4120 = vmatpush1.msra.mxu0 0.0
    %4121 = vmatprep.subr.mxu0 0.0
    %4122 = vmatpush1.msra.mxu0 0.0
    %4123 = vmatprep.subr.mxu0 0.0
    %4124 = vmatpush1.msra.mxu0 0.0
    %4125 = vmatprep.subr.mxu0 0.0
    %4126 = vmatpush1.msra.mxu0 0.0
    %4127 = vmatprep.subr.mxu0 0.0
    %4128 = vmatpush1.msra.mxu0 0.0
    %4129 = vmatprep.subr.mxu0 0.0
    %4130 = vmatpush1.msra.mxu0 0.0
    %4131 = vmatprep.subr.mxu0 0.0
    %4132 = vmatpush1.msra.mxu0 0.0
    %4133 = vmatprep.subr.mxu0 0.0
    %4134 = vmatpush1.msra.mxu0 0.0
    %4135 = vmatprep.subr.mxu0 0.0
    %4136 = vmatpush1.msra.mxu0 0.0
    %4137 = vmatprep.subr.mxu0 0.0
    %4138 = vmatpush1.msra.mxu0 0.0
    %4139 = vmatprep.subr.mxu0 0.0
    %4140 = vmatpush1.msra.mxu0 0.0
    %4141 = vmatprep.subr.mxu0 0.0
    %4142 = vmatpush1.msra.mxu0 0.0
    %4143 = vmatprep.subr.mxu0 0.0
    %4144 = vmatpush1.msra.mxu0 0.0
    %4145 = vmatprep.subr.mxu0 0.0
    %4146 = vmatpush1.msra.mxu0 0.0
    %4147 = vmatprep.subr.mxu0 0.0
    %4148 = vmatpush1.msra.mxu0 0.0
    %4149 = vmatprep.mubr.f32.mxu0 0.0
    %4150 = vmatmul.mubr.f32.gmra.mrb[0].mxu0 %v4083
    %v4151 = vpop.f32.mrb[0].mxu0
    %v4152 = vadd.f32 0.0, %v4151
    %v4153 = vpop.f32.mrb[0].mxu0
    %4154 = vdwg.mxu0
    %v4155 = vadd.f32 %v4079, %v4152
    %v4156 = vxor.u32 %v4155, 2147483648
    %v4157 = vmul.f32 %v4156, 1.442695
    %v4158 = vpow.pop %v4157
    %v4159 = vadd.f32 %v4158, 1.0
    %v4160 = vrcp.pop %v4159
    %v4161 = vmul.f32 1.0, %v4160
    %v4162 = vtanh.pop %v4155
    %v4163 = vmul.f32 %v4161, %v3756
    %4165 = vrot.lane.b32.xlu0 %v4162, 32
    %v4166 = vpop.permute.xlu0 %4165
    %v4168 = vmul.f32 %v4161, %v4166
    %4170 = vrot.lane.b32.xlu0 %v4168, 32
    %v4171 = vpop.permute.xlu0 %4170
    %v4173 = vadd.f32 %v4163, %v4171
    %v4174 = vtanh.pop %v4173
    %4176 = vrot.lane.b32.xlu0 %v4174, 32
    %v4177 = vpop.permute.xlu0 %4176
    %v4179 = vmul.f32 %v4161, %v4177
    %4180 = vmatprep.subr.mxu0 %v1802
    %4181 = vmatpush1.msra.mxu0 %v1801
    %4182 = vmatprep.subr.mxu0 %v1806
    %4183 = vmatpush1.msra.mxu0 %v1805
    %4184 = vmatprep.subr.mxu0 %v1810
    %4185 = vmatpush1.msra.mxu0 %v1809
    %4186 = vmatprep.subr.mxu0 %v1814
    %4187 = vmatpush1.msra.mxu0 %v1813
    %4188 = vmatprep.subr.mxu0 %v1818
    %4189 = vmatpush1.msra.mxu0 %v1817
    %4190 = vmatprep.subr.mxu0 %v1822
    %4191 = vmatpush1.msra.mxu0 %v1821
    %4192 = vmatprep.subr.mxu0 %v1826
    %4193 = vmatpush1.msra.mxu0 %v1825
    %4194 = vmatprep.subr.mxu0 %v1830
    %4195 = vmatpush1.msra.mxu0 %v1829
    %4196 = vmatprep.subr.mxu0 %v1834
    %4197 = vmatpush1.msra.mxu0 %v1833
    %4198 = vmatprep.subr.mxu0 %v1838
    %4199 = vmatpush1.msra.mxu0 %v1837
    %4200 = vmatprep.subr.mxu0 %v1842
    %4201 = vmatpush1.msra.mxu0 %v1841
    %4202 = vmatprep.subr.mxu0 %v1846
    %4203 = vmatpush1.msra.mxu0 %v1845
    %4204 = vmatprep.subr.mxu0 %v1850
    %4205 = vmatpush1.msra.mxu0 %v1849
    %4206 = vmatprep.subr.mxu0 %v1854
    %4207 = vmatpush1.msra.mxu0 %v1853
    %4208 = vmatprep.subr.mxu0 %v1858
    %4209 = vmatpush1.msra.mxu0 %v1857
    %4210 = vmatprep.subr.mxu0 %v1862
    %4211 = vmatpush1.msra.mxu0 %v1861
    %4212 = vmatprep.subr.mxu0 0.0
    %4213 = vmatpush1.msra.mxu0 0.0
    %4214 = vmatprep.subr.mxu0 0.0
    %4215 = vmatpush1.msra.mxu0 0.0
    %4216 = vmatprep.subr.mxu0 0.0
    %4217 = vmatpush1.msra.mxu0 0.0
    %4218 = vmatprep.subr.mxu0 0.0
    %4219 = vmatpush1.msra.mxu0 0.0
    %4220 = vmatprep.subr.mxu0 0.0
    %4221 = vmatpush1.msra.mxu0 0.0
    %4222 = vmatprep.subr.mxu0 0.0
    %4223 = vmatpush1.msra.mxu0 0.0
    %4224 = vmatprep.subr.mxu0 0.0
    %4225 = vmatpush1.msra.mxu0 0.0
    %4226 = vmatprep.subr.mxu0 0.0
    %4227 = vmatpush1.msra.mxu0 0.0
    %4228 = vmatprep.subr.mxu0 0.0
    %4229 = vmatpush1.msra.mxu0 0.0
    %4230 = vmatprep.subr.mxu0 0.0
    %4231 = vmatpush1.msra.mxu0 0.0
    %4232 = vmatprep.subr.mxu0 0.0
    %4233 = vmatpush1.msra.mxu0 0.0
    %4234 = vmatprep.subr.mxu0 0.0
    %4235 = vmatpush1.msra.mxu0 0.0
    %4236 = vmatprep.subr.mxu0 0.0
    %4237 = vmatpush1.msra.mxu0 0.0
    %4238 = vmatprep.subr.mxu0 0.0
    %4239 = vmatpush1.msra.mxu0 0.0
    %4240 = vmatprep.subr.mxu0 0.0
    %4241 = vmatpush1.msra.mxu0 0.0
    %4242 = vmatprep.subr.mxu0 0.0
    %4243 = vmatpush1.msra.mxu0 0.0
    %4244 = vmatprep.mubr.f32.mxu0 0.0
    %4245 = vmatmul.mubr.f32.gmra.mrb[0].mxu0 %v4074
    %v4246 = vpop.f32.mrb[0].mxu0
    %v4247 = vadd.f32 0.0, %v4246
    %v4248 = vpop.f32.mrb[0].mxu0
    %v4249 = vadd.f32 0.0, %v4248
    %4250 = vdwg.mxu0
    %4251 = vmatprep.subr.mxu0 %v1804
    %4252 = vmatpush1.msra.mxu0 %v1803
    %4253 = vmatprep.subr.mxu0 %v1808
    %4254 = vmatpush1.msra.mxu0 %v1807
    %4255 = vmatprep.subr.mxu0 %v1812
    %4256 = vmatpush1.msra.mxu0 %v1811
    %4257 = vmatprep.subr.mxu0 %v1816
    %4258 = vmatpush1.msra.mxu0 %v1815
    %4259 = vmatprep.subr.mxu0 %v1820
    %4260 = vmatpush1.msra.mxu0 %v1819
    %4261 = vmatprep.subr.mxu0 %v1824
    %4262 = vmatpush1.msra.mxu0 %v1823
    %4263 = vmatprep.subr.mxu0 %v1828
    %4264 = vmatpush1.msra.mxu0 %v1827
    %4265 = vmatprep.subr.mxu0 %v1832
    %4266 = vmatpush1.msra.mxu0 %v1831
    %4267 = vmatprep.subr.mxu0 %v1836
    %4268 = vmatpush1.msra.mxu0 %v1835
    %4269 = vmatprep.subr.mxu0 %v1840
    %4270 = vmatpush1.msra.mxu0 %v1839
    %4271 = vmatprep.subr.mxu0 %v1844
    %4272 = vmatpush1.msra.mxu0 %v1843
    %4273 = vmatprep.subr.mxu0 %v1848
    %4274 = vmatpush1.msra.mxu0 %v1847
    %4275 = vmatprep.subr.mxu0 %v1852
    %4276 = vmatpush1.msra.mxu0 %v1851
    %4277 = vmatprep.subr.mxu0 %v1856
    %4278 = vmatpush1.msra.mxu0 %v1855
    %4279 = vmatprep.subr.mxu0 %v1860
    %4280 = vmatpush1.msra.mxu0 %v1859
    %4281 = vmatprep.subr.mxu0 %v1864
    %4282 = vmatpush1.msra.mxu0 %v1863
    %4283 = vmatprep.subr.mxu0 0.0
    %4284 = vmatpush1.msra.mxu0 0.0
    %4285 = vmatprep.subr.mxu0 0.0
    %4286 = vmatpush1.msra.mxu0 0.0
    %4287 = vmatprep.subr.mxu0 0.0
    %4288 = vmatpush1.msra.mxu0 0.0
    %4289 = vmatprep.subr.mxu0 0.0
    %4290 = vmatpush1.msra.mxu0 0.0
    %4291 = vmatprep.subr.mxu0 0.0
    %4292 = vmatpush1.msra.mxu0 0.0
    %4293 = vmatprep.subr.mxu0 0.0
    %4294 = vmatpush1.msra.mxu0 0.0
    %4295 = vmatprep.subr.mxu0 0.0
    %4296 = vmatpush1.msra.mxu0 0.0
    %4297 = vmatprep.subr.mxu0 0.0
    %4298 = vmatpush1.msra.mxu0 0.0
    %4299 = vmatprep.subr.mxu0 0.0
    %4300 = vmatpush1.msra.mxu0 0.0
    %4301 = vmatprep.subr.mxu0 0.0
    %4302 = vmatpush1.msra.mxu0 0.0
    %4303 = vmatprep.subr.mxu0 0.0
    %4304 = vmatpush1.msra.mxu0 0.0
    %4305 = vmatprep.subr.mxu0 0.0
    %4306 = vmatpush1.msra.mxu0 0.0
    %4307 = vmatprep.subr.mxu0 0.0
    %4308 = vmatpush1.msra.mxu0 0.0
    %4309 = vmatprep.subr.mxu0 0.0
    %4310 = vmatpush1.msra.mxu0 0.0
    %4311 = vmatprep.subr.mxu0 0.0
    %4312 = vmatpush1.msra.mxu0 0.0
    %4313 = vmatprep.subr.mxu0 0.0
    %4314 = vmatpush1.msra.mxu0 0.0
    %4315 = vmatprep.mubr.f32.mxu0 0.0
    %4316 = vmatmul.mubr.f32.gmra.mrb[0].mxu0 %v4074
    %v4317 = vpop.f32.mrb[0].mxu0
    %v4318 = vadd.f32 0.0, %v4317
    %v4319 = vpop.f32.mrb[0].mxu0
    %v4320 = vadd.f32 0.0, %v4319
    %4321 = vdwg.mxu0
    %4322 = vmatprep.subr.mxu0 %v1786
    %4323 = vmatpush1.msra.mxu0 %v1785
    %4324 = vmatprep.subr.mxu0 %v1790
    %4325 = vmatpush1.msra.mxu0 %v1789
    %4326 = vmatprep.subr.mxu0 %v1794
    %4327 = vmatpush1.msra.mxu0 %v1793
    %4328 = vmatprep.subr.mxu0 %v1798
    %4329 = vmatpush1.msra.mxu0 %v1797
    %4330 = vmatprep.subr.mxu0 0.0
    %4331 = vmatpush1.msra.mxu0 0.0
    %4332 = vmatprep.subr.mxu0 0.0
    %4333 = vmatpush1.msra.mxu0 0.0
    %4334 = vmatprep.subr.mxu0 0.0
    %4335 = vmatpush1.msra.mxu0 0.0
    %4336 = vmatprep.subr.mxu0 0.0
    %4337 = vmatpush1.msra.mxu0 0.0
    %4338 = vmatprep.subr.mxu0 0.0
    %4339 = vmatpush1.msra.mxu0 0.0
    %4340 = vmatprep.subr.mxu0 0.0
    %4341 = vmatpush1.msra.mxu0 0.0
    %4342 = vmatprep.subr.mxu0 0.0
    %4343 = vmatpush1.msra.mxu0 0.0
    %4344 = vmatprep.subr.mxu0 0.0
    %4345 = vmatpush1.msra.mxu0 0.0
    %4346 = vmatprep.subr.mxu0 0.0
    %4347 = vmatpush1.msra.mxu0 0.0
    %4348 = vmatprep.subr.mxu0 0.0
    %4349 = vmatpush1.msra.mxu0 0.0
    %4350 = vmatprep.subr.mxu0 0.0
    %4351 = vmatpush1.msra.mxu0 0.0
    %4352 = vmatprep.subr.mxu0 0.0
    %4353 = vmatpush1.msra.mxu0 0.0
    %4354 = vmatprep.subr.mxu0 0.0
    %4355 = vmatpush1.msra.mxu0 0.0
    %4356 = vmatprep.subr.mxu0 0.0
    %4357 = vmatpush1.msra.mxu0 0.0
    %4358 = vmatprep.subr.mxu0 0.0
    %4359 = vmatpush1.msra.mxu0 0.0
    %4360 = vmatprep.subr.mxu0 0.0
    %4361 = vmatpush1.msra.mxu0 0.0
    %4362 = vmatprep.subr.mxu0 0.0
    %4363 = vmatpush1.msra.mxu0 0.0
    %4364 = vmatprep.subr.mxu0 0.0
    %4365 = vmatpush1.msra.mxu0 0.0
    %4366 = vmatprep.subr.mxu0 0.0
    %4367 = vmatpush1.msra.mxu0 0.0
    %4368 = vmatprep.subr.mxu0 0.0
    %4369 = vmatpush1.msra.mxu0 0.0
    %4370 = vmatprep.subr.mxu0 0.0
    %4371 = vmatpush1.msra.mxu0 0.0
    %4372 = vmatprep.subr.mxu0 0.0
    %4373 = vmatpush1.msra.mxu0 0.0
    %4374 = vmatprep.subr.mxu0 0.0
    %4375 = vmatpush1.msra.mxu0 0.0
    %4376 = vmatprep.subr.mxu0 0.0
    %4377 = vmatpush1.msra.mxu0 0.0
    %4378 = vmatprep.subr.mxu0 0.0
    %4379 = vmatpush1.msra.mxu0 0.0
    %4380 = vmatprep.subr.mxu0 0.0
    %4381 = vmatpush1.msra.mxu0 0.0
    %4382 = vmatprep.subr.mxu0 0.0
    %4383 = vmatpush1.msra.mxu0 0.0
    %4384 = vmatprep.subr.mxu0 0.0
    %4385 = vmatpush1.msra.mxu0 0.0
    %4386 = vmatprep.mubr.f32.mxu0 0.0
    %4387 = vmatmul.mubr.f32.gmra.mrb[0].mxu0 %v4083
    %v4388 = vpop.f32.mrb[0].mxu0
    %v4389 = vadd.f32 %v4247, %v4388
    %v4390 = vpop.f32.mrb[0].mxu0
    %v4391 = vadd.f32 %v4249, %v4390
    %4392 = vdwg.mxu0
    %4393 = vmatprep.subr.mxu0 %v1788
    %4394 = vmatpush1.msra.mxu0 %v1787
    %4395 = vmatprep.subr.mxu0 %v1792
    %4396 = vmatpush1.msra.mxu0 %v1791
    %4397 = vmatprep.subr.mxu0 %v1796
    %4398 = vmatpush1.msra.mxu0 %v1795
    %4399 = vmatprep.subr.mxu0 %v1800
    %4400 = vmatpush1.msra.mxu0 %v1799
    %4401 = vmatprep.subr.mxu0 0.0
    %4402 = vmatpush1.msra.mxu0 0.0
    %4403 = vmatprep.subr.mxu0 0.0
    %4404 = vmatpush1.msra.mxu0 0.0
    %4405 = vmatprep.subr.mxu0 0.0
    %4406 = vmatpush1.msra.mxu0 0.0
    %4407 = vmatprep.subr.mxu0 0.0
    %4408 = vmatpush1.msra.mxu0 0.0
    %4409 = vmatprep.subr.mxu0 0.0
    %4410 = vmatpush1.msra.mxu0 0.0
    %4411 = vmatprep.subr.mxu0 0.0
    %4412 = vmatpush1.msra.mxu0 0.0
    %4413 = vmatprep.subr.mxu0 0.0
    %4414 = vmatpush1.msra.mxu0 0.0
    %4415 = vmatprep.subr.mxu0 0.0
    %4416 = vmatpush1.msra.mxu0 0.0
    %4417 = vmatprep.subr.mxu0 0.0
    %4418 = vmatpush1.msra.mxu0 0.0
    %4419 = vmatprep.subr.mxu0 0.0
    %4420 = vmatpush1.msra.mxu0 0.0
    %4421 = vmatprep.subr.mxu0 0.0
    %4422 = vmatpush1.msra.mxu0 0.0
    %4423 = vmatprep.subr.mxu0 0.0
    %4424 = vmatpush1.msra.mxu0 0.0
    %4425 = vmatprep.subr.mxu0 0.0
    %4426 = vmatpush1.msra.mxu0 0.0
    %4427 = vmatprep.subr.mxu0 0.0
    %4428 = vmatpush1.msra.mxu0 0.0
    %4429 = vmatprep.subr.mxu0 0.0
    %4430 = vmatpush1.msra.mxu0 0.0
    %4431 = vmatprep.subr.mxu0 0.0
    %4432 = vmatpush1.msra.mxu0 0.0
    %4433 = vmatprep.subr.mxu0 0.0
    %4434 = vmatpush1.msra.mxu0 0.0
    %4435 = vmatprep.subr.mxu0 0.0
    %4436 = vmatpush1.msra.mxu0 0.0
    %4437 = vmatprep.subr.mxu0 0.0
    %4438 = vmatpush1.msra.mxu0 0.0
    %4439 = vmatprep.subr.mxu0 0.0
    %4440 = vmatpush1.msra.mxu0 0.0
    %4441 = vmatprep.subr.mxu0 0.0
    %4442 = vmatpush1.msra.mxu0 0.0
    %4443 = vmatprep.subr.mxu0 0.0
    %4444 = vmatpush1.msra.mxu0 0.0
    %4445 = vmatprep.subr.mxu0 0.0
    %4446 = vmatpush1.msra.mxu0 0.0
    %4447 = vmatprep.subr.mxu0 0.0
    %4448 = vmatpush1.msra.mxu0 0.0
    %4449 = vmatprep.subr.mxu0 0.0
    %4450 = vmatpush1.msra.mxu0 0.0
    %4451 = vmatprep.subr.mxu0 0.0
    %4452 = vmatpush1.msra.mxu0 0.0
    %4453 = vmatprep.subr.mxu0 0.0
    %4454 = vmatpush1.msra.mxu0 0.0
    %4455 = vmatprep.subr.mxu0 0.0
    %4456 = vmatpush1.msra.mxu0 0.0
    %4457 = vmatprep.mubr.f32.mxu0 0.0
    %4458 = vmatmul.mubr.f32.gmra.mrb[0].mxu0 %v4083
    %v4459 = vpop.f32.mrb[0].mxu0
    %v4460 = vadd.f32 %v4318, %v4459
    %v4461 = vpop.f32.mrb[0].mxu0
    %v4462 = vadd.f32 %v4320, %v4461
    %4463 = vdwg.mxu0
    %v4464 = vadd.f32 %v4389, %v2362
    %v4465 = vadd.f32 %v4391, %v2366
    %v4466 = vadd.f32 %v4460, %v2370
    %v4467 = vadd.f32 %v4462, %v2374
    %v4468 = vxor.u32 %v4464, 2147483648
    %v4469 = vxor.u32 %v4465, 2147483648
    %v4470 = vxor.u32 %v4466, 2147483648
    %v4471 = vmul.f32 %v4468, 1.442695
    %v4472 = vpow.pop %v4471
    %v4473 = vmul.f32 %v4469, 1.442695
    %v4474 = vpow.pop %v4473
    %v4475 = vmul.f32 %v4470, 1.442695
    %v4476 = vpow.pop %v4475
    %v4477 = vadd.f32 %v4472, 1.0
    %v4478 = vadd.f32 %v4474, 1.0
    %v4479 = vadd.f32 %v4476, 1.0
    %v4480 = vrcp.pop %v4477
    %v4481 = vmul.f32 1.0, %v4480
    %v4482 = vrcp.pop %v4478
    %v4483 = vmul.f32 1.0, %v4482
    %v4484 = vrcp.pop %v4479
    %v4485 = vmul.f32 1.0, %v4484
    %v4486 = vtanh.pop %v4467
    %v4487 = vmul.f32 %v4483, %v4072
    %v4488 = vmul.f32 %v4481, %v4486
    %v4489 = vadd.f32 %v4487, %v4488
    %v4490 = vtanh.pop %v4489
    %v4491 = vmul.f32 %v4485, %v4490
    %v4492 = vrot.slane %v1673, 7
    %v4494 = vrot.slane %v1778, 6
    %v4496 = vsel %vm1870, %v4492, %v4494
    %4498 = vrot.lane.b32.xlu0 %v4179, 64
    %v4499 = vpop.permute.xlu0 %4498
    %v4500 = vsel %vm350, %v4499, 0
    %4502 = vmatprep.subr.mxu0 0.0
    %4503 = vmatpush1.msra.mxu0 %v1781
    %4504 = vmatprep.subr.mxu0 0.0
    %4505 = vmatpush1.msra.mxu0 %v1782
    %4506 = vmatprep.subr.mxu0 0.0
    %4507 = vmatpush1.msra.mxu0 %v1783
    %4508 = vmatprep.subr.mxu0 0.0
    %4509 = vmatpush1.msra.mxu0 %v1784
    %4510 = vmatprep.subr.mxu0 0.0
    %4511 = vmatpush1.msra.mxu0 0.0
    %4512 = vmatprep.subr.mxu0 0.0
    %4513 = vmatpush1.msra.mxu0 0.0
    %4514 = vmatprep.subr.mxu0 0.0
    %4515 = vmatpush1.msra.mxu0 0.0
    %4516 = vmatprep.subr.mxu0 0.0
    %4517 = vmatpush1.msra.mxu0 0.0
    %4518 = vmatprep.subr.mxu0 0.0
    %4519 = vmatpush1.msra.mxu0 0.0
    %4520 = vmatprep.subr.mxu0 0.0
    %4521 = vmatpush1.msra.mxu0 0.0
    %4522 = vmatprep.subr.mxu0 0.0
    %4523 = vmatpush1.msra.mxu0 0.0
    %4524 = vmatprep.subr.mxu0 0.0
    %4525 = vmatpush1.msra.mxu0 0.0
    %4526 = vmatprep.subr.mxu0 0.0
    %4527 = vmatpush1.msra.mxu0 0.0
    %4528 = vmatprep.subr.mxu0 0.0
    %4529 = vmatpush1.msra.mxu0 0.0
    %4530 = vmatprep.subr.mxu0 0.0
    %4531 = vmatpush1.msra.mxu0 0.0
    %4532 = vmatprep.subr.mxu0 0.0
    %4533 = vmatpush1.msra.mxu0 0.0
    %4534 = vmatprep.subr.mxu0 0.0
    %4535 = vmatpush1.msra.mxu0 0.0
    %4536 = vmatprep.subr.mxu0 0.0
    %4537 = vmatpush1.msra.mxu0 0.0
    %4538 = vmatprep.subr.mxu0 0.0
    %4539 = vmatpush1.msra.mxu0 0.0
    %4540 = vmatprep.subr.mxu0 0.0
    %4541 = vmatpush1.msra.mxu0 0.0
    %4542 = vmatprep.subr.mxu0 0.0
    %4543 = vmatpush1.msra.mxu0 0.0
    %4544 = vmatprep.subr.mxu0 0.0
    %4545 = vmatpush1.msra.mxu0 0.0
    %4546 = vmatprep.subr.mxu0 0.0
    %4547 = vmatpush1.msra.mxu0 0.0
    %4548 = vmatprep.subr.mxu0 0.0
    %4549 = vmatpush1.msra.mxu0 0.0
    %4550 = vmatprep.subr.mxu0 0.0
    %4551 = vmatpush1.msra.mxu0 0.0
    %4552 = vmatprep.subr.mxu0 0.0
    %4553 = vmatpush1.msra.mxu0 0.0
    %4554 = vmatprep.subr.mxu0 0.0
    %4555 = vmatpush1.msra.mxu0 0.0
    %4556 = vmatprep.subr.mxu0 0.0
    %4557 = vmatpush1.msra.mxu0 0.0
    %4558 = vmatprep.subr.mxu0 0.0
    %4559 = vmatpush1.msra.mxu0 0.0
    %4560 = vmatprep.subr.mxu0 0.0
    %4561 = vmatpush1.msra.mxu0 0.0
    %4562 = vmatprep.subr.mxu0 0.0
    %4563 = vmatpush1.msra.mxu0 0.0
    %4564 = vmatprep.subr.mxu0 0.0
    %4565 = vmatpush1.msra.mxu0 0.0
    %4566 = vmatprep.mubr.f32.mxu0 0.0
    %4567 = vmatmul.mubr.f32.gmra.mrb[0].mxu0 %v4500
    %v4568 = vpop.f32.mrb[0].mxu0
    %v4569 = vadd.f32 0.0, %v4568
    %v4570 = vpop.f32.mrb[0].mxu0
    %4571 = vdwg.mxu0
    %v4572 = vadd.f32 %v4496, %v4569
    %v4573 = vxor.u32 %v4572, 2147483648
    %v4574 = vmul.f32 %v4573, 1.442695
    %v4575 = vpow.pop %v4574
    %v4576 = vadd.f32 %v4575, 1.0
    %v4577 = vrcp.pop %v4576
    %v4578 = vmul.f32 1.0, %v4577
    %v4579 = vtanh.pop %v4572
    %v4580 = vmul.f32 %v4578, %v4173
    %4582 = vrot.lane.b32.xlu0 %v4579, 32
    %v4583 = vpop.permute.xlu0 %4582
    %v4585 = vmul.f32 %v4578, %v4583
    %4587 = vrot.lane.b32.xlu0 %v4585, 32
    %v4588 = vpop.permute.xlu0 %4587
    %v4590 = vadd.f32 %v4580, %v4588
    %v4591 = vtanh.pop %v4590
    %4593 = vrot.lane.b32.xlu0 %v4591, 32
    %v4594 = vpop.permute.xlu0 %4593
    %v4596 = vmul.f32 %v4578, %v4594
    %4597 = vmatprep.subr.mxu0 %v1802
    %4598 = vmatpush1.msra.mxu0 %v1801
    %4599 = vmatprep.subr.mxu0 %v1806
    %4600 = vmatpush1.msra.mxu0 %v1805
    %4601 = vmatprep.subr.mxu0 %v1810
    %4602 = vmatpush1.msra.mxu0 %v1809
    %4603 = vmatprep.subr.mxu0 %v1814
    %4604 = vmatpush1.msra.mxu0 %v1813
    %4605 = vmatprep.subr.mxu0 %v1818
    %4606 = vmatpush1.msra.mxu0 %v1817
    %4607 = vmatprep.subr.mxu0 %v1822
    %4608 = vmatpush1.msra.mxu0 %v1821
    %4609 = vmatprep.subr.mxu0 %v1826
    %4610 = vmatpush1.msra.mxu0 %v1825
    %4611 = vmatprep.subr.mxu0 %v1830
    %4612 = vmatpush1.msra.mxu0 %v1829
    %4613 = vmatprep.subr.mxu0 %v1834
    %4614 = vmatpush1.msra.mxu0 %v1833
    %4615 = vmatprep.subr.mxu0 %v1838
    %4616 = vmatpush1.msra.mxu0 %v1837
    %4617 = vmatprep.subr.mxu0 %v1842
    %4618 = vmatpush1.msra.mxu0 %v1841
    %4619 = vmatprep.subr.mxu0 %v1846
    %4620 = vmatpush1.msra.mxu0 %v1845
    %4621 = vmatprep.subr.mxu0 %v1850
    %4622 = vmatpush1.msra.mxu0 %v1849
    %4623 = vmatprep.subr.mxu0 %v1854
    %4624 = vmatpush1.msra.mxu0 %v1853
    %4625 = vmatprep.subr.mxu0 %v1858
    %4626 = vmatpush1.msra.mxu0 %v1857
    %4627 = vmatprep.subr.mxu0 %v1862
    %4628 = vmatpush1.msra.mxu0 %v1861
    %4629 = vmatprep.subr.mxu0 0.0
    %4630 = vmatpush1.msra.mxu0 0.0
    %4631 = vmatprep.subr.mxu0 0.0
    %4632 = vmatpush1.msra.mxu0 0.0
    %4633 = vmatprep.subr.mxu0 0.0
    %4634 = vmatpush1.msra.mxu0 0.0
    %4635 = vmatprep.subr.mxu0 0.0
    %4636 = vmatpush1.msra.mxu0 0.0
    %4637 = vmatprep.subr.mxu0 0.0
    %4638 = vmatpush1.msra.mxu0 0.0
    %4639 = vmatprep.subr.mxu0 0.0
    %4640 = vmatpush1.msra.mxu0 0.0
    %4641 = vmatprep.subr.mxu0 0.0
    %4642 = vmatpush1.msra.mxu0 0.0
    %4643 = vmatprep.subr.mxu0 0.0
    %4644 = vmatpush1.msra.mxu0 0.0
    %4645 = vmatprep.subr.mxu0 0.0
    %4646 = vmatpush1.msra.mxu0 0.0
    %4647 = vmatprep.subr.mxu0 0.0
    %4648 = vmatpush1.msra.mxu0 0.0
    %4649 = vmatprep.subr.mxu0 0.0
    %4650 = vmatpush1.msra.mxu0 0.0
    %4651 = vmatprep.subr.mxu0 0.0
    %4652 = vmatpush1.msra.mxu0 0.0
    %4653 = vmatprep.subr.mxu0 0.0
    %4654 = vmatpush1.msra.mxu0 0.0
    %4655 = vmatprep.subr.mxu0 0.0
    %4656 = vmatpush1.msra.mxu0 0.0
    %4657 = vmatprep.subr.mxu0 0.0
    %4658 = vmatpush1.msra.mxu0 0.0
    %4659 = vmatprep.subr.mxu0 0.0
    %4660 = vmatpush1.msra.mxu0 0.0
    %4661 = vmatprep.mubr.f32.mxu0 0.0
    %4662 = vmatmul.mubr.f32.gmra.mrb[0].mxu0 %v4491
    %v4663 = vpop.f32.mrb[0].mxu0
    %v4664 = vadd.f32 0.0, %v4663
    %v4665 = vpop.f32.mrb[0].mxu0
    %v4666 = vadd.f32 0.0, %v4665
    %4667 = vdwg.mxu0
    %4668 = vmatprep.subr.mxu0 %v1804
    %4669 = vmatpush1.msra.mxu0 %v1803
    %4670 = vmatprep.subr.mxu0 %v1808
    %4671 = vmatpush1.msra.mxu0 %v1807
    %4672 = vmatprep.subr.mxu0 %v1812
    %4673 = vmatpush1.msra.mxu0 %v1811
    %4674 = vmatprep.subr.mxu0 %v1816
    %4675 = vmatpush1.msra.mxu0 %v1815
    %4676 = vmatprep.subr.mxu0 %v1820
    %4677 = vmatpush1.msra.mxu0 %v1819
    %4678 = vmatprep.subr.mxu0 %v1824
    %4679 = vmatpush1.msra.mxu0 %v1823
    %4680 = vmatprep.subr.mxu0 %v1828
    %4681 = vmatpush1.msra.mxu0 %v1827
    %4682 = vmatprep.subr.mxu0 %v1832
    %4683 = vmatpush1.msra.mxu0 %v1831
    %4684 = vmatprep.subr.mxu0 %v1836
    %4685 = vmatpush1.msra.mxu0 %v1835
    %4686 = vmatprep.subr.mxu0 %v1840
    %4687 = vmatpush1.msra.mxu0 %v1839
    %4688 = vmatprep.subr.mxu0 %v1844
    %4689 = vmatpush1.msra.mxu0 %v1843
    %4690 = vmatprep.subr.mxu0 %v1848
    %4691 = vmatpush1.msra.mxu0 %v1847
    %4692 = vmatprep.subr.mxu0 %v1852
    %4693 = vmatpush1.msra.mxu0 %v1851
    %4694 = vmatprep.subr.mxu0 %v1856
    %4695 = vmatpush1.msra.mxu0 %v1855
    %4696 = vmatprep.subr.mxu0 %v1860
    %4697 = vmatpush1.msra.mxu0 %v1859
    %4698 = vmatprep.subr.mxu0 %v1864
    %4699 = vmatpush1.msra.mxu0 %v1863
    %4700 = vmatprep.subr.mxu0 0.0
    %4701 = vmatpush1.msra.mxu0 0.0
    %4702 = vmatprep.subr.mxu0 0.0
    %4703 = vmatpush1.msra.mxu0 0.0
    %4704 = vmatprep.subr.mxu0 0.0
    %4705 = vmatpush1.msra.mxu0 0.0
    %4706 = vmatprep.subr.mxu0 0.0
    %4707 = vmatpush1.msra.mxu0 0.0
    %4708 = vmatprep.subr.mxu0 0.0
    %4709 = vmatpush1.msra.mxu0 0.0
    %4710 = vmatprep.subr.mxu0 0.0
    %4711 = vmatpush1.msra.mxu0 0.0
    %4712 = vmatprep.subr.mxu0 0.0
    %4713 = vmatpush1.msra.mxu0 0.0
    %4714 = vmatprep.subr.mxu0 0.0
    %4715 = vmatpush1.msra.mxu0 0.0
    %4716 = vmatprep.subr.mxu0 0.0
    %4717 = vmatpush1.msra.mxu0 0.0
    %4718 = vmatprep.subr.mxu0 0.0
    %4719 = vmatpush1.msra.mxu0 0.0
    %4720 = vmatprep.subr.mxu0 0.0
    %4721 = vmatpush1.msra.mxu0 0.0
    %4722 = vmatprep.subr.mxu0 0.0
    %4723 = vmatpush1.msra.mxu0 0.0
    %4724 = vmatprep.subr.mxu0 0.0
    %4725 = vmatpush1.msra.mxu0 0.0
    %4726 = vmatprep.subr.mxu0 0.0
    %4727 = vmatpush1.msra.mxu0 0.0
    %4728 = vmatprep.subr.mxu0 0.0
    %4729 = vmatpush1.msra.mxu0 0.0
    %4730 = vmatprep.subr.mxu0 0.0
    %4731 = vmatpush1.msra.mxu0 0.0
    %4732 = vmatprep.mubr.f32.mxu0 0.0
    %4733 = vmatmul.mubr.f32.gmra.mrb[0].mxu0 %v4491
    %v4734 = vpop.f32.mrb[0].mxu0
    %v4735 = vadd.f32 0.0, %v4734
    %v4736 = vpop.f32.mrb[0].mxu0
    %v4737 = vadd.f32 0.0, %v4736
    %4738 = vdwg.mxu0
    %4739 = vmatprep.subr.mxu0 %v1786
    %4740 = vmatpush1.msra.mxu0 %v1785
    %4741 = vmatprep.subr.mxu0 %v1790
    %4742 = vmatpush1.msra.mxu0 %v1789
    %4743 = vmatprep.subr.mxu0 %v1794
    %4744 = vmatpush1.msra.mxu0 %v1793
    %4745 = vmatprep.subr.mxu0 %v1798
    %4746 = vmatpush1.msra.mxu0 %v1797
    %4747 = vmatprep.subr.mxu0 0.0
    %4748 = vmatpush1.msra.mxu0 0.0
    %4749 = vmatprep.subr.mxu0 0.0
    %4750 = vmatpush1.msra.mxu0 0.0
    %4751 = vmatprep.subr.mxu0 0.0
    %4752 = vmatpush1.msra.mxu0 0.0
    %4753 = vmatprep.subr.mxu0 0.0
    %4754 = vmatpush1.msra.mxu0 0.0
    %4755 = vmatprep.subr.mxu0 0.0
    %4756 = vmatpush1.msra.mxu0 0.0
    %4757 = vmatprep.subr.mxu0 0.0
    %4758 = vmatpush1.msra.mxu0 0.0
    %4759 = vmatprep.subr.mxu0 0.0
    %4760 = vmatpush1.msra.mxu0 0.0
    %4761 = vmatprep.subr.mxu0 0.0
    %4762 = vmatpush1.msra.mxu0 0.0
    %4763 = vmatprep.subr.mxu0 0.0
    %4764 = vmatpush1.msra.mxu0 0.0
    %4765 = vmatprep.subr.mxu0 0.0
    %4766 = vmatpush1.msra.mxu0 0.0
    %4767 = vmatprep.subr.mxu0 0.0
    %4768 = vmatpush1.msra.mxu0 0.0
    %4769 = vmatprep.subr.mxu0 0.0
    %4770 = vmatpush1.msra.mxu0 0.0
    %4771 = vmatprep.subr.mxu0 0.0
    %4772 = vmatpush1.msra.mxu0 0.0
    %4773 = vmatprep.subr.mxu0 0.0
    %4774 = vmatpush1.msra.mxu0 0.0
    %4775 = vmatprep.subr.mxu0 0.0
    %4776 = vmatpush1.msra.mxu0 0.0
    %4777 = vmatprep.subr.mxu0 0.0
    %4778 = vmatpush1.msra.mxu0 0.0
    %4779 = vmatprep.subr.mxu0 0.0
    %4780 = vmatpush1.msra.mxu0 0.0
    %4781 = vmatprep.subr.mxu0 0.0
    %4782 = vmatpush1.msra.mxu0 0.0
    %4783 = vmatprep.subr.mxu0 0.0
    %4784 = vmatpush1.msra.mxu0 0.0
    %4785 = vmatprep.subr.mxu0 0.0
    %4786 = vmatpush1.msra.mxu0 0.0
    %4787 = vmatprep.subr.mxu0 0.0
    %4788 = vmatpush1.msra.mxu0 0.0
    %4789 = vmatprep.subr.mxu0 0.0
    %4790 = vmatpush1.msra.mxu0 0.0
    %4791 = vmatprep.subr.mxu0 0.0
    %4792 = vmatpush1.msra.mxu0 0.0
    %4793 = vmatprep.subr.mxu0 0.0
    %4794 = vmatpush1.msra.mxu0 0.0
    %4795 = vmatprep.subr.mxu0 0.0
    %4796 = vmatpush1.msra.mxu0 0.0
    %4797 = vmatprep.subr.mxu0 0.0
    %4798 = vmatpush1.msra.mxu0 0.0
    %4799 = vmatprep.subr.mxu0 0.0
    %4800 = vmatpush1.msra.mxu0 0.0
    %4801 = vmatprep.subr.mxu0 0.0
    %4802 = vmatpush1.msra.mxu0 0.0
    %4803 = vmatprep.mubr.f32.mxu0 0.0
    %4804 = vmatmul.mubr.f32.gmra.mrb[0].mxu0 %v4500
    %v4805 = vpop.f32.mrb[0].mxu0
    %v4806 = vadd.f32 %v4664, %v4805
    %v4807 = vpop.f32.mrb[0].mxu0
    %v4808 = vadd.f32 %v4666, %v4807
    %4809 = vdwg.mxu0
    %4810 = vmatprep.subr.mxu0 %v1788
    %4811 = vmatpush1.msra.mxu0 %v1787
    %4812 = vmatprep.subr.mxu0 %v1792
    %4813 = vmatpush1.msra.mxu0 %v1791
    %4814 = vmatprep.subr.mxu0 %v1796
    %4815 = vmatpush1.msra.mxu0 %v1795
    %4816 = vmatprep.subr.mxu0 %v1800
    %4817 = vmatpush1.msra.mxu0 %v1799
    %4818 = vmatprep.subr.mxu0 0.0
    %4819 = vmatpush1.msra.mxu0 0.0
    %4820 = vmatprep.subr.mxu0 0.0
    %4821 = vmatpush1.msra.mxu0 0.0
    %4822 = vmatprep.subr.mxu0 0.0
    %4823 = vmatpush1.msra.mxu0 0.0
    %4824 = vmatprep.subr.mxu0 0.0
    %4825 = vmatpush1.msra.mxu0 0.0
    %4826 = vmatprep.subr.mxu0 0.0
    %4827 = vmatpush1.msra.mxu0 0.0
    %4828 = vmatprep.subr.mxu0 0.0
    %4829 = vmatpush1.msra.mxu0 0.0
    %4830 = vmatprep.subr.mxu0 0.0
    %4831 = vmatpush1.msra.mxu0 0.0
    %4832 = vmatprep.subr.mxu0 0.0
    %4833 = vmatpush1.msra.mxu0 0.0
    %4834 = vmatprep.subr.mxu0 0.0
    %4835 = vmatpush1.msra.mxu0 0.0
    %4836 = vmatprep.subr.mxu0 0.0
    %4837 = vmatpush1.msra.mxu0 0.0
    %4838 = vmatprep.subr.mxu0 0.0
    %4839 = vmatpush1.msra.mxu0 0.0
    %4840 = vmatprep.subr.mxu0 0.0
    %4841 = vmatpush1.msra.mxu0 0.0
    %4842 = vmatprep.subr.mxu0 0.0
    %4843 = vmatpush1.msra.mxu0 0.0
    %4844 = vmatprep.subr.mxu0 0.0
    %4845 = vmatpush1.msra.mxu0 0.0
    %4846 = vmatprep.subr.mxu0 0.0
    %4847 = vmatpush1.msra.mxu0 0.0
    %4848 = vmatprep.subr.mxu0 0.0
    %4849 = vmatpush1.msra.mxu0 0.0
    %4850 = vmatprep.subr.mxu0 0.0
    %4851 = vmatpush1.msra.mxu0 0.0
    %4852 = vmatprep.subr.mxu0 0.0
    %4853 = vmatpush1.msra.mxu0 0.0
    %4854 = vmatprep.subr.mxu0 0.0
    %4855 = vmatpush1.msra.mxu0 0.0
    %4856 = vmatprep.subr.mxu0 0.0
    %4857 = vmatpush1.msra.mxu0 0.0
    %4858 = vmatprep.subr.mxu0 0.0
    %4859 = vmatpush1.msra.mxu0 0.0
    %4860 = vmatprep.subr.mxu0 0.0
    %4861 = vmatpush1.msra.mxu0 0.0
    %4862 = vmatprep.subr.mxu0 0.0
    %4863 = vmatpush1.msra.mxu0 0.0
    %4864 = vmatprep.subr.mxu0 0.0
    %4865 = vmatpush1.msra.mxu0 0.0
    %4866 = vmatprep.subr.mxu0 0.0
    %4867 = vmatpush1.msra.mxu0 0.0
    %4868 = vmatprep.subr.mxu0 0.0
    %4869 = vmatpush1.msra.mxu0 0.0
    %4870 = vmatprep.subr.mxu0 0.0
    %4871 = vmatpush1.msra.mxu0 0.0
    %4872 = vmatprep.subr.mxu0 0.0
    %4873 = vmatpush1.msra.mxu0 0.0
    %4874 = vmatprep.mubr.f32.mxu0 0.0
    %4875 = vmatmul.mubr.f32.gmra.mrb[0].mxu0 %v4500
    %v4876 = vpop.f32.mrb[0].mxu0
    %v4877 = vadd.f32 %v4735, %v4876
    %v4878 = vpop.f32.mrb[0].mxu0
    %v4879 = vadd.f32 %v4737, %v4878
    %4880 = vdwg.mxu0
    %v4881 = vadd.f32 %v4806, %v2362
    %v4882 = vadd.f32 %v4808, %v2366
    %v4883 = vadd.f32 %v4877, %v2370
    %v4884 = vadd.f32 %v4879, %v2374
    %v4885 = vxor.u32 %v4881, 2147483648
    %v4886 = vxor.u32 %v4882, 2147483648
    %v4887 = vxor.u32 %v4883, 2147483648
    %v4888 = vmul.f32 %v4885, 1.442695
    %v4889 = vpow.pop %v4888
    %v4890 = vmul.f32 %v4886, 1.442695
    %v4891 = vpow.pop %v4890
    %v4892 = vmul.f32 %v4887, 1.442695
    %v4893 = vpow.pop %v4892
    %v4894 = vadd.f32 %v4889, 1.0
    %v4895 = vadd.f32 %v4891, 1.0
    %v4896 = vadd.f32 %v4893, 1.0
    %v4897 = vrcp.pop %v4894
    %v4898 = vmul.f32 1.0, %v4897
    %v4899 = vrcp.pop %v4895
    %v4900 = vmul.f32 1.0, %v4899
    %v4901 = vrcp.pop %v4896
    %v4902 = vmul.f32 1.0, %v4901
    %v4903 = vtanh.pop %v4884
    %v4904 = vmul.f32 %v4900, %v4489
    %v4905 = vmul.f32 %v4898, %v4903
    %v4906 = vadd.f32 %v4904, %v4905
    %v4907 = vtanh.pop %v4906
    %v4908 = vmul.f32 %v4902, %v4907
    %4909 = vmatprep.subr.mxu0 %v1802
    %4910 = vmatpush1.msra.mxu0 %v1801
    %4911 = vmatprep.subr.mxu0 %v1806
    %4912 = vmatpush1.msra.mxu0 %v1805
    %4913 = vmatprep.subr.mxu0 %v1810
    %4914 = vmatpush1.msra.mxu0 %v1809
    %4915 = vmatprep.subr.mxu0 %v1814
    %4916 = vmatpush1.msra.mxu0 %v1813
    %4917 = vmatprep.subr.mxu0 %v1818
    %4918 = vmatpush1.msra.mxu0 %v1817
    %4919 = vmatprep.subr.mxu0 %v1822
    %4920 = vmatpush1.msra.mxu0 %v1821
    %4921 = vmatprep.subr.mxu0 %v1826
    %4922 = vmatpush1.msra.mxu0 %v1825
    %4923 = vmatprep.subr.mxu0 %v1830
    %4924 = vmatpush1.msra.mxu0 %v1829
    %4925 = vmatprep.subr.mxu0 %v1834
    %4926 = vmatpush1.msra.mxu0 %v1833
    %4927 = vmatprep.subr.mxu0 %v1838
    %4928 = vmatpush1.msra.mxu0 %v1837
    %4929 = vmatprep.subr.mxu0 %v1842
    %4930 = vmatpush1.msra.mxu0 %v1841
    %4931 = vmatprep.subr.mxu0 %v1846
    %4932 = vmatpush1.msra.mxu0 %v1845
    %4933 = vmatprep.subr.mxu0 %v1850
    %4934 = vmatpush1.msra.mxu0 %v1849
    %4935 = vmatprep.subr.mxu0 %v1854
    %4936 = vmatpush1.msra.mxu0 %v1853
    %4937 = vmatprep.subr.mxu0 %v1858
    %4938 = vmatpush1.msra.mxu0 %v1857
    %4939 = vmatprep.subr.mxu0 %v1862
    %4940 = vmatpush1.msra.mxu0 %v1861
    %4941 = vmatprep.subr.mxu0 0.0
    %4942 = vmatpush1.msra.mxu0 0.0
    %4943 = vmatprep.subr.mxu0 0.0
    %4944 = vmatpush1.msra.mxu0 0.0
    %4945 = vmatprep.subr.mxu0 0.0
    %4946 = vmatpush1.msra.mxu0 0.0
    %4947 = vmatprep.subr.mxu0 0.0
    %4948 = vmatpush1.msra.mxu0 0.0
    %4949 = vmatprep.subr.mxu0 0.0
    %4950 = vmatpush1.msra.mxu0 0.0
    %4951 = vmatprep.subr.mxu0 0.0
    %4952 = vmatpush1.msra.mxu0 0.0
    %4953 = vmatprep.subr.mxu0 0.0
    %4954 = vmatpush1.msra.mxu0 0.0
    %4955 = vmatprep.subr.mxu0 0.0
    %4956 = vmatpush1.msra.mxu0 0.0
    %4957 = vmatprep.subr.mxu0 0.0
    %4958 = vmatpush1.msra.mxu0 0.0
    %4959 = vmatprep.subr.mxu0 0.0
    %4960 = vmatpush1.msra.mxu0 0.0
    %4961 = vmatprep.subr.mxu0 0.0
    %4962 = vmatpush1.msra.mxu0 0.0
    %4963 = vmatprep.subr.mxu0 0.0
    %4964 = vmatpush1.msra.mxu0 0.0
    %4965 = vmatprep.subr.mxu0 0.0
    %4966 = vmatpush1.msra.mxu0 0.0
    %4967 = vmatprep.subr.mxu0 0.0
    %4968 = vmatpush1.msra.mxu0 0.0
    %4969 = vmatprep.subr.mxu0 0.0
    %4970 = vmatpush1.msra.mxu0 0.0
    %4971 = vmatprep.subr.mxu0 0.0
    %4972 = vmatpush1.msra.mxu0 0.0
    %4973 = vmatprep.mubr.f32.mxu0 0.0
    %4974 = vmatmul.mubr.f32.gmra.mrb[0].mxu0 %v4908
    %v4975 = vpop.f32.mrb[0].mxu0
    %v4976 = vadd.f32 0.0, %v4975
    %v4977 = vpop.f32.mrb[0].mxu0
    %v4978 = vadd.f32 0.0, %v4977
    %4979 = vdwg.mxu0
    %4980 = vmatprep.subr.mxu0 %v1804
    %4981 = vmatpush1.msra.mxu0 %v1803
    %4982 = vmatprep.subr.mxu0 %v1808
    %4983 = vmatpush1.msra.mxu0 %v1807
    %4984 = vmatprep.subr.mxu0 %v1812
    %4985 = vmatpush1.msra.mxu0 %v1811
    %4986 = vmatprep.subr.mxu0 %v1816
    %4987 = vmatpush1.msra.mxu0 %v1815
    %4988 = vmatprep.subr.mxu0 %v1820
    %4989 = vmatpush1.msra.mxu0 %v1819
    %4990 = vmatprep.subr.mxu0 %v1824
    %4991 = vmatpush1.msra.mxu0 %v1823
    %4992 = vmatprep.subr.mxu0 %v1828
    %4993 = vmatpush1.msra.mxu0 %v1827
    %4994 = vmatprep.subr.mxu0 %v1832
    %4995 = vmatpush1.msra.mxu0 %v1831
    %4996 = vmatprep.subr.mxu0 %v1836
    %4997 = vmatpush1.msra.mxu0 %v1835
    %4998 = vmatprep.subr.mxu0 %v1840
    %4999 = vmatpush1.msra.mxu0 %v1839
    %5000 = vmatprep.subr.mxu0 %v1844
    %5001 = vmatpush1.msra.mxu0 %v1843
    %5002 = vmatprep.subr.mxu0 %v1848
    %5003 = vmatpush1.msra.mxu0 %v1847
    %5004 = vmatprep.subr.mxu0 %v1852
    %5005 = vmatpush1.msra.mxu0 %v1851
    %5006 = vmatprep.subr.mxu0 %v1856
    %5007 = vmatpush1.msra.mxu0 %v1855
    %5008 = vmatprep.subr.mxu0 %v1860
    %5009 = vmatpush1.msra.mxu0 %v1859
    %5010 = vmatprep.subr.mxu0 %v1864
    %5011 = vmatpush1.msra.mxu0 %v1863
    %5012 = vmatprep.subr.mxu0 0.0
    %5013 = vmatpush1.msra.mxu0 0.0
    %5014 = vmatprep.subr.mxu0 0.0
    %5015 = vmatpush1.msra.mxu0 0.0
    %5016 = vmatprep.subr.mxu0 0.0
    %5017 = vmatpush1.msra.mxu0 0.0
    %5018 = vmatprep.subr.mxu0 0.0
    %5019 = vmatpush1.msra.mxu0 0.0
    %5020 = vmatprep.subr.mxu0 0.0
    %5021 = vmatpush1.msra.mxu0 0.0
    %5022 = vmatprep.subr.mxu0 0.0
    %5023 = vmatpush1.msra.mxu0 0.0
    %5024 = vmatprep.subr.mxu0 0.0
    %5025 = vmatpush1.msra.mxu0 0.0
    %5026 = vmatprep.subr.mxu0 0.0
    %5027 = vmatpush1.msra.mxu0 0.0
    %5028 = vmatprep.subr.mxu0 0.0
    %5029 = vmatpush1.msra.mxu0 0.0
    %5030 = vmatprep.subr.mxu0 0.0
    %5031 = vmatpush1.msra.mxu0 0.0
    %5032 = vmatprep.subr.mxu0 0.0
    %5033 = vmatpush1.msra.mxu0 0.0
    %5034 = vmatprep.subr.mxu0 0.0
    %5035 = vmatpush1.msra.mxu0 0.0
    %5036 = vmatprep.subr.mxu0 0.0
    %5037 = vmatpush1.msra.mxu0 0.0
    %5038 = vmatprep.subr.mxu0 0.0
    %5039 = vmatpush1.msra.mxu0 0.0
    %5040 = vmatprep.subr.mxu0 0.0
    %5041 = vmatpush1.msra.mxu0 0.0
    %5042 = vmatprep.subr.mxu0 0.0
    %5043 = vmatpush1.msra.mxu0 0.0
    %5044 = vmatprep.mubr.f32.mxu0 0.0
    %5045 = vmatmul.mubr.f32.gmra.mrb[0].mxu0 %v4908
    %v5046 = vpop.f32.mrb[0].mxu0
    %v5047 = vadd.f32 0.0, %v5046
    %v5048 = vpop.f32.mrb[0].mxu0
    %v5049 = vadd.f32 0.0, %v5048
    %5050 = vdwg.mxu0
    %5052 = vrot.lane.b32.xlu0 %v4596, 64
    %v5053 = vpop.permute.xlu0 %5052
    %v5054 = vsel %vm350, %v5053, 0
    %5056 = vmatprep.subr.mxu0 %v1786
    %5057 = vmatpush1.msra.mxu0 %v1785
    %5058 = vmatprep.subr.mxu0 %v1790
    %5059 = vmatpush1.msra.mxu0 %v1789
    %5060 = vmatprep.subr.mxu0 %v1794
    %5061 = vmatpush1.msra.mxu0 %v1793
    %5062 = vmatprep.subr.mxu0 %v1798
    %5063 = vmatpush1.msra.mxu0 %v1797
    %5064 = vmatprep.subr.mxu0 0.0
    %5065 = vmatpush1.msra.mxu0 0.0
    %5066 = vmatprep.subr.mxu0 0.0
    %5067 = vmatpush1.msra.mxu0 0.0
    %5068 = vmatprep.subr.mxu0 0.0
    %5069 = vmatpush1.msra.mxu0 0.0
    %5070 = vmatprep.subr.mxu0 0.0
    %5071 = vmatpush1.msra.mxu0 0.0
    %5072 = vmatprep.subr.mxu0 0.0
    %5073 = vmatpush1.msra.mxu0 0.0
    %5074 = vmatprep.subr.mxu0 0.0
    %5075 = vmatpush1.msra.mxu0 0.0
    %5076 = vmatprep.subr.mxu0 0.0
    %5077 = vmatpush1.msra.mxu0 0.0
    %5078 = vmatprep.subr.mxu0 0.0
    %5079 = vmatpush1.msra.mxu0 0.0
    %5080 = vmatprep.subr.mxu0 0.0
    %5081 = vmatpush1.msra.mxu0 0.0
    %5082 = vmatprep.subr.mxu0 0.0
    %5083 = vmatpush1.msra.mxu0 0.0
    %5084 = vmatprep.subr.mxu0 0.0
    %5085 = vmatpush1.msra.mxu0 0.0
    %5086 = vmatprep.subr.mxu0 0.0
    %5087 = vmatpush1.msra.mxu0 0.0
    %5088 = vmatprep.subr.mxu0 0.0
    %5089 = vmatpush1.msra.mxu0 0.0
    %5090 = vmatprep.subr.mxu0 0.0
    %5091 = vmatpush1.msra.mxu0 0.0
    %5092 = vmatprep.subr.mxu0 0.0
    %5093 = vmatpush1.msra.mxu0 0.0
    %5094 = vmatprep.subr.mxu0 0.0
    %5095 = vmatpush1.msra.mxu0 0.0
    %5096 = vmatprep.subr.mxu0 0.0
    %5097 = vmatpush1.msra.mxu0 0.0
    %5098 = vmatprep.subr.mxu0 0.0
    %5099 = vmatpush1.msra.mxu0 0.0
    %5100 = vmatprep.subr.mxu0 0.0
    %5101 = vmatpush1.msra.mxu0 0.0
    %5102 = vmatprep.subr.mxu0 0.0
    %5103 = vmatpush1.msra.mxu0 0.0
    %5104 = vmatprep.subr.mxu0 0.0
    %5105 = vmatpush1.msra.mxu0 0.0
    %5106 = vmatprep.subr.mxu0 0.0
    %5107 = vmatpush1.msra.mxu0 0.0
    %5108 = vmatprep.subr.mxu0 0.0
    %5109 = vmatpush1.msra.mxu0 0.0
    %5110 = vmatprep.subr.mxu0 0.0
    %5111 = vmatpush1.msra.mxu0 0.0
    %5112 = vmatprep.subr.mxu0 0.0
    %5113 = vmatpush1.msra.mxu0 0.0
    %5114 = vmatprep.subr.mxu0 0.0
    %5115 = vmatpush1.msra.mxu0 0.0
    %5116 = vmatprep.subr.mxu0 0.0
    %5117 = vmatpush1.msra.mxu0 0.0
    %5118 = vmatprep.subr.mxu0 0.0
    %5119 = vmatpush1.msra.mxu0 0.0
    %5120 = vmatprep.mubr.f32.mxu0 0.0
    %5121 = vmatmul.mubr.f32.gmra.mrb[0].mxu0 %v5054
    %v5122 = vpop.f32.mrb[0].mxu0
    %v5123 = vadd.f32 %v4976, %v5122
    %v5124 = vpop.f32.mrb[0].mxu0
    %v5125 = vadd.f32 %v4978, %v5124
    %5126 = vdwg.mxu0
    %5127 = vmatprep.subr.mxu0 %v1788
    %5128 = vmatpush1.msra.mxu0 %v1787
    %5129 = vmatprep.subr.mxu0 %v1792
    %5130 = vmatpush1.msra.mxu0 %v1791
    %5131 = vmatprep.subr.mxu0 %v1796
    %5132 = vmatpush1.msra.mxu0 %v1795
    %5133 = vmatprep.subr.mxu0 %v1800
    %5134 = vmatpush1.msra.mxu0 %v1799
    %5135 = vmatprep.subr.mxu0 0.0
    %5136 = vmatpush1.msra.mxu0 0.0
    %5137 = vmatprep.subr.mxu0 0.0
    %5138 = vmatpush1.msra.mxu0 0.0
    %5139 = vmatprep.subr.mxu0 0.0
    %5140 = vmatpush1.msra.mxu0 0.0
    %5141 = vmatprep.subr.mxu0 0.0
    %5142 = vmatpush1.msra.mxu0 0.0
    %5143 = vmatprep.subr.mxu0 0.0
    %5144 = vmatpush1.msra.mxu0 0.0
    %5145 = vmatprep.subr.mxu0 0.0
    %5146 = vmatpush1.msra.mxu0 0.0
    %5147 = vmatprep.subr.mxu0 0.0
    %5148 = vmatpush1.msra.mxu0 0.0
    %5149 = vmatprep.subr.mxu0 0.0
    %5150 = vmatpush1.msra.mxu0 0.0
    %5151 = vmatprep.subr.mxu0 0.0
    %5152 = vmatpush1.msra.mxu0 0.0
    %5153 = vmatprep.subr.mxu0 0.0
    %5154 = vmatpush1.msra.mxu0 0.0
    %5155 = vmatprep.subr.mxu0 0.0
    %5156 = vmatpush1.msra.mxu0 0.0
    %5157 = vmatprep.subr.mxu0 0.0
    %5158 = vmatpush1.msra.mxu0 0.0
    %5159 = vmatprep.subr.mxu0 0.0
    %5160 = vmatpush1.msra.mxu0 0.0
    %5161 = vmatprep.subr.mxu0 0.0
    %5162 = vmatpush1.msra.mxu0 0.0
    %5163 = vmatprep.subr.mxu0 0.0
    %5164 = vmatpush1.msra.mxu0 0.0
    %5165 = vmatprep.subr.mxu0 0.0
    %5166 = vmatpush1.msra.mxu0 0.0
    %5167 = vmatprep.subr.mxu0 0.0
    %5168 = vmatpush1.msra.mxu0 0.0
    %5169 = vmatprep.subr.mxu0 0.0
    %5170 = vmatpush1.msra.mxu0 0.0
    %5171 = vmatprep.subr.mxu0 0.0
    %5172 = vmatpush1.msra.mxu0 0.0
    %5173 = vmatprep.subr.mxu0 0.0
    %5174 = vmatpush1.msra.mxu0 0.0
    %5175 = vmatprep.subr.mxu0 0.0
    %5176 = vmatpush1.msra.mxu0 0.0
    %5177 = vmatprep.subr.mxu0 0.0
    %5178 = vmatpush1.msra.mxu0 0.0
    %5179 = vmatprep.subr.mxu0 0.0
    %5180 = vmatpush1.msra.mxu0 0.0
    %5181 = vmatprep.subr.mxu0 0.0
    %5182 = vmatpush1.msra.mxu0 0.0
    %5183 = vmatprep.subr.mxu0 0.0
    %5184 = vmatpush1.msra.mxu0 0.0
    %5185 = vmatprep.subr.mxu0 0.0
    %5186 = vmatpush1.msra.mxu0 0.0
    %5187 = vmatprep.subr.mxu0 0.0
    %5188 = vmatpush1.msra.mxu0 0.0
    %5189 = vmatprep.subr.mxu0 0.0
    %5190 = vmatpush1.msra.mxu0 0.0
    %5191 = vmatprep.mubr.f32.mxu0 0.0
    %5192 = vmatmul.mubr.f32.gmra.mrb[0].mxu0 %v5054
    %v5193 = vpop.f32.mrb[0].mxu0
    %v5194 = vadd.f32 %v5047, %v5193
    %v5195 = vpop.f32.mrb[0].mxu0
    %v5196 = vadd.f32 %v5049, %v5195
    %5197 = vdwg.mxu0
    %v5198 = vadd.f32 %v5123, %v2362
    %v5199 = vadd.f32 %v5125, %v2366
    %v5200 = vadd.f32 %v5194, %v2370
    %v5201 = vadd.f32 %v5196, %v2374
    %v5202 = vxor.u32 %v5198, 2147483648
    %v5203 = vxor.u32 %v5199, 2147483648
    %v5204 = vxor.u32 %v5200, 2147483648
    %v5205 = vmul.f32 %v5202, 1.442695
    %v5206 = vpow.pop %v5205
    %v5207 = vmul.f32 %v5203, 1.442695
    %v5208 = vpow.pop %v5207
    %v5209 = vmul.f32 %v5204, 1.442695
    %v5210 = vpow.pop %v5209
    %v5211 = vadd.f32 %v5206, 1.0
    %v5212 = vadd.f32 %v5208, 1.0
    %v5213 = vadd.f32 %v5210, 1.0
    %v5214 = vrcp.pop %v5211
    %v5215 = vmul.f32 1.0, %v5214
    %v5216 = vrcp.pop %v5212
    %v5217 = vmul.f32 1.0, %v5216
    %v5218 = vrcp.pop %v5213
    %v5219 = vmul.f32 1.0, %v5218
    %v5220 = vtanh.pop %v5201
    %v5221 = vmul.f32 %v5217, %v4906
    %v5222 = vmul.f32 %v5215, %v5220
    %v5223 = vadd.f32 %v5221, %v5222
    %v5224 = vtanh.pop %v5223
    %v5225 = vmul.f32 %v5219, %v5224
    %v5226 = vld [vmem:[%s2 + $0x10] sm:$0xff]
    %v5227 = vld [vmem:[%s2 + $0x18] sm:$0xff]
    %v5228 = vld [vmem:[%s2 + $0x20] sm:$0xff]
    %v5229 = vld [vmem:[%s2 + $0x28] sm:$0xff]
    %v5230 = vld [vmem:[%s2 + $0x30] sm:$0xff]
    %v5231 = vld [vmem:[%s2 + $0x38] sm:$0xff]
    %v5232 = vld [vmem:[%s2 + $0x40] sm:$0xff]
    %v5233 = vld [vmem:[%s2 + $0x48] sm:$0xff]
    %v5234 = vld [vmem:[%s2 + $0x50] sm:$0xff]
    %v5235 = vld [vmem:[%s2 + $0x58] sm:$0xff]
    %v5236 = vld [vmem:[%s2 + $0x60] sm:$0xff]
    %v5237 = vld [vmem:[%s2 + $0x68] sm:$0xff]
    %v5238 = vld [vmem:[%s2 + $0x70] sm:$0xff]
    %v5239 = vld [vmem:[%s2 + $0x78] sm:$0xff]
    %v5240 = vld [vmem:[%s2 + $0x80] sm:$0xff]
    %v5241 = vld [vmem:[%s2 + $0x88] sm:$0xff]
    %v5242 = vld [vmem:[%s2 + $0x90] sm:$0x1]
    %v5243 = vlaneseq
    %v5244 = vshrl.u32 %v5243, 7
    %v5245 = vsub.s32 0, %v5244
    %v5246 = vrot.slane %v5242, %v5245
    %5247 = vmatprep.subr.mxu0 0.0
    %5248 = vmatpush1.msra.mxu0 %v5226
    %5249 = vmatprep.subr.mxu0 0.0
    %5250 = vmatpush1.msra.mxu0 %v5227
    %5251 = vmatprep.subr.mxu0 0.0
    %5252 = vmatpush1.msra.mxu0 %v5228
    %5253 = vmatprep.subr.mxu0 0.0
    %5254 = vmatpush1.msra.mxu0 %v5229
    %5255 = vmatprep.subr.mxu0 0.0
    %5256 = vmatpush1.msra.mxu0 %v5230
    %5257 = vmatprep.subr.mxu0 0.0
    %5258 = vmatpush1.msra.mxu0 %v5231
    %5259 = vmatprep.subr.mxu0 0.0
    %5260 = vmatpush1.msra.mxu0 %v5232
    %5261 = vmatprep.subr.mxu0 0.0
    %5262 = vmatpush1.msra.mxu0 %v5233
    %5263 = vmatprep.subr.mxu0 0.0
    %5264 = vmatpush1.msra.mxu0 %v5234
    %5265 = vmatprep.subr.mxu0 0.0
    %5266 = vmatpush1.msra.mxu0 %v5235
    %5267 = vmatprep.subr.mxu0 0.0
    %5268 = vmatpush1.msra.mxu0 %v5236
    %5269 = vmatprep.subr.mxu0 0.0
    %5270 = vmatpush1.msra.mxu0 %v5237
    %5271 = vmatprep.subr.mxu0 0.0
    %5272 = vmatpush1.msra.mxu0 %v5238
    %5273 = vmatprep.subr.mxu0 0.0
    %5274 = vmatpush1.msra.mxu0 %v5239
    %5275 = vmatprep.subr.mxu0 0.0
    %5276 = vmatpush1.msra.mxu0 %v5240
    %5277 = vmatprep.subr.mxu0 0.0
    %5278 = vmatpush1.msra.mxu0 %v5241
    %5279 = vmatprep.subr.mxu0 0.0
    %5280 = vmatpush1.msra.mxu0 0.0
    %5281 = vmatprep.subr.mxu0 0.0
    %5282 = vmatpush1.msra.mxu0 0.0
    %5283 = vmatprep.subr.mxu0 0.0
    %5284 = vmatpush1.msra.mxu0 0.0
    %5285 = vmatprep.subr.mxu0 0.0
    %5286 = vmatpush1.msra.mxu0 0.0
    %5287 = vmatprep.subr.mxu0 0.0
    %5288 = vmatpush1.msra.mxu0 0.0
    %5289 = vmatprep.subr.mxu0 0.0
    %5290 = vmatpush1.msra.mxu0 0.0
    %5291 = vmatprep.subr.mxu0 0.0
    %5292 = vmatpush1.msra.mxu0 0.0
    %5293 = vmatprep.subr.mxu0 0.0
    %5294 = vmatpush1.msra.mxu0 0.0
    %5295 = vmatprep.subr.mxu0 0.0
    %5296 = vmatpush1.msra.mxu0 0.0
    %5297 = vmatprep.subr.mxu0 0.0
    %5298 = vmatpush1.msra.mxu0 0.0
    %5299 = vmatprep.subr.mxu0 0.0
    %5300 = vmatpush1.msra.mxu0 0.0
    %5301 = vmatprep.subr.mxu0 0.0
    %5302 = vmatpush1.msra.mxu0 0.0
    %5303 = vmatprep.subr.mxu0 0.0
    %5304 = vmatpush1.msra.mxu0 0.0
    %5305 = vmatprep.subr.mxu0 0.0
    %5306 = vmatpush1.msra.mxu0 0.0
    %5307 = vmatprep.subr.mxu0 0.0
    %5308 = vmatpush1.msra.mxu0 0.0
    %5309 = vmatprep.subr.mxu0 0.0
    %5310 = vmatpush1.msra.mxu0 0.0
    %5311 = vmatprep.mubr.f32.mxu0 0.0
    %5312 = vmatmul.mubr.f32.gmra.mrb[0].mxu0 %v5225
    %v5313 = vpop.f32.mrb[0].mxu0
    %v5314 = vadd.f32 %v5246, %v5313
    %v5315 = vpop.f32.mrb[0].mxu0
    %5316 = vdwg.mxu0
    %vm5317 = vcmask 517120
    %5318 = vst.msk [vmem:[#allocation5] sm:$0x3] %vm5317, %v5314
    // Predicated region
    $region30: #{tpu_custom_call.1} parent=1 // pred_check
      _
    $region31: #{tpu_custom_call.1} parent=1 // pred_check_branch
      %5320 = sbr.rel (0) target = $region33
    $region32: #{tpu_custom_call.1} parent=1 // pred_region
      %s5322 = ssub.s32 32, 32
      %5323 = vsyncadd [#allocation4], %s5322
      %s5325 = sshll.u32 [#allocation5], 4
      %s5326 = int_to_ptr.vmem [resolvable:$true] %s5325
      %5328 = dma.vmem_to_hbm [thread:$0]  %s5326, 32, %s6, [#allocation4]
    $region33: #{tpu_custom_call.1} parent=1 // pred_fallthru
      _
    // Predicated region
    $region34: #{tpu_custom_call.1} parent=1 // pred_check
      _
    $region35: #{tpu_custom_call.1} parent=1 // pred_check_branch
      %5330 = sbr.rel (0) target = $region37
    $region36: #{tpu_custom_call.1} parent=1 // pred_region
      %5331 = dma.done [#allocation4], 32
    $region37: #{tpu_custom_call.1} parent=1 // pred_fallthru
      _
    %5332 = vsyncpa [#allocation3], 1
    %5333 = vsyncpa [#allocation4], 1

</llo_original>
